<compile_context>
chip_gen: v7x
topology: tpu7x:2x2x1
jax: 0.10.0
libtpu: 0.0.40
codegen_flags: <defaults>
</compile_context>

<pallas_src>
import math
from functools import partial

import numpy as np
import jax
import jax.numpy as jnp
from jax.experimental import pallas as pl
from jax.experimental.pallas import tpu as pltpu

LRELU_SLOPE = 0.2
ACT_GAIN = math.sqrt(2.0)  # FusedLeakyReLU scale


# ------------------------- Pallas kernel -------------------------

def _mod_conv3x3_kernel(x_ref, w_ref, b_ref, o_ref, *, row_tile, w_out):
    # x_ref: (1, Hp, Wp, Cin)     padded activation (bf16), resident per sample
    # w_ref: (1, 3, 3, Cin, Cout) per-sample modulated weight (bf16), resident
    # b_ref: (1, Cout)            f32 bias
    # o_ref: (1, row_tile, Wout, Cout)
    m = pl.program_id(1)
    row0 = pl.multiple_of(m * row_tile, row_tile)
    cin = x_ref.shape[-1]
    cout = o_ref.shape[-1]

    # Fused im2col: 9 shifted matmuls accumulated in f32.
    acc = jnp.zeros((row_tile * w_out, cout), jnp.float32)
    for ky in range(3):
        x_slab = x_ref[0, pl.ds(row0 + ky, row_tile), :, :]        # (TH, Wp, Cin)
        for kx in range(3):
            xk = x_slab[:, kx:kx + w_out, :].reshape(row_tile * w_out, cin)
            wk = w_ref[0, ky, kx, :, :]                             # (Cin, Cout)
            acc = acc + jnp.dot(xk, wk, preferred_element_type=jnp.float32)

    out = acc + b_ref[...].astype(jnp.float32)                      # (1, Cout) bcast
    # FusedLeakyReLU: single fused select-multiply.
    out = out * jnp.where(out >= 0.0, ACT_GAIN, ACT_GAIN * LRELU_SLOPE)
    o_ref[0] = out.reshape(row_tile, w_out, cout).astype(o_ref.dtype)


def _largest_divisor_leq(n, cap):
    for t in range(min(n, cap), 0, -1):
        if n % t == 0:
            return t
    return 1


def modulated_conv3x3_bias_act(x_pad, w_phases, bias, *, out_dtype):
    # x_pad: (B, Hout+2, Wout+2, Cin) bf16;  w_phases: (B, 3, 3, Cin, Cout) bf16
    # bias:  (1, Cout) f32
    B, Hp, Wp, Cin = x_pad.shape
    Cout = w_phases.shape[-1]
    Hout, Wout = Hp - 2, Wp - 2

    # Row tile sized for ~512 matmul rows per grid step; must divide Hout.
    cap = max(8, 512 // max(Wout, 1))
    TH = _largest_divisor_leq(Hout, cap)

    kern = partial(_mod_conv3x3_kernel, row_tile=TH, w_out=Wout)
    flops = 2 * B * Hout * Wout * 9 * Cin * Cout
    bytes_accessed = (x_pad.size * x_pad.dtype.itemsize
                      + w_phases.size * w_phases.dtype.itemsize
                      + B * Hout * Wout * Cout * np.dtype(out_dtype).itemsize)

    return pl.pallas_call(
        kern,
        out_shape=jax.ShapeDtypeStruct((B, Hout, Wout, Cout), out_dtype),
        grid_spec=pltpu.PrefetchScalarGridSpec(
            num_scalar_prefetch=0,
            grid=(B, Hout // TH),                  # B outer, row tiles inner
            in_specs=[
                # Padded sample block: index_map ignores m -> stays resident.
                pl.BlockSpec((1, Hp, Wp, Cin), lambda b, m: (b, 0, 0, 0)),
                pl.BlockSpec((1, 3, 3, Cin, Cout), lambda b, m: (b, 0, 0, 0, 0)),
                pl.BlockSpec((1, Cout), lambda b, m: (0, 0)),
            ],
            out_specs=pl.BlockSpec((1, TH, Wout, Cout), lambda b, m: (b, m, 0, 0)),
        ),
        compiler_params=pltpu.CompilerParams(
            dimension_semantics=("parallel", "parallel")),
        cost_estimate=pl.CostEstimate(
            flops=flops, transcendentals=0, bytes_accessed=bytes_accessed),
    )(x_pad, w_phases, bias)


# ------------------------- JAX glue (modulation, weight composition) -------------------------

def equal_linear(x, weight, bias, lr_mul=1.0):
    # PyTorch EqualLinear: F.linear(x, weight * (1/sqrt(in)) * lr_mul, bias * lr_mul)
    scale = (1.0 / math.sqrt(weight.shape[1])) * lr_mul
    return x @ (weight * scale).T + bias * lr_mul


def modulate_demodulate(base_w, s, eps=1e-8):
    # base_w: (1, Cout, Cin, K, K); s: (B, Cin)  -- all f32
    _, Cout, Cin, K, _ = base_w.shape
    scale = 1.0 / math.sqrt(Cin * K * K)
    w = scale * base_w * s[:, None, :, None, None]            # (B, Cout, Cin, K, K)
    demod = jax.lax.rsqrt(jnp.sum(w * w, axis=(2, 3, 4)) + eps)
    return w * demod[:, :, None, None, None]


def make_blur_taps(k1d, gain):
    k = np.outer(np.asarray(k1d, np.float64), np.asarray(k1d, np.float64))
    k = k / k.sum() * gain
    return k.astype(np.float32)                               # (4, 4)


def _compose_upsample_phase_weights(w, blur_2d):
    # Fold the blur into the stride-2 transposed-conv weight and phase-decompose.
    # w: (B, Cout, Cin, 3, 3) modulated+demodulated (f32)
    # returns (B, 3, 3, Cin, 4*Cout): for each output phase p = py*2+px,
    #   out[2r+py, 2c+px, o] = sum_{ky,kx,i} xpad1[r+ky, c+kx, i] * W[ky,kx,i,p*Cout+o]
    B, Cout, Cin, K, _ = w.shape
    KB = blur_2d.shape[0]
    wf = jnp.flip(w, axis=(3, 4))                  # correlation form of conv_transpose
    # T[m,k,dy,dx] = blur[dy-m, dx-k]  (full convolution of the two filters)
    T = np.zeros((K, K, K + KB - 1, K + KB - 1), np.float32)
    for m in range(K):
        for k in range(K):
            T[m, k, m:m + KB, k:k + KB] = blur_2d
    h = jnp.einsum('boimk,mkyx->byxio', wf, jnp.asarray(T))    # (B, 6, 6, Cin, Cout)
    phases = []
    for py in range(2):
        for px in range(2):
            phases.append(h[:, (1 - py)::2, (1 - px)::2, :, :])  # (B, 3, 3, Cin, Cout)
    hp = jnp.stack(phases, axis=4)                 # (B, 3, 3, Cin, 4, Cout)
    return hp.reshape(B, K, K, Cin, 4 * Cout)


def init_params(key, inch, outch, styledim):
    ks = jax.random.split(key, 4)
    return {
        # conv1 (upsample=True): ModulatedConv2d(inch -> outch, k=3)
        "mod1_w": jax.random.normal(ks[0], (inch, styledim), jnp.float32),
        "mod1_b": jnp.ones((inch,), jnp.float32),                     # bias_init=1
        "conv1_w": jax.random.normal(ks[1], (1, outch, inch, 3, 3), jnp.float32),
        "act1_b": jnp.zeros((outch,), jnp.float32),                   # FusedLeakyReLU bias
        # conv2 (upsample=False): ModulatedConv2d(outch -> outch, k=3)
        "mod2_w": jax.random.normal(ks[2], (outch, styledim), jnp.float32),
        "mod2_b": jnp.ones((outch,), jnp.float32),
        "conv2_w": jax.random.normal(ks[3], (1, outch, outch, 3, 3), jnp.float32),
        "act2_b": jnp.zeros((outch,), jnp.float32),
    }


def upsampling_block_forward(params, x_nchw, style, blur_kernel=(1, 3, 3, 1)):
    B, Cin, H, W = x_nchw.shape
    Cout = params["conv1_w"].shape[1]

    x = jnp.transpose(x_nchw, (0, 2, 3, 1))                    # NCHW -> NHWC

    # ---- conv1: modulated+demodulated transposed conv (stride 2) with the 4x4
    #      blur folded into the weight, phase-decomposed into 4 plain 3x3 convs;
    #      FusedLeakyReLU fused into the kernel epilogue. ----
    s1 = equal_linear(style, params["mod1_w"], params["mod1_b"])        # (B, Cin)
    w1 = modulate_demodulate(params["conv1_w"], s1)                     # f32
    blur2d = make_blur_taps(blur_kernel, gain=4.0)                      # * factor**2
    w1p = _compose_upsample_phase_weights(w1, blur2d).astype(jnp.bfloat16)
    bias1 = jnp.tile(params["act1_b"], 4).reshape(1, 4 * Cout).astype(jnp.float32)

    x_pad = jnp.pad(x, ((0, 0), (1, 1), (1, 1), (0, 0))).astype(jnp.bfloat16)
    y4 = modulated_conv3x3_bias_act(x_pad, w1p, bias1, out_dtype=jnp.bfloat16)
    # (B, H, W, 4*Cout), channel = (py*2+px)*Cout + o  -> interleave sub-pixel phases
    y = y4.reshape(B, H, W, 2, 2, Cout)
    y = jnp.transpose(y, (0, 1, 3, 2, 4, 5)).reshape(B, 2 * H, 2 * W, Cout)

    # ---- conv2: modulated+demodulated 3x3 conv (pad=1) + FusedLeakyReLU ----
    s2 = equal_linear(style, params["mod2_w"], params["mod2_b"])        # (B, Cout)
    w2 = modulate_demodulate(params["conv2_w"], s2)                     # (B, Cout, Cout, 3, 3)
    w2p = jnp.transpose(w2, (0, 3, 4, 2, 1)).astype(jnp.bfloat16)       # (B, 3, 3, Cin2, Cout)
    bias2 = params["act2_b"].reshape(1, Cout).astype(jnp.float32)

    # TODO(synk): fold the 1-pixel pad into the kernel (zero-init VMEM scratch +
    # interior DMA) to remove this remaining full-activation HBM copy.
    y_pad = jnp.pad(y, ((0, 0), (1, 1), (1, 1), (0, 0)))
    out = modulated_conv3x3_bias_act(y_pad, w2p, bias2, out_dtype=jnp.float32)

    # NOTE: use_noise=False in the reference module, so NoiseInjection is skipped.
    return jnp.transpose(out, (0, 3, 1, 2))                    # back to NCHW


if __name__ == "__main__":
    B, inch, outch, styledim, H, W = 2, 4, 4, 8, 8, 8
    key = jax.random.PRNGKey(0)
    kp, kx, ks = jax.random.split(key, 3)
    params = init_params(kp, inch, outch, styledim)
    x = jax.random.normal(kx, (B, inch, H, W), jnp.float32)
    style = jax.random.normal(ks, (B, styledim), jnp.float32)

    out = jax.jit(upsampling_block_forward)(params, x, style)
    out = jax.block_until_ready(out)
    assert out.shape == (B, outch, 2 * H, 2 * W), out.shape
    assert bool(jnp.all(jnp.isfinite(out)))
    print("KERNEL_OK")
</pallas_src>

<mosaic_0001>
module attributes {stable_mosaic.version = 11 : i64} {
  func.func @_mod_conv3x3_kernel(%arg0: i32, %arg1: i32, %arg2: memref<1x10x10x4xbf16, #tpu.memory_space<vmem>>, %arg3: memref<1x3x3x4x16xbf16, #tpu.memory_space<vmem>>, %arg4: memref<1x16xf32, #tpu.memory_space<vmem>>, %arg5: memref<1x8x8x16xbf16, #tpu.memory_space<vmem>>) attributes {dimension_semantics = [#tpu.dimension_semantics<parallel>, #tpu.dimension_semantics<parallel>], iteration_bounds = array<i64: 2, 1>, scalar_prefetch = 0 : i64, scratch_operands = 0 : i64, tpu.core_type = #tpu.core_type<tc>, window_params = [{transform_indices = @transform_0, window_bounds = array<i64: 1, 10, 10, 4>}, {transform_indices = @transform_1, window_bounds = array<i64: 1, 3, 3, 4, 16>}, {pipeline_mode = #tpu.pipeline_mode<synchronous>, transform_indices = @transform_2, window_bounds = array<i64: 1, 16>}, {transform_indices = @transform_3, window_bounds = array<i64: 1, 8, 8, 16>}]} {
    %c8_i32 = arith.constant 8 : i32
    %0 = arith.muli %arg1, %c8_i32 : i32
    %1 = tpu.assume_multiple %0, 8 : i32
    %cst = arith.constant 0.000000e+00 : f32
    %2 = vector.broadcast %cst : f32 to vector<64x16xf32>
    %c0_i32 = arith.constant 0 : i32
    %3 = arith.addi %1, %c0_i32 : i32
    %c0 = arith.constant 0 : index
    %4 = arith.index_cast %3 : i32 to index
    %c0_0 = arith.constant 0 : index
    %c0_1 = arith.constant 0 : index
    %5 = vector.load %arg2[%c0, %4, %c0_0, %c0_1] : memref<1x10x10x4xbf16, #tpu.memory_space<vmem>>, vector<1x8x10x4xbf16>
    %6 = vector.shape_cast %5 : vector<1x8x10x4xbf16> to vector<8x10x4xbf16>
    %7 = vector.extract_strided_slice %6 {offsets = [0, 0, 0], sizes = [8, 8, 4], strides = [1, 1, 1]} : vector<8x10x4xbf16> to vector<8x8x4xbf16>
    %8 = vector.shape_cast %7 : vector<8x8x4xbf16> to vector<64x4xbf16>
    %c0_2 = arith.constant 0 : index
    %c0_3 = arith.constant 0 : index
    %c0_4 = arith.constant 0 : index
    %c0_5 = arith.constant 0 : index
    %c0_6 = arith.constant 0 : index
    %9 = vector.load %arg3[%c0_2, %c0_3, %c0_4, %c0_5, %c0_6] : memref<1x3x3x4x16xbf16, #tpu.memory_space<vmem>>, vector<1x1x1x4x16xbf16>
    %10 = vector.shape_cast %9 : vector<1x1x1x4x16xbf16> to vector<4x16xbf16>
    %cst_7 = arith.constant dense<0.000000e+00> : vector<64x16xf32>
    %11 = tpu.matmul %8, %10, %cst_7 {dimension_numbers = #tpu.dot_dimension_numbers<[1], [0], [0], [1], [0, 0, 1, 1], [], []>} : vector<64x4xbf16>, vector<4x16xbf16>, vector<64x16xf32> -> vector<64x16xf32>
    %12 = arith.addf %2, %11 : vector<64x16xf32>
    %13 = vector.extract_strided_slice %6 {offsets = [0, 1, 0], sizes = [8, 8, 4], strides = [1, 1, 1]} : vector<8x10x4xbf16> to vector<8x8x4xbf16>
    %14 = vector.shape_cast %13 : vector<8x8x4xbf16> to vector<64x4xbf16>
    %c0_8 = arith.constant 0 : index
    %c0_9 = arith.constant 0 : index
    %c1 = arith.constant 1 : index
    %c0_10 = arith.constant 0 : index
    %c0_11 = arith.constant 0 : index
    %15 = vector.load %arg3[%c0_8, %c0_9, %c1, %c0_10, %c0_11] : memref<1x3x3x4x16xbf16, #tpu.memory_space<vmem>>, vector<1x1x1x4x16xbf16>
    %16 = vector.shape_cast %15 : vector<1x1x1x4x16xbf16> to vector<4x16xbf16>
    %cst_12 = arith.constant dense<0.000000e+00> : vector<64x16xf32>
    %17 = tpu.matmul %14, %16, %cst_12 {dimension_numbers = #tpu.dot_dimension_numbers<[1], [0], [0], [1], [0, 0, 1, 1], [], []>} : vector<64x4xbf16>, vector<4x16xbf16>, vector<64x16xf32> -> vector<64x16xf32>
    %18 = arith.addf %12, %17 : vector<64x16xf32>
    %19 = vector.extract_strided_slice %6 {offsets = [0, 2, 0], sizes = [8, 8, 4], strides = [1, 1, 1]} : vector<8x10x4xbf16> to vector<8x8x4xbf16>
    %20 = vector.shape_cast %19 : vector<8x8x4xbf16> to vector<64x4xbf16>
    %c0_13 = arith.constant 0 : index
    %c0_14 = arith.constant 0 : index
    %c2 = arith.constant 2 : index
    %c0_15 = arith.constant 0 : index
    %c0_16 = arith.constant 0 : index
    %21 = vector.load %arg3[%c0_13, %c0_14, %c2, %c0_15, %c0_16] : memref<1x3x3x4x16xbf16, #tpu.memory_space<vmem>>, vector<1x1x1x4x16xbf16>
    %22 = vector.shape_cast %21 : vector<1x1x1x4x16xbf16> to vector<4x16xbf16>
    %cst_17 = arith.constant dense<0.000000e+00> : vector<64x16xf32>
    %23 = tpu.matmul %20, %22, %cst_17 {dimension_numbers = #tpu.dot_dimension_numbers<[1], [0], [0], [1], [0, 0, 1, 1], [], []>} : vector<64x4xbf16>, vector<4x16xbf16>, vector<64x16xf32> -> vector<64x16xf32>
    %24 = arith.addf %18, %23 : vector<64x16xf32>
    %c1_i32 = arith.constant 1 : i32
    %25 = arith.addi %1, %c1_i32 : i32
    %c0_18 = arith.constant 0 : index
    %26 = arith.index_cast %25 : i32 to index
    %c0_19 = arith.constant 0 : index
    %c0_20 = arith.constant 0 : index
    %27 = vector.load %arg2[%c0_18, %26, %c0_19, %c0_20] : memref<1x10x10x4xbf16, #tpu.memory_space<vmem>>, vector<1x8x10x4xbf16>
    %28 = vector.shape_cast %27 : vector<1x8x10x4xbf16> to vector<8x10x4xbf16>
    %29 = vector.extract_strided_slice %28 {offsets = [0, 0, 0], sizes = [8, 8, 4], strides = [1, 1, 1]} : vector<8x10x4xbf16> to vector<8x8x4xbf16>
    %30 = vector.shape_cast %29 : vector<8x8x4xbf16> to vector<64x4xbf16>
    %c0_21 = arith.constant 0 : index
    %c1_22 = arith.constant 1 : index
    %c0_23 = arith.constant 0 : index
    %c0_24 = arith.constant 0 : index
    %c0_25 = arith.constant 0 : index
    %31 = vector.load %arg3[%c0_21, %c1_22, %c0_23, %c0_24, %c0_25] : memref<1x3x3x4x16xbf16, #tpu.memory_space<vmem>>, vector<1x1x1x4x16xbf16>
    %32 = vector.shape_cast %31 : vector<1x1x1x4x16xbf16> to vector<4x16xbf16>
    %cst_26 = arith.constant dense<0.000000e+00> : vector<64x16xf32>
    %33 = tpu.matmul %30, %32, %cst_26 {dimension_numbers = #tpu.dot_dimension_numbers<[1], [0], [0], [1], [0, 0, 1, 1], [], []>} : vector<64x4xbf16>, vector<4x16xbf16>, vector<64x16xf32> -> vector<64x16xf32>
    %34 = arith.addf %24, %33 : vector<64x16xf32>
    %35 = vector.extract_strided_slice %28 {offsets = [0, 1, 0], sizes = [8, 8, 4], strides = [1, 1, 1]} : vector<8x10x4xbf16> to vector<8x8x4xbf16>
    %36 = vector.shape_cast %35 : vector<8x8x4xbf16> to vector<64x4xbf16>
    %c0_27 = arith.constant 0 : index
    %c1_28 = arith.constant 1 : index
    %c1_29 = arith.constant 1 : index
    %c0_30 = arith.constant 0 : index
    %c0_31 = arith.constant 0 : index
    %37 = vector.load %arg3[%c0_27, %c1_28, %c1_29, %c0_30, %c0_31] : memref<1x3x3x4x16xbf16, #tpu.memory_space<vmem>>, vector<1x1x1x4x16xbf16>
    %38 = vector.shape_cast %37 : vector<1x1x1x4x16xbf16> to vector<4x16xbf16>
    %cst_32 = arith.constant dense<0.000000e+00> : vector<64x16xf32>
    %39 = tpu.matmul %36, %38, %cst_32 {dimension_numbers = #tpu.dot_dimension_numbers<[1], [0], [0], [1], [0, 0, 1, 1], [], []>} : vector<64x4xbf16>, vector<4x16xbf16>, vector<64x16xf32> -> vector<64x16xf32>
    %40 = arith.addf %34, %39 : vector<64x16xf32>
    %41 = vector.extract_strided_slice %28 {offsets = [0, 2, 0], sizes = [8, 8, 4], strides = [1, 1, 1]} : vector<8x10x4xbf16> to vector<8x8x4xbf16>
    %42 = vector.shape_cast %41 : vector<8x8x4xbf16> to vector<64x4xbf16>
    %c0_33 = arith.constant 0 : index
    %c1_34 = arith.constant 1 : index
    %c2_35 = arith.constant 2 : index
    %c0_36 = arith.constant 0 : index
    %c0_37 = arith.constant 0 : index
    %43 = vector.load %arg3[%c0_33, %c1_34, %c2_35, %c0_36, %c0_37] : memref<1x3x3x4x16xbf16, #tpu.memory_space<vmem>>, vector<1x1x1x4x16xbf16>
    %44 = vector.shape_cast %43 : vector<1x1x1x4x16xbf16> to vector<4x16xbf16>
    %cst_38 = arith.constant dense<0.000000e+00> : vector<64x16xf32>
    %45 = tpu.matmul %42, %44, %cst_38 {dimension_numbers = #tpu.dot_dimension_numbers<[1], [0], [0], [1], [0, 0, 1, 1], [], []>} : vector<64x4xbf16>, vector<4x16xbf16>, vector<64x16xf32> -> vector<64x16xf32>
    %46 = arith.addf %40, %45 : vector<64x16xf32>
    %c2_i32 = arith.constant 2 : i32
    %47 = arith.addi %1, %c2_i32 : i32
    %c0_39 = arith.constant 0 : index
    %48 = arith.index_cast %47 : i32 to index
    %c0_40 = arith.constant 0 : index
    %c0_41 = arith.constant 0 : index
    %49 = vector.load %arg2[%c0_39, %48, %c0_40, %c0_41] : memref<1x10x10x4xbf16, #tpu.memory_space<vmem>>, vector<1x8x10x4xbf16>
    %50 = vector.shape_cast %49 : vector<1x8x10x4xbf16> to vector<8x10x4xbf16>
    %51 = vector.extract_strided_slice %50 {offsets = [0, 0, 0], sizes = [8, 8, 4], strides = [1, 1, 1]} : vector<8x10x4xbf16> to vector<8x8x4xbf16>
    %52 = vector.shape_cast %51 : vector<8x8x4xbf16> to vector<64x4xbf16>
    %c0_42 = arith.constant 0 : index
    %c2_43 = arith.constant 2 : index
    %c0_44 = arith.constant 0 : index
    %c0_45 = arith.constant 0 : index
    %c0_46 = arith.constant 0 : index
    %53 = vector.load %arg3[%c0_42, %c2_43, %c0_44, %c0_45, %c0_46] : memref<1x3x3x4x16xbf16, #tpu.memory_space<vmem>>, vector<1x1x1x4x16xbf16>
    %54 = vector.shape_cast %53 : vector<1x1x1x4x16xbf16> to vector<4x16xbf16>
    %cst_47 = arith.constant dense<0.000000e+00> : vector<64x16xf32>
    %55 = tpu.matmul %52, %54, %cst_47 {dimension_numbers = #tpu.dot_dimension_numbers<[1], [0], [0], [1], [0, 0, 1, 1], [], []>} : vector<64x4xbf16>, vector<4x16xbf16>, vector<64x16xf32> -> vector<64x16xf32>
    %56 = arith.addf %46, %55 : vector<64x16xf32>
    %57 = vector.extract_strided_slice %50 {offsets = [0, 1, 0], sizes = [8, 8, 4], strides = [1, 1, 1]} : vector<8x10x4xbf16> to vector<8x8x4xbf16>
    %58 = vector.shape_cast %57 : vector<8x8x4xbf16> to vector<64x4xbf16>
    %c0_48 = arith.constant 0 : index
    %c2_49 = arith.constant 2 : index
    %c1_50 = arith.constant 1 : index
    %c0_51 = arith.constant 0 : index
    %c0_52 = arith.constant 0 : index
    %59 = vector.load %arg3[%c0_48, %c2_49, %c1_50, %c0_51, %c0_52] : memref<1x3x3x4x16xbf16, #tpu.memory_space<vmem>>, vector<1x1x1x4x16xbf16>
    %60 = vector.shape_cast %59 : vector<1x1x1x4x16xbf16> to vector<4x16xbf16>
    %cst_53 = arith.constant dense<0.000000e+00> : vector<64x16xf32>
    %61 = tpu.matmul %58, %60, %cst_53 {dimension_numbers = #tpu.dot_dimension_numbers<[1], [0], [0], [1], [0, 0, 1, 1], [], []>} : vector<64x4xbf16>, vector<4x16xbf16>, vector<64x16xf32> -> vector<64x16xf32>
    %62 = arith.addf %56, %61 : vector<64x16xf32>
    %63 = vector.extract_strided_slice %50 {offsets = [0, 2, 0], sizes = [8, 8, 4], strides = [1, 1, 1]} : vector<8x10x4xbf16> to vector<8x8x4xbf16>
    %64 = vector.shape_cast %63 : vector<8x8x4xbf16> to vector<64x4xbf16>
    %c0_54 = arith.constant 0 : index
    %c2_55 = arith.constant 2 : index
    %c2_56 = arith.constant 2 : index
    %c0_57 = arith.constant 0 : index
    %c0_58 = arith.constant 0 : index
    %65 = vector.load %arg3[%c0_54, %c2_55, %c2_56, %c0_57, %c0_58] : memref<1x3x3x4x16xbf16, #tpu.memory_space<vmem>>, vector<1x1x1x4x16xbf16>
    %66 = vector.shape_cast %65 : vector<1x1x1x4x16xbf16> to vector<4x16xbf16>
    %cst_59 = arith.constant dense<0.000000e+00> : vector<64x16xf32>
    %67 = tpu.matmul %64, %66, %cst_59 {dimension_numbers = #tpu.dot_dimension_numbers<[1], [0], [0], [1], [0, 0, 1, 1], [], []>} : vector<64x4xbf16>, vector<4x16xbf16>, vector<64x16xf32> -> vector<64x16xf32>
    %68 = arith.addf %62, %67 : vector<64x16xf32>
    %c0_60 = arith.constant 0 : index
    %c0_61 = arith.constant 0 : index
    %69 = vector.load %arg4[%c0_60, %c0_61] : memref<1x16xf32, #tpu.memory_space<vmem>>, vector<1x16xf32>
    %70 = vector.broadcast %69 : vector<1x16xf32> to vector<64x16xf32>
    %71 = arith.addf %68, %70 : vector<64x16xf32>
    %cst_62 = arith.constant 0.000000e+00 : f32
    %72 = vector.broadcast %cst_62 : f32 to vector<64x16xf32>
    %73 = arith.cmpf oge, %71, %72 : vector<64x16xf32>
    %cst_63 = arith.constant 1.41421354 : f32
    %cst_64 = arith.constant 0.282842726 : f32
    %74 = vector.broadcast %cst_63 : f32 to vector<64x16xf32>
    %75 = vector.broadcast %cst_64 : f32 to vector<64x16xf32>
    %76 = arith.select %73, %74, %75 : vector<64x16xi1>, vector<64x16xf32>
    %77 = arith.mulf %71, %76 : vector<64x16xf32>
    %78 = vector.shape_cast %77 : vector<64x16xf32> to vector<8x8x16xf32>
    %79 = arith.truncf %78 : vector<8x8x16xf32> to vector<8x8x16xbf16>
    %c0_65 = arith.constant 0 : index
    %c0_66 = arith.constant 0 : index
    %c0_67 = arith.constant 0 : index
    %c0_68 = arith.constant 0 : index
    %80 = vector.load %arg5[%c0_65, %c0_66, %c0_67, %c0_68] : memref<1x8x8x16xbf16, #tpu.memory_space<vmem>>, vector<1x8x8x16xbf16>
    %81 = vector.shape_cast %80 : vector<1x8x8x16xbf16> to vector<8x8x16xbf16>
    %82 = vector.shape_cast %79 : vector<8x8x16xbf16> to vector<1x8x8x16xbf16>
    tpu.vector_store %arg5[%c0_65, %c0_66, %c0_67, %c0_68], %82 {strides = array<i32>} : memref<1x8x8x16xbf16, #tpu.memory_space<vmem>>, vector<1x8x8x16xbf16>,
    return
  }
  func.func @transform_0(%arg0: i32, %arg1: i32) -> (i32, i32, i32, i32) {
    %c0_i32 = arith.constant 0 : i32
    %c0_i32_0 = arith.constant 0 : i32
    %c0_i32_1 = arith.constant 0 : i32
    %c0_i32_2 = arith.constant 0 : i32
    return %arg0, %c0_i32, %c0_i32_0, %c0_i32_1 : i32, i32, i32, i32
  }
  func.func @transform_1(%arg0: i32, %arg1: i32) -> (i32, i32, i32, i32, i32) {
    %c0_i32 = arith.constant 0 : i32
    %c0_i32_0 = arith.constant 0 : i32
    %c0_i32_1 = arith.constant 0 : i32
    %c0_i32_2 = arith.constant 0 : i32
    %c0_i32_3 = arith.constant 0 : i32
    return %arg0, %c0_i32, %c0_i32_0, %c0_i32_1, %c0_i32_2 : i32, i32, i32, i32, i32
  }
  func.func @transform_2(%arg0: i32, %arg1: i32) -> (i32, i32) {
    %c0_i32 = arith.constant 0 : i32
    %c0_i32_0 = arith.constant 0 : i32
    %c0_i32_1 = arith.constant 0 : i32
    return %c0_i32, %c0_i32_0 : i32, i32
  }
  func.func @transform_3(%arg0: i32, %arg1: i32) -> (i32, i32, i32, i32) {
    %c0_i32 = arith.constant 0 : i32
    %c0_i32_0 = arith.constant 0 : i32
    %c0_i32_1 = arith.constant 0 : i32
    return %arg0, %arg1, %c0_i32, %c0_i32_0 : i32, i32, i32, i32
  }
}

module attributes {stable_mosaic.version = 11 : i64} {
  func.func @_mod_conv3x3_kernel(%arg0: i32, %arg1: i32, %arg2: memref<1x18x18x4xbf16, #tpu.memory_space<vmem>>, %arg3: memref<1x3x3x4x4xbf16, #tpu.memory_space<vmem>>, %arg4: memref<1x4xf32, #tpu.memory_space<vmem>>, %arg5: memref<1x16x16x4xf32, #tpu.memory_space<vmem>>) attributes {dimension_semantics = [#tpu.dimension_semantics<parallel>, #tpu.dimension_semantics<parallel>], iteration_bounds = array<i64: 2, 1>, scalar_prefetch = 0 : i64, scratch_operands = 0 : i64, tpu.core_type = #tpu.core_type<tc>, window_params = [{transform_indices = @transform_0, window_bounds = array<i64: 1, 18, 18, 4>}, {transform_indices = @transform_1, window_bounds = array<i64: 1, 3, 3, 4, 4>}, {pipeline_mode = #tpu.pipeline_mode<synchronous>, transform_indices = @transform_2, window_bounds = array<i64: 1, 4>}, {transform_indices = @transform_3, window_bounds = array<i64: 1, 16, 16, 4>}]} {
    %c16_i32 = arith.constant 16 : i32
    %0 = arith.muli %arg1, %c16_i32 : i32
    %1 = tpu.assume_multiple %0, 16 : i32
    %cst = arith.constant 0.000000e+00 : f32
    %2 = vector.broadcast %cst : f32 to vector<256x4xf32>
    %c0_i32 = arith.constant 0 : i32
    %3 = arith.addi %1, %c0_i32 : i32
    %c0 = arith.constant 0 : index
    %4 = arith.index_cast %3 : i32 to index
    %c0_0 = arith.constant 0 : index
    %c0_1 = arith.constant 0 : index
    %5 = vector.load %arg2[%c0, %4, %c0_0, %c0_1] : memref<1x18x18x4xbf16, #tpu.memory_space<vmem>>, vector<1x16x18x4xbf16>
    %6 = vector.shape_cast %5 : vector<1x16x18x4xbf16> to vector<16x18x4xbf16>
    %7 = vector.extract_strided_slice %6 {offsets = [0, 0, 0], sizes = [16, 16, 4], strides = [1, 1, 1]} : vector<16x18x4xbf16> to vector<16x16x4xbf16>
    %8 = vector.shape_cast %7 : vector<16x16x4xbf16> to vector<256x4xbf16>
    %c0_2 = arith.constant 0 : index
    %c0_3 = arith.constant 0 : index
    %c0_4 = arith.constant 0 : index
    %c0_5 = arith.constant 0 : index
    %c0_6 = arith.constant 0 : index
    %9 = vector.load %arg3[%c0_2, %c0_3, %c0_4, %c0_5, %c0_6] : memref<1x3x3x4x4xbf16, #tpu.memory_space<vmem>>, vector<1x1x1x4x4xbf16>
    %10 = vector.shape_cast %9 : vector<1x1x1x4x4xbf16> to vector<4x4xbf16>
    %cst_7 = arith.constant dense<0.000000e+00> : vector<256x4xf32>
    %11 = tpu.matmul %8, %10, %cst_7 {dimension_numbers = #tpu.dot_dimension_numbers<[1], [0], [0], [1], [0, 0, 1, 1], [], []>} : vector<256x4xbf16>, vector<4x4xbf16>, vector<256x4xf32> -> vector<256x4xf32>
    %12 = arith.addf %2, %11 : vector<256x4xf32>
    %13 = vector.extract_strided_slice %6 {offsets = [0, 1, 0], sizes = [16, 16, 4], strides = [1, 1, 1]} : vector<16x18x4xbf16> to vector<16x16x4xbf16>
    %14 = vector.shape_cast %13 : vector<16x16x4xbf16> to vector<256x4xbf16>
    %c0_8 = arith.constant 0 : index
    %c0_9 = arith.constant 0 : index
    %c1 = arith.constant 1 : index
    %c0_10 = arith.constant 0 : index
    %c0_11 = arith.constant 0 : index
    %15 = vector.load %arg3[%c0_8, %c0_9, %c1, %c0_10, %c0_11] : memref<1x3x3x4x4xbf16, #tpu.memory_space<vmem>>, vector<1x1x1x4x4xbf16>
    %16 = vector.shape_cast %15 : vector<1x1x1x4x4xbf16> to vector<4x4xbf16>
    %cst_12 = arith.constant dense<0.000000e+00> : vector<256x4xf32>
    %17 = tpu.matmul %14, %16, %cst_12 {dimension_numbers = #tpu.dot_dimension_numbers<[1], [0], [0], [1], [0, 0, 1, 1], [], []>} : vector<256x4xbf16>, vector<4x4xbf16>, vector<256x4xf32> -> vector<256x4xf32>
    %18 = arith.addf %12, %17 : vector<256x4xf32>
    %19 = vector.extract_strided_slice %6 {offsets = [0, 2, 0], sizes = [16, 16, 4], strides = [1, 1, 1]} : vector<16x18x4xbf16> to vector<16x16x4xbf16>
    %20 = vector.shape_cast %19 : vector<16x16x4xbf16> to vector<256x4xbf16>
    %c0_13 = arith.constant 0 : index
    %c0_14 = arith.constant 0 : index
    %c2 = arith.constant 2 : index
    %c0_15 = arith.constant 0 : index
    %c0_16 = arith.constant 0 : index
    %21 = vector.load %arg3[%c0_13, %c0_14, %c2, %c0_15, %c0_16] : memref<1x3x3x4x4xbf16, #tpu.memory_space<vmem>>, vector<1x1x1x4x4xbf16>
    %22 = vector.shape_cast %21 : vector<1x1x1x4x4xbf16> to vector<4x4xbf16>
    %cst_17 = arith.constant dense<0.000000e+00> : vector<256x4xf32>
    %23 = tpu.matmul %20, %22, %cst_17 {dimension_numbers = #tpu.dot_dimension_numbers<[1], [0], [0], [1], [0, 0, 1, 1], [], []>} : vector<256x4xbf16>, vector<4x4xbf16>, vector<256x4xf32> -> vector<256x4xf32>
    %24 = arith.addf %18, %23 : vector<256x4xf32>
    %c1_i32 = arith.constant 1 : i32
    %25 = arith.addi %1, %c1_i32 : i32
    %c0_18 = arith.constant 0 : index
    %26 = arith.index_cast %25 : i32 to index
    %c0_19 = arith.constant 0 : index
    %c0_20 = arith.constant 0 : index
    %27 = vector.load %arg2[%c0_18, %26, %c0_19, %c0_20] : memref<1x18x18x4xbf16, #tpu.memory_space<vmem>>, vector<1x16x18x4xbf16>
    %28 = vector.shape_cast %27 : vector<1x16x18x4xbf16> to vector<16x18x4xbf16>
    %29 = vector.extract_strided_slice %28 {offsets = [0, 0, 0], sizes = [16, 16, 4], strides = [1, 1, 1]} : vector<16x18x4xbf16> to vector<16x16x4xbf16>
    %30 = vector.shape_cast %29 : vector<16x16x4xbf16> to vector<256x4xbf16>
    %c0_21 = arith.constant 0 : index
    %c1_22 = arith.constant 1 : index
    %c0_23 = arith.constant 0 : index
    %c0_24 = arith.constant 0 : index
    %c0_25 = arith.constant 0 : index
    %31 = vector.load %arg3[%c0_21, %c1_22, %c0_23, %c0_24, %c0_25] : memref<1x3x3x4x4xbf16, #tpu.memory_space<vmem>>, vector<1x1x1x4x4xbf16>
    %32 = vector.shape_cast %31 : vector<1x1x1x4x4xbf16> to vector<4x4xbf16>
    %cst_26 = arith.constant dense<0.000000e+00> : vector<256x4xf32>
    %33 = tpu.matmul %30, %32, %cst_26 {dimension_numbers = #tpu.dot_dimension_numbers<[1], [0], [0], [1], [0, 0, 1, 1], [], []>} : vector<256x4xbf16>, vector<4x4xbf16>, vector<256x4xf32> -> vector<256x4xf32>
    %34 = arith.addf %24, %33 : vector<256x4xf32>
    %35 = vector.extract_strided_slice %28 {offsets = [0, 1, 0], sizes = [16, 16, 4], strides = [1, 1, 1]} : vector<16x18x4xbf16> to vector<16x16x4xbf16>
    %36 = vector.shape_cast %35 : vector<16x16x4xbf16> to vector<256x4xbf16>
    %c0_27 = arith.constant 0 : index
    %c1_28 = arith.constant 1 : index
    %c1_29 = arith.constant 1 : index
    %c0_30 = arith.constant 0 : index
    %c0_31 = arith.constant 0 : index
    %37 = vector.load %arg3[%c0_27, %c1_28, %c1_29, %c0_30, %c0_31] : memref<1x3x3x4x4xbf16, #tpu.memory_space<vmem>>, vector<1x1x1x4x4xbf16>
    %38 = vector.shape_cast %37 : vector<1x1x1x4x4xbf16> to vector<4x4xbf16>
    %cst_32 = arith.constant dense<0.000000e+00> : vector<256x4xf32>
    %39 = tpu.matmul %36, %38, %cst_32 {dimension_numbers = #tpu.dot_dimension_numbers<[1], [0], [0], [1], [0, 0, 1, 1], [], []>} : vector<256x4xbf16>, vector<4x4xbf16>, vector<256x4xf32> -> vector<256x4xf32>
    %40 = arith.addf %34, %39 : vector<256x4xf32>
    %41 = vector.extract_strided_slice %28 {offsets = [0, 2, 0], sizes = [16, 16, 4], strides = [1, 1, 1]} : vector<16x18x4xbf16> to vector<16x16x4xbf16>
    %42 = vector.shape_cast %41 : vector<16x16x4xbf16> to vector<256x4xbf16>
    %c0_33 = arith.constant 0 : index
    %c1_34 = arith.constant 1 : index
    %c2_35 = arith.constant 2 : index
    %c0_36 = arith.constant 0 : index
    %c0_37 = arith.constant 0 : index
    %43 = vector.load %arg3[%c0_33, %c1_34, %c2_35, %c0_36, %c0_37] : memref<1x3x3x4x4xbf16, #tpu.memory_space<vmem>>, vector<1x1x1x4x4xbf16>
    %44 = vector.shape_cast %43 : vector<1x1x1x4x4xbf16> to vector<4x4xbf16>
    %cst_38 = arith.constant dense<0.000000e+00> : vector<256x4xf32>
    %45 = tpu.matmul %42, %44, %cst_38 {dimension_numbers = #tpu.dot_dimension_numbers<[1], [0], [0], [1], [0, 0, 1, 1], [], []>} : vector<256x4xbf16>, vector<4x4xbf16>, vector<256x4xf32> -> vector<256x4xf32>
    %46 = arith.addf %40, %45 : vector<256x4xf32>
    %c2_i32 = arith.constant 2 : i32
    %47 = arith.addi %1, %c2_i32 : i32
    %c0_39 = arith.constant 0 : index
    %48 = arith.index_cast %47 : i32 to index
    %c0_40 = arith.constant 0 : index
    %c0_41 = arith.constant 0 : index
    %49 = vector.load %arg2[%c0_39, %48, %c0_40, %c0_41] : memref<1x18x18x4xbf16, #tpu.memory_space<vmem>>, vector<1x16x18x4xbf16>
    %50 = vector.shape_cast %49 : vector<1x16x18x4xbf16> to vector<16x18x4xbf16>
    %51 = vector.extract_strided_slice %50 {offsets = [0, 0, 0], sizes = [16, 16, 4], strides = [1, 1, 1]} : vector<16x18x4xbf16> to vector<16x16x4xbf16>
    %52 = vector.shape_cast %51 : vector<16x16x4xbf16> to vector<256x4xbf16>
    %c0_42 = arith.constant 0 : index
    %c2_43 = arith.constant 2 : index
    %c0_44 = arith.constant 0 : index
    %c0_45 = arith.constant 0 : index
    %c0_46 = arith.constant 0 : index
    %53 = vector.load %arg3[%c0_42, %c2_43, %c0_44, %c0_45, %c0_46] : memref<1x3x3x4x4xbf16, #tpu.memory_space<vmem>>, vector<1x1x1x4x4xbf16>
    %54 = vector.shape_cast %53 : vector<1x1x1x4x4xbf16> to vector<4x4xbf16>
    %cst_47 = arith.constant dense<0.000000e+00> : vector<256x4xf32>
    %55 = tpu.matmul %52, %54, %cst_47 {dimension_numbers = #tpu.dot_dimension_numbers<[1], [0], [0], [1], [0, 0, 1, 1], [], []>} : vector<256x4xbf16>, vector<4x4xbf16>, vector<256x4xf32> -> vector<256x4xf32>
    %56 = arith.addf %46, %55 : vector<256x4xf32>
    %57 = vector.extract_strided_slice %50 {offsets = [0, 1, 0], sizes = [16, 16, 4], strides = [1, 1, 1]} : vector<16x18x4xbf16> to vector<16x16x4xbf16>
    %58 = vector.shape_cast %57 : vector<16x16x4xbf16> to vector<256x4xbf16>
    %c0_48 = arith.constant 0 : index
    %c2_49 = arith.constant 2 : index
    %c1_50 = arith.constant 1 : index
    %c0_51 = arith.constant 0 : index
    %c0_52 = arith.constant 0 : index
    %59 = vector.load %arg3[%c0_48, %c2_49, %c1_50, %c0_51, %c0_52] : memref<1x3x3x4x4xbf16, #tpu.memory_space<vmem>>, vector<1x1x1x4x4xbf16>
    %60 = vector.shape_cast %59 : vector<1x1x1x4x4xbf16> to vector<4x4xbf16>
    %cst_53 = arith.constant dense<0.000000e+00> : vector<256x4xf32>
    %61 = tpu.matmul %58, %60, %cst_53 {dimension_numbers = #tpu.dot_dimension_numbers<[1], [0], [0], [1], [0, 0, 1, 1], [], []>} : vector<256x4xbf16>, vector<4x4xbf16>, vector<256x4xf32> -> vector<256x4xf32>
    %62 = arith.addf %56, %61 : vector<256x4xf32>
    %63 = vector.extract_strided_slice %50 {offsets = [0, 2, 0], sizes = [16, 16, 4], strides = [1, 1, 1]} : vector<16x18x4xbf16> to vector<16x16x4xbf16>
    %64 = vector.shape_cast %63 : vector<16x16x4xbf16> to vector<256x4xbf16>
    %c0_54 = arith.constant 0 : index
    %c2_55 = arith.constant 2 : index
    %c2_56 = arith.constant 2 : index
    %c0_57 = arith.constant 0 : index
    %c0_58 = arith.constant 0 : index
    %65 = vector.load %arg3[%c0_54, %c2_55, %c2_56, %c0_57, %c0_58] : memref<1x3x3x4x4xbf16, #tpu.memory_space<vmem>>, vector<1x1x1x4x4xbf16>
    %66 = vector.shape_cast %65 : vector<1x1x1x4x4xbf16> to vector<4x4xbf16>
    %cst_59 = arith.constant dense<0.000000e+00> : vector<256x4xf32>
    %67 = tpu.matmul %64, %66, %cst_59 {dimension_numbers = #tpu.dot_dimension_numbers<[1], [0], [0], [1], [0, 0, 1, 1], [], []>} : vector<256x4xbf16>, vector<4x4xbf16>, vector<256x4xf32> -> vector<256x4xf32>
    %68 = arith.addf %62, %67 : vector<256x4xf32>
    %c0_60 = arith.constant 0 : index
    %c0_61 = arith.constant 0 : index
    %69 = vector.load %arg4[%c0_60, %c0_61] : memref<1x4xf32, #tpu.memory_space<vmem>>, vector<1x4xf32>
    %70 = vector.broadcast %69 : vector<1x4xf32> to vector<256x4xf32>
    %71 = arith.addf %68, %70 : vector<256x4xf32>
    %cst_62 = arith.constant 0.000000e+00 : f32
    %72 = vector.broadcast %cst_62 : f32 to vector<256x4xf32>
    %73 = arith.cmpf oge, %71, %72 : vector<256x4xf32>
    %cst_63 = arith.constant 1.41421354 : f32
    %cst_64 = arith.constant 0.282842726 : f32
    %74 = vector.broadcast %cst_63 : f32 to vector<256x4xf32>
    %75 = vector.broadcast %cst_64 : f32 to vector<256x4xf32>
    %76 = arith.select %73, %74, %75 : vector<256x4xi1>, vector<256x4xf32>
    %77 = arith.mulf %71, %76 : vector<256x4xf32>
    %78 = vector.shape_cast %77 : vector<256x4xf32> to vector<16x16x4xf32>
    %c0_65 = arith.constant 0 : index
    %c0_66 = arith.constant 0 : index
    %c0_67 = arith.constant 0 : index
    %c0_68 = arith.constant 0 : index
    %79 = vector.load %arg5[%c0_65, %c0_66, %c0_67, %c0_68] : memref<1x16x16x4xf32, #tpu.memory_space<vmem>>, vector<1x16x16x4xf32>
    %80 = vector.shape_cast %79 : vector<1x16x16x4xf32> to vector<16x16x4xf32>
    %81 = vector.shape_cast %78 : vector<16x16x4xf32> to vector<1x16x16x4xf32>
    tpu.vector_store %arg5[%c0_65, %c0_66, %c0_67, %c0_68], %81 {strides = array<i32>} : memref<1x16x16x4xf32, #tpu.memory_space<vmem>>, vector<1x16x16x4xf32>,
    return
  }
  func.func @transform_0(%arg0: i32, %arg1: i32) -> (i32, i32, i32, i32) {
    %c0_i32 = arith.constant 0 : i32
    %c0_i32_0 = arith.constant 0 : i32
    %c0_i32_1 = arith.constant 0 : i32
    %c0_i32_2 = arith.constant 0 : i32
    return %arg0, %c0_i32, %c0_i32_0, %c0_i32_1 : i32, i32, i32, i32
  }
  func.func @transform_1(%arg0: i32, %arg1: i32) -> (i32, i32, i32, i32, i32) {
    %c0_i32 = arith.constant 0 : i32
    %c0_i32_0 = arith.constant 0 : i32
    %c0_i32_1 = arith.constant 0 : i32
    %c0_i32_2 = arith.constant 0 : i32
    %c0_i32_3 = arith.constant 0 : i32
    return %arg0, %c0_i32, %c0_i32_0, %c0_i32_1, %c0_i32_2 : i32, i32, i32, i32, i32
  }
  func.func @transform_2(%arg0: i32, %arg1: i32) -> (i32, i32) {
    %c0_i32 = arith.constant 0 : i32
    %c0_i32_0 = arith.constant 0 : i32
    %c0_i32_1 = arith.constant 0 : i32
    return %c0_i32, %c0_i32_0 : i32, i32
  }
  func.func @transform_3(%arg0: i32, %arg1: i32) -> (i32, i32, i32, i32) {
    %c0_i32 = arith.constant 0 : i32
    %c0_i32_0 = arith.constant 0 : i32
    %c0_i32_1 = arith.constant 0 : i32
    return %arg0, %arg1, %c0_i32, %c0_i32_0 : i32, i32, i32, i32
  }
}

</mosaic_0001>

<llo_original>
// kernel: tile.9
$region0: #{tile.9}
  %s0 = inlined_call_operand.vmem [shape: f32[4,4], index: 0, kind: input, shape index: {}]
  %s1 = inlined_call_operand.vmem [shape: f32[1,16], index: 1, kind: output, shape index: {}]
  $region1: #{tile.9} parent=0
    #allocation0 [shape = 'u8[4096]{0}', space=vmem, size = 0x1000, scoped, tag = 'scoped mem for output reshape']
    #allocation1 [shape = 'u8[4096]{0}', space=vmem, size = 0x1000, scoped, tag = 'scoped mem for input reshape']
    %s3 = sshllo.u32 0, 4
    %v4 = vld [vmem:[%s0] sm:%s3]
    %5 = vst [vmem:[#allocation1] sm:%s3] %v4
    %v6 = vld [vmem:[#allocation1] sm:$0x1]
    %vm7 = vcmask 31744
    %8 = vst.msk [vmem:[#allocation0] sm:$0x1] %vm7, %v6
    %s9 = scalar_lea.vmem [#allocation1], 3
    %v10 = vld [vmem:[%s9] sm:$0x1]
    %11 = vrot.lane.b32.xlu0 %v10, 12
    %v12 = vpop.permute.xlu0 %11
    %vm13 = vcmask 130144
    %14 = vst.msk [vmem:[#allocation0] sm:$0x1] %vm13, %v12
    %s15 = scalar_lea.vmem [#allocation1], 2
    %v16 = vld [vmem:[%s15] sm:$0x1]
    %17 = vrot.lane.b32.xlu0 %v16, 8
    %v18 = vpop.permute.xlu0 %17
    %vm19 = vcmask 97344
    %20 = vst.msk [vmem:[#allocation0] sm:$0x1] %vm19, %v18
    %s21 = scalar_lea.vmem [#allocation1], 1
    %v22 = vld [vmem:[%s21] sm:$0x1]
    %23 = vrot.lane.b32.xlu0 %v22, 4
    %v24 = vpop.permute.xlu0 %23
    %vm25 = vcmask 64544
    %26 = vst.msk [vmem:[#allocation0] sm:$0x1] %vm25, %v24
    %s28 = sshllo.u32 0, 1
    %v30 = vld [vmem:[#allocation0] sm:%s28]
    %s31 = sshllo.u32 0, 1
    %32 = vst [vmem:[%s1] sm:%s31] %v30

// kernel: tile.8
$region0: #{tile.8}
  #allocation2 [shape = 's32[1]{0}', space=sflag, size = 0x4, scoped, tag = 'scoped memory for tile.8']
  %s0 = inlined_call_operand.hbm [shape: f32[4], index: 0, kind: input, shape index: {}]
  %s1 = inlined_call_operand.vmem [shape: f32[4,4], index: 1, kind: output, shape index: {}]
  $region1: #{tile.8} parent=0
    #allocation0 [shape = 'u8[512]{0}', space=vmem, size = 0x400, scoped, tag = 'operand span for operand 0']
    #allocation1 [shape = 's32[1]{0}', space=sflag, size = 0x4, scoped, tag = 'scoped memory for tile.8']
    %2 = vsyncpa [#allocation1], 0
    // Predicated region
    $region2: #{tile.8} parent=1 // pred_check
      _
    $region3: #{tile.8} parent=1 // pred_check_branch
      %4 = sbr.rel (0) target = $region5
    $region4: #{tile.8} parent=1 // pred_region
      %s6 = ssub.s32 16, 16
      %7 = vsyncadd [#allocation1], %s6
      %s9 = sshll.u32 [#allocation0], 4
      %s10 = int_to_ptr.vmem [resolvable:$true] %s9
      %12 = dma.hbm_to_vmem [thread:$0]  %s0, 16, %s10, [#allocation1]
    $region5: #{tile.8} parent=1 // pred_fallthru
      _
    // Predicated region
    $region6: #{tile.8} parent=1 // pred_check
      _
    $region7: #{tile.8} parent=1 // pred_check_branch
      %14 = sbr.rel (0) target = $region9
    $region8: #{tile.8} parent=1 // pred_region
      %15 = dma.done [#allocation1], 16
    $region9: #{tile.8} parent=1 // pred_fallthru
      _
    %v16 = vld [vmem:[#allocation0] ss:$0 sm:$0xff]
    %17 = vst [vmem:[%s1] sm:$0xf] %v16
    %18 = vsyncpa [#allocation1], 1

// kernel: upsampling_block_forward.2
$region0: #{upsampling_block_forward.2}
  #allocation0 [shape = 'u32[]', space=smem, size = 0x4, offset = 0x4, fixed_abs, tag = 'smem constant byte address 0x4 - core index']
  #allocation1 [shape = 'u32[144,128]{1,0:T(1,128)}', space=vmem, size = 0x12000, scoped, tag = 'internal scratch']
  %s0 = inlined_call_operand.vmem [shape: bf16[2,10,10,4], index: 0, kind: input, shape index: {}]
  %s1 = inlined_call_operand.vmem [shape: bf16[2,3,3,4,16], index: 1, kind: input, shape index: {}]
  %s2 = inlined_call_operand.vmem [shape: f32[1,16], index: 2, kind: input, shape index: {}]
  %s3 = inlined_call_operand.vmem [shape: bf16[2,8,8,16], index: 3, kind: output, shape index: {}]
  %s4 = sld [smem:[#allocation0]]
  $region45: #{upsampling_block_forward.2} parent=0
    _
  %s6 = ssub.s32 1, %s4
  %s7 = scalar_select 0, %s6, %s4
  loop: start=0, step=1, limit=4
  $region2: #{upsampling_block_forward.2} parent=0 // loop_pre_header
    _
  $region3: #{upsampling_block_forward.2} parent=0 // loop_header
    %s9 = sphi 0, %s13
    %p10 = scmp.ge.s32.totalorder %s9, 4
    %s16 = sphi 0, %s28
    %s17 = sphi 0, %s24
    %s18 = sphi 0, %s16
    %s19 = sphi 0, %s17
    %s20 = sphi 0, %s18
    %s21 = sphi 0, %s19
    %s31 = sphi 0, %s33
    %s34 = sphi 0, %s31
    %s35 = sphi 0, %s34
    %s51 = sphi 0, %s35
    %s57 = sphi 0, %s59
    %s60 = sphi 0, %s57
    %s61 = sphi 0, %s60
    %s77 = sphi 0, %s61
    %s81 = sphi 0, %s81
    %s83 = sphi 0, %s81
    %s84 = sphi 0, %s83
    %s98 = sphi 0, %s84
    %s106 = sphi 0, %s108
    %s109 = sphi 0, %s106
    %s110 = sphi 0, %s109
    %s126 = sphi 0, %s110
  $region4: #{upsampling_block_forward.2} parent=0 // loop_header_branch
    %12 = sbr.rel (%p10) target = $region8
  $region5: #{upsampling_block_forward.2} parent=0 // loop_body
    %s14 = ssub.s32 %s9, 1
    %s15 = ssub.s32 %s9, 2
    %s22 = sadd.s32 1, %s17
    %p23 = scmp.ge.s32.totalorder %s22, 1
    %s24 = scalar_select %p23, 0, %s22
    %s25 = sadd.s32 1, %s16
    %s26 = scalar_select %p23, %s25, %s16
    %p27 = scmp.ge.s32.totalorder %s26, 2
    %s28 = scalar_select %p27, 0, %s26
    %s29 = ssub.s32 %s16, %s28
    %p30 = scmp.eq.s32.totalorder %s29, 0
    %s32 = sadd.s32 %s31, 1
    %s33 = scalar_select %p30, %s31, %s32
    %p36 = pneg %p30
    %p37 = scmp.eq.s32.totalorder %s9, 1
    %p38 = por %p36, %p37
    %p39 = scmp.ne.s32.totalorder %s31, %s34
    %p40 = scmp.eq.s32.totalorder %s9, 0
    %p41 = por %p39, %p40
    %p42 = scmp.ne.s32.totalorder %s31, %s34
    %p43 = scmp.eq.s32.totalorder %s14, 1
    %p44 = por %p42, %p43
    %p45 = scmp.ne.s32.totalorder %s34, %s35
    %p46 = scmp.eq.s32.totalorder %s14, 0
    %p47 = por %p45, %p46
    %p48 = scmp.ne.s32.totalorder %s34, %s35
    %p49 = scmp.eq.s32.totalorder %s15, 1
    %p50 = por %p48, %p49
    %p52 = scmp.ne.s32.totalorder %s35, %s51
    %p53 = scmp.eq.s32.totalorder %s15, 0
    %p54 = por %p52, %p53
    %s55 = ssub.s32 %s16, %s28
    %p56 = scmp.eq.s32.totalorder %s55, 0
    %s58 = sadd.s32 %s57, 1
    %s59 = scalar_select %p56, %s57, %s58
    %p62 = pneg %p56
    %p63 = scmp.eq.s32.totalorder %s9, 1
    %p64 = por %p62, %p63
    %p65 = scmp.ne.s32.totalorder %s57, %s60
    %p66 = scmp.eq.s32.totalorder %s9, 0
    %p67 = por %p65, %p66
    %p68 = scmp.ne.s32.totalorder %s57, %s60
    %p69 = scmp.eq.s32.totalorder %s14, 1
    %p70 = por %p68, %p69
    %p71 = scmp.ne.s32.totalorder %s60, %s61
    %p72 = scmp.eq.s32.totalorder %s14, 0
    %p73 = por %p71, %p72
    %p74 = scmp.ne.s32.totalorder %s60, %s61
    %p75 = scmp.eq.s32.totalorder %s15, 1
    %p76 = por %p74, %p75
    %p78 = scmp.ne.s32.totalorder %s61, %s77
    %p79 = scmp.eq.s32.totalorder %s15, 0
    %p80 = por %p78, %p79
    %s82 = sadd.s32 %s81, 1
    %p85 = scmp.eq.s32.totalorder %s9, 1
    %p86 = scmp.ne.s32.totalorder %s81, %s83
    %p87 = scmp.eq.s32.totalorder %s9, 0
    %p88 = por %p86, %p87
    %p89 = scmp.ne.s32.totalorder %s81, %s83
    %p90 = scmp.eq.s32.totalorder %s14, 1
    %p91 = por %p89, %p90
    %p92 = scmp.ne.s32.totalorder %s83, %s84
    %p93 = scmp.eq.s32.totalorder %s14, 0
    %p94 = por %p92, %p93
    %p95 = scmp.ne.s32.totalorder %s83, %s84
    %p96 = scmp.eq.s32.totalorder %s15, 1
    %p97 = por %p95, %p96
    %p99 = scmp.ne.s32.totalorder %s84, %s98
    %p100 = scmp.eq.s32.totalorder %s15, 0
    %p101 = por %p99, %p100
    %s102 = ssub.s32 %s16, %s28
    %s103 = ssub.s32 %s17, %s24
    %s104 = sor.u32 %s102, %s103
    %p105 = scmp.eq.s32.totalorder %s104, 0
    %s107 = sadd.s32 %s106, 1
    %s108 = scalar_select %p105, %s106, %s107
    %p111 = pneg %p105
    %p112 = scmp.eq.s32.totalorder %s9, 1
    %p113 = por %p111, %p112
    %p114 = scmp.ne.s32.totalorder %s106, %s109
    %p115 = scmp.eq.s32.totalorder %s9, 0
    %p116 = por %p114, %p115
    %p117 = scmp.ne.s32.totalorder %s106, %s109
    %p118 = scmp.eq.s32.totalorder %s14, 1
    %p119 = por %p117, %p118
    %p120 = scmp.ne.s32.totalorder %s109, %s110
    %p121 = scmp.eq.s32.totalorder %s14, 0
    %p122 = por %p120, %p121
    %p123 = scmp.ne.s32.totalorder %s109, %s110
    %p124 = scmp.eq.s32.totalorder %s15, 1
    %p125 = por %p123, %p124
    %p127 = scmp.ne.s32.totalorder %s110, %s126
    %p128 = scmp.eq.s32.totalorder %s15, 0
    %p129 = por %p127, %p128
    %p130 = scmp.le.s32.totalorder 1, %s9
    %p131 = scmp.lt.s32.totalorder %s9, 3
    %p132 = pnand %p130, %p131
    %p133 = pneg %p132
    // Predicated region
    $region9: #{upsampling_block_forward.2} parent=5 // pred_check
      _
    $region10: #{upsampling_block_forward.2} parent=5 // pred_check_branch
      %135 = sbr.rel (%p132) target = $region12
    $region11: #{upsampling_block_forward.2} parent=5 // pred_region
      %s136 = ssub.s32 %s9, 1
      // Predicated region
      $region13: #{upsampling_block_forward.2} parent=11 // pred_check
        %p137 = pneg %p94
      $region14: #{upsampling_block_forward.2} parent=11 // pred_check_branch
        %139 = sbr.rel (%p137) target = $region16
      $region15: #{upsampling_block_forward.2} parent=11 // pred_region
        _
      $region16: #{upsampling_block_forward.2} parent=11 // pred_fallthru
        _
    $region12: #{upsampling_block_forward.2} parent=5 // pred_fallthru
      _
    %p140 = scmp.lt.s32.totalorder %s9, 2
    // Predicated region
    $region17: #{upsampling_block_forward.2} parent=5 // pred_check
      %p141 = pneg %p140
    $region18: #{upsampling_block_forward.2} parent=5 // pred_check_branch
      %143 = sbr.rel (%p141) target = $region20
    $region19: #{upsampling_block_forward.2} parent=5 // pred_region
      // Predicated region
      $region21: #{upsampling_block_forward.2} parent=19 // pred_check
        %p144 = pneg %p41
      $region22: #{upsampling_block_forward.2} parent=19 // pred_check_branch
        %146 = sbr.rel (%p144) target = $region24
      $region23: #{upsampling_block_forward.2} parent=19 // pred_region
        %p147 = scmp.lt.s32.totalorder %s16, 1
        %s148 = scalar_select %p147, %s16, 1
        %s149 = smul.addr %s148, 20
        %s150 = smul.addr %s149, 4
        %s151 = scalar_lea.vmem %s0, %s150
      $region24: #{upsampling_block_forward.2} parent=19 // pred_fallthru
        _
      // Predicated region
      $region25: #{upsampling_block_forward.2} parent=19 // pred_check
        %p152 = pneg %p67
      $region26: #{upsampling_block_forward.2} parent=19 // pred_check_branch
        %154 = sbr.rel (%p152) target = $region28
      $region27: #{upsampling_block_forward.2} parent=19 // pred_region
        %p155 = scmp.lt.s32.totalorder %s16, 1
        %s156 = scalar_select %p155, %s16, 1
        %s157 = smul.addr %s156, 9
        %s158 = smul.addr %s157, 2
        %s159 = scalar_lea.vmem %s1, %s158
      $region28: #{upsampling_block_forward.2} parent=19 // pred_fallthru
        _
    $region20: #{upsampling_block_forward.2} parent=5 // pred_fallthru
      _
    %p160 = scmp.le.s32.totalorder 1, %s9
    %p161 = scmp.lt.s32.totalorder %s9, 3
    %p162 = pnand %p160, %p161
    %p163 = pneg %p162
    // Predicated region
    $region29: #{upsampling_block_forward.2} parent=5 // pred_check
      _
    $region30: #{upsampling_block_forward.2} parent=5 // pred_check_branch
      %165 = sbr.rel (%p162) target = $region32
    $region31: #{upsampling_block_forward.2} parent=5 // pred_region
      %s166 = ssub.s32 %s9, 1
      %p167 = scmp.lt.s32.totalorder %s18, 1
      %s168 = scalar_select %p167, %s18, 1
      %s169 = smul.addr %s168, 20
      %s170 = smul.addr %s169, 4
      %s171 = scalar_lea.vmem %s0, %s170
      %p172 = pneg %p47
      %p173 = pneg %p44
      %p174 = scmp.lt.s32.totalorder %s18, 1
      %s175 = scalar_select %p174, %s18, 1
      %s176 = smul.addr %s175, 9
      %s177 = smul.addr %s176, 2
      %s178 = scalar_lea.vmem %s1, %s177
      %p179 = pneg %p73
      %p180 = pneg %p70
      %p181 = pneg %p94
      %p182 = pneg %p91
      %p183 = pneg %p122
      %p184 = pneg %p119
      %s185 = smul.u32 8, %s19
      %p186 = scmp.lt.s32.totalorder %s18, 1
      %s187 = scalar_select %p186, %s18, 1
      %p188 = scmp.lt.s32.totalorder %s185, 7
      %s189 = scalar_select %p188, %s185, 7
      %s190 = smul.addr %s187, 8
      %s191 = sadd.s32 %s189, %s190
      %s192 = smul.addr %s191, 4
      %s193 = scalar_lea.vmem %s3, %s192
      %p194 = scmp.lt.s32.totalorder %s18, 1
      %s195 = scalar_select %p194, %s18, 1
      %s196 = smul.addr %s195, 20
      %s197 = smul.addr %s196, 4
      %s198 = scalar_lea.vmem %s0, %s197
      %p199 = scmp.lt.s32.totalorder %s18, 1
      %s200 = scalar_select %p199, %s18, 1
      %s201 = smul.addr %s200, 9
      %s202 = smul.addr %s201, 2
      %s203 = scalar_lea.vmem %s1, %s202
      %s204 = smul.u32 8, %s19
      %p205 = scmp.lt.s32.totalorder %s18, 1
      %s206 = scalar_select %p205, %s18, 1
      %p207 = scmp.lt.s32.totalorder %s204, 7
      %s208 = scalar_select %p207, %s204, 7
      %s209 = smul.addr %s206, 8
      %s210 = sadd.s32 %s208, %s209
      %s211 = smul.addr %s210, 4
      %s212 = scalar_lea.vmem %s3, %s211
      %s213 = smul.u32 8, %s19
      %s215 = smul.u32 %s19, 8
      %s216 = smul.u32 %s215, 2
      %s217 = smul.addr %s216, 4
      %s218 = scalar_lea.vmem %s198, %s217
      %v219 = vld [vmem:[%s218] sm:$0xf]
      %v220 = vld [vmem:[%s218 + $0x4] sm:$0x1]
      %v221 = vld [vmem:[%s218 + $0x8] sm:$0xf]
      %v222 = vld [vmem:[%s218 + $0xc] sm:$0x1]
      %v223 = vld [vmem:[%s218 + $0x10] sm:$0xf]
      %v224 = vld [vmem:[%s218 + $0x14] sm:$0x1]
      %v225 = vld [vmem:[%s218 + $0x18] sm:$0xf]
      %v226 = vld [vmem:[%s218 + $0x1c] sm:$0x1]
      %v227 = vld [vmem:[%s218 + $0x20] sm:$0xf]
      %v228 = vld [vmem:[%s218 + $0x24] sm:$0x1]
      %v229 = vld [vmem:[%s218 + $0x28] sm:$0xf]
      %v230 = vld [vmem:[%s218 + $0x2c] sm:$0x1]
      %v231 = vld [vmem:[%s218 + $0x30] sm:$0xf]
      %v232 = vld [vmem:[%s218 + $0x34] sm:$0x1]
      %v233 = vld [vmem:[%s218 + $0x38] sm:$0xf]
      %v234 = vld [vmem:[%s218 + $0x3c] sm:$0x1]
      %v235 = vld [vmem:[%s203] sm:$0x3]
      %vm236 = vsmask.f32 3328
      %vm237 = vsmask.f32 7440
      %vm238 = vmor %vm236, %vm237
      %v240 = vshrl.u32 %v219, 16
      %v242 = vrot.slane %v240, 4
      %v243 = vshll.u32 %v219, 16
      %v245 = vrot.slane %v243, 5
      %v246 = vor.u32 %v242, %v245
      %v247 = vrot.slane %v246, 4
      %v249 = vshll.u32 %v220, 16
      %v251 = vrot.slane %v249, 5
      %v252 = vsel %vm238, %v247, %v251
      %v254 = vshrl.u32 %v221, 16
      %v256 = vrot.slane %v254, 4
      %v257 = vshll.u32 %v221, 16
      %v259 = vrot.slane %v257, 5
      %v260 = vor.u32 %v256, %v259
      %v261 = vrot.slane %v260, 4
      %v263 = vshll.u32 %v222, 16
      %v265 = vrot.slane %v263, 5
      %v266 = vsel %vm238, %v261, %v265
      %v268 = vshrl.u32 %v223, 16
      %v270 = vrot.slane %v268, 4
      %v271 = vshll.u32 %v223, 16
      %v273 = vrot.slane %v271, 5
      %v274 = vor.u32 %v270, %v273
      %v275 = vrot.slane %v274, 4
      %v277 = vshll.u32 %v224, 16
      %v279 = vrot.slane %v277, 5
      %v280 = vsel %vm238, %v275, %v279
      %v282 = vshrl.u32 %v225, 16
      %v284 = vrot.slane %v282, 4
      %v285 = vshll.u32 %v225, 16
      %v287 = vrot.slane %v285, 5
      %v288 = vor.u32 %v284, %v287
      %v289 = vrot.slane %v288, 4
      %v291 = vshll.u32 %v226, 16
      %v293 = vrot.slane %v291, 5
      %v294 = vsel %vm238, %v289, %v293
      %v296 = vshrl.u32 %v227, 16
      %v298 = vrot.slane %v296, 4
      %v299 = vshll.u32 %v227, 16
      %v301 = vrot.slane %v299, 5
      %v302 = vor.u32 %v298, %v301
      %v303 = vrot.slane %v302, 4
      %v305 = vshll.u32 %v228, 16
      %v307 = vrot.slane %v305, 5
      %v308 = vsel %vm238, %v303, %v307
      %v310 = vshrl.u32 %v229, 16
      %v312 = vrot.slane %v310, 4
      %v313 = vshll.u32 %v229, 16
      %v315 = vrot.slane %v313, 5
      %v316 = vor.u32 %v312, %v315
      %v317 = vrot.slane %v316, 4
      %v319 = vshll.u32 %v230, 16
      %v321 = vrot.slane %v319, 5
      %v322 = vsel %vm238, %v317, %v321
      %v324 = vshrl.u32 %v231, 16
      %v326 = vrot.slane %v324, 4
      %v327 = vshll.u32 %v231, 16
      %v329 = vrot.slane %v327, 5
      %v330 = vor.u32 %v326, %v329
      %v331 = vrot.slane %v330, 4
      %v333 = vshll.u32 %v232, 16
      %v335 = vrot.slane %v333, 5
      %v336 = vsel %vm238, %v331, %v335
      %v338 = vshrl.u32 %v233, 16
      %v340 = vrot.slane %v338, 4
      %v341 = vshll.u32 %v233, 16
      %v343 = vrot.slane %v341, 5
      %v344 = vor.u32 %v340, %v343
      %v345 = vrot.slane %v344, 4
      %v347 = vshll.u32 %v234, 16
      %v349 = vrot.slane %v347, 5
      %v350 = vsel %vm238, %v345, %v349
      %s351 = scalar_lea.vmem %s203, 2
      %v352 = vld [vmem:[%s351] sm:$0x3]
      %v353 = vunpack.c.l.b16 %v252
      %v354 = vunpack.c.l.b16 %v266
      %v355 = vunpack.c.l.b16 %v280
      %v356 = vunpack.c.l.b16 %v294
      %v357 = vunpack.c.l.b16 %v308
      %v358 = vunpack.c.l.b16 %v322
      %v359 = vunpack.c.l.b16 %v336
      %v360 = vunpack.c.l.b16 %v350
      %v361 = vpack.c.b16 %v354, %v353
      %v362 = vpack.c.b16 %v356, %v355
      %v363 = vpack.c.b16 %v358, %v357
      %v364 = vpack.c.b16 %v360, %v359
      %vm365 = vcmask 31744
      %v367 = vsel %vm365, %v361, 0
      %v370 = vsel %vm365, %v362, 0
      %v373 = vsel %vm365, %v363, 0
      %v376 = vsel %vm365, %v364, 0
      %vm378 = vcmask 1041408
      %v380 = vsel %vm378, %v352, 0
      %382 = vmatprep.subr.bf16.mxu0 0
      %383 = vmatpush1.bf16.msra.mxu0 %v380
      %384 = vmatprep.subr.bf16.mxu0 0
      %385 = vmatpush1.bf16.msra.mxu0 0
      %386 = vmatprep.subr.bf16.mxu0 0
      %387 = vmatpush1.bf16.msra.mxu0 0
      %388 = vmatprep.subr.bf16.mxu0 0
      %389 = vmatpush1.bf16.msra.mxu0 0
      %390 = vmatprep.subr.bf16.mxu0 0
      %391 = vmatpush1.bf16.msra.mxu0 0
      %392 = vmatprep.subr.bf16.mxu0 0
      %393 = vmatpush1.bf16.msra.mxu0 0
      %394 = vmatprep.subr.bf16.mxu0 0
      %395 = vmatpush1.bf16.msra.mxu0 0
      %396 = vmatprep.subr.bf16.mxu0 0
      %397 = vmatpush1.bf16.msra.mxu0 0
      %398 = vmatprep.subr.bf16.mxu0 0
      %399 = vmatpush1.bf16.msra.mxu0 0
      %400 = vmatprep.subr.bf16.mxu0 0
      %401 = vmatpush1.bf16.msra.mxu0 0
      %402 = vmatprep.subr.bf16.mxu0 0
      %403 = vmatpush1.bf16.msra.mxu0 0
      %404 = vmatprep.subr.bf16.mxu0 0
      %405 = vmatpush1.bf16.msra.mxu0 0
      %406 = vmatprep.subr.bf16.mxu0 0
      %407 = vmatpush1.bf16.msra.mxu0 0
      %408 = vmatprep.subr.bf16.mxu0 0
      %409 = vmatpush1.bf16.msra.mxu0 0
      %410 = vmatprep.subr.bf16.mxu0 0
      %411 = vmatpush1.bf16.msra.mxu0 0
      %412 = vmatprep.subr.bf16.mxu0 0
      %413 = vmatpush1.bf16.msra.mxu0 0
      %414 = vmatprep.mubr.bf16.mxu0 0
      %415 = vmatmul.mubr.bf16.gmra.mrb[0].mxu0 %v367
      %v416 = vpop.f32.mrb[0].mxu0
      %v417 = vadd.f32 0.0, %v416
      %v418 = vpop.f32.mrb[0].mxu0
      %v419 = vpop.f32.mrb[0].mxu0
      %v420 = vadd.f32 0.0, %v419
      %v421 = vpop.f32.mrb[0].mxu0
      %422 = vmatprep.mubr.bf16.mxu0 0
      %423 = vmatmul.mubr.bf16.gmra.mrb[0].mxu0 %v370
      %v424 = vpop.f32.mrb[0].mxu0
      %v425 = vadd.f32 0.0, %v424
      %v426 = vpop.f32.mrb[0].mxu0
      %v427 = vpop.f32.mrb[0].mxu0
      %v428 = vadd.f32 0.0, %v427
      %v429 = vpop.f32.mrb[0].mxu0
      %430 = vmatprep.mubr.bf16.mxu0 0
      %431 = vmatmul.mubr.bf16.gmra.mrb[0].mxu0 %v373
      %v432 = vpop.f32.mrb[0].mxu0
      %v433 = vadd.f32 0.0, %v432
      %v434 = vpop.f32.mrb[0].mxu0
      %v435 = vpop.f32.mrb[0].mxu0
      %v436 = vadd.f32 0.0, %v435
      %v437 = vpop.f32.mrb[0].mxu0
      %438 = vmatprep.mubr.bf16.mxu0 0
      %439 = vmatmul.mubr.bf16.gmra.mrb[0].mxu0 %v376
      %v440 = vpop.f32.mrb[0].mxu0
      %v441 = vadd.f32 0.0, %v440
      %v442 = vpop.f32.mrb[0].mxu0
      %v443 = vpop.f32.mrb[0].mxu0
      %v444 = vadd.f32 0.0, %v443
      %v445 = vpop.f32.mrb[0].mxu0
      %446 = vdwg.mxu0
      %v455 = vunpack.c.l.b16 %v219
      %v456 = vunpack.c.l.b16 %v221
      %v457 = vunpack.c.l.b16 %v223
      %v458 = vunpack.c.l.b16 %v225
      %v459 = vunpack.c.l.b16 %v227
      %v460 = vunpack.c.l.b16 %v229
      %v461 = vunpack.c.l.b16 %v231
      %v462 = vunpack.c.l.b16 %v233
      %v463 = vpack.c.b16 %v456, %v455
      %v464 = vpack.c.b16 %v458, %v457
      %v465 = vpack.c.b16 %v460, %v459
      %v466 = vpack.c.b16 %v462, %v461
      %v468 = vsel %vm365, %v463, 0
      %v471 = vsel %vm365, %v464, 0
      %v474 = vsel %vm365, %v465, 0
      %v477 = vsel %vm365, %v466, 0
      %v480 = vsel %vm378, %v235, 0
      %482 = vmatprep.subr.bf16.mxu0 0
      %483 = vmatpush1.bf16.msra.mxu0 %v480
      %484 = vmatprep.subr.bf16.mxu0 0
      %485 = vmatpush1.bf16.msra.mxu0 0
      %486 = vmatprep.subr.bf16.mxu0 0
      %487 = vmatpush1.bf16.msra.mxu0 0
      %488 = vmatprep.subr.bf16.mxu0 0
      %489 = vmatpush1.bf16.msra.mxu0 0
      %490 = vmatprep.subr.bf16.mxu0 0
      %491 = vmatpush1.bf16.msra.mxu0 0
      %492 = vmatprep.subr.bf16.mxu0 0
      %493 = vmatpush1.bf16.msra.mxu0 0
      %494 = vmatprep.subr.bf16.mxu0 0
      %495 = vmatpush1.bf16.msra.mxu0 0
      %496 = vmatprep.subr.bf16.mxu0 0
      %497 = vmatpush1.bf16.msra.mxu0 0
      %498 = vmatprep.subr.bf16.mxu0 0
      %499 = vmatpush1.bf16.msra.mxu0 0
      %500 = vmatprep.subr.bf16.mxu0 0
      %501 = vmatpush1.bf16.msra.mxu0 0
      %502 = vmatprep.subr.bf16.mxu0 0
      %503 = vmatpush1.bf16.msra.mxu0 0
      %504 = vmatprep.subr.bf16.mxu0 0
      %505 = vmatpush1.bf16.msra.mxu0 0
      %506 = vmatprep.subr.bf16.mxu0 0
      %507 = vmatpush1.bf16.msra.mxu0 0
      %508 = vmatprep.subr.bf16.mxu0 0
      %509 = vmatpush1.bf16.msra.mxu0 0
      %510 = vmatprep.subr.bf16.mxu0 0
      %511 = vmatpush1.bf16.msra.mxu0 0
      %512 = vmatprep.subr.bf16.mxu0 0
      %513 = vmatpush1.bf16.msra.mxu0 0
      %514 = vmatprep.mubr.bf16.mxu0 0
      %515 = vmatmul.mubr.bf16.gmra.mrb[0].mxu0 %v468
      %v516 = vpop.f32.mrb[0].mxu0
      %v517 = vadd.f32 %v417, %v516
      %v518 = vpop.f32.mrb[0].mxu0
      %v519 = vpop.f32.mrb[0].mxu0
      %v520 = vadd.f32 %v420, %v519
      %v521 = vpop.f32.mrb[0].mxu0
      %522 = vmatprep.mubr.bf16.mxu0 0
      %523 = vmatmul.mubr.bf16.gmra.mrb[0].mxu0 %v471
      %v524 = vpop.f32.mrb[0].mxu0
      %v525 = vadd.f32 %v425, %v524
      %v526 = vpop.f32.mrb[0].mxu0
      %v527 = vpop.f32.mrb[0].mxu0
      %v528 = vadd.f32 %v428, %v527
      %v529 = vpop.f32.mrb[0].mxu0
      %530 = vmatprep.mubr.bf16.mxu0 0
      %531 = vmatmul.mubr.bf16.gmra.mrb[0].mxu0 %v474
      %v532 = vpop.f32.mrb[0].mxu0
      %v533 = vadd.f32 %v433, %v532
      %v534 = vpop.f32.mrb[0].mxu0
      %v535 = vpop.f32.mrb[0].mxu0
      %v536 = vadd.f32 %v436, %v535
      %v537 = vpop.f32.mrb[0].mxu0
      %538 = vmatprep.mubr.bf16.mxu0 0
      %539 = vmatmul.mubr.bf16.gmra.mrb[0].mxu0 %v477
      %v540 = vpop.f32.mrb[0].mxu0
      %v541 = vadd.f32 %v441, %v540
      %v542 = vpop.f32.mrb[0].mxu0
      %v543 = vpop.f32.mrb[0].mxu0
      %v544 = vadd.f32 %v444, %v543
      %v545 = vpop.f32.mrb[0].mxu0
      %546 = vdwg.mxu0
      %vm555 = vcmask 1042432
      %vm556 = vcmask 1046532
      %vm557 = vmor %vm555, %vm556
      %v558 = vrot.slane %v219, 5
      %v559 = vrot.slane %v558, 4
      %v560 = vrot.slane %v220, 5
      %v561 = vsel %vm557, %v559, %v560
      %v562 = vrot.slane %v221, 5
      %v563 = vrot.slane %v562, 4
      %v564 = vrot.slane %v222, 5
      %v565 = vsel %vm557, %v563, %v564
      %v566 = vrot.slane %v223, 5
      %v567 = vrot.slane %v566, 4
      %v568 = vrot.slane %v224, 5
      %v569 = vsel %vm557, %v567, %v568
      %v570 = vrot.slane %v225, 5
      %v571 = vrot.slane %v570, 4
      %v572 = vrot.slane %v226, 5
      %v573 = vsel %vm557, %v571, %v572
      %v574 = vrot.slane %v227, 5
      %v575 = vrot.slane %v574, 4
      %v576 = vrot.slane %v228, 5
      %v577 = vsel %vm557, %v575, %v576
      %v578 = vrot.slane %v229, 5
      %v579 = vrot.slane %v578, 4
      %v580 = vrot.slane %v230, 5
      %v581 = vsel %vm557, %v579, %v580
      %v582 = vrot.slane %v231, 5
      %v583 = vrot.slane %v582, 4
      %v584 = vrot.slane %v232, 5
      %v585 = vsel %vm557, %v583, %v584
      %v586 = vrot.slane %v233, 5
      %v587 = vrot.slane %v586, 4
      %v588 = vrot.slane %v234, 5
      %v589 = vsel %vm557, %v587, %v588
      %s590 = scalar_lea.vmem %s203, 4
      %v591 = vld [vmem:[%s590] sm:$0x3]
      %v592 = vunpack.c.l.b16 %v561
      %v593 = vunpack.c.l.b16 %v565
      %v594 = vunpack.c.l.b16 %v569
      %v595 = vunpack.c.l.b16 %v573
      %v596 = vunpack.c.l.b16 %v577
      %v597 = vunpack.c.l.b16 %v581
      %v598 = vunpack.c.l.b16 %v585
      %v599 = vunpack.c.l.b16 %v589
      %v600 = vpack.c.b16 %v593, %v592
      %v601 = vpack.c.b16 %v595, %v594
      %v602 = vpack.c.b16 %v597, %v596
      %v603 = vpack.c.b16 %v599, %v598
      %v605 = vsel %vm365, %v600, 0
      %v608 = vsel %vm365, %v601, 0
      %v611 = vsel %vm365, %v602, 0
      %v614 = vsel %vm365, %v603, 0
      %v617 = vsel %vm378, %v591, 0
      %619 = vmatprep.subr.bf16.mxu0 0
      %620 = vmatpush1.bf16.msra.mxu0 %v617
      %621 = vmatprep.subr.bf16.mxu0 0
      %622 = vmatpush1.bf16.msra.mxu0 0
      %623 = vmatprep.subr.bf16.mxu0 0
      %624 = vmatpush1.bf16.msra.mxu0 0
      %625 = vmatprep.subr.bf16.mxu0 0
      %626 = vmatpush1.bf16.msra.mxu0 0
      %627 = vmatprep.subr.bf16.mxu0 0
      %628 = vmatpush1.bf16.msra.mxu0 0
      %629 = vmatprep.subr.bf16.mxu0 0
      %630 = vmatpush1.bf16.msra.mxu0 0
      %631 = vmatprep.subr.bf16.mxu0 0
      %632 = vmatpush1.bf16.msra.mxu0 0
      %633 = vmatprep.subr.bf16.mxu0 0
      %634 = vmatpush1.bf16.msra.mxu0 0
      %635 = vmatprep.subr.bf16.mxu0 0
      %636 = vmatpush1.bf16.msra.mxu0 0
      %637 = vmatprep.subr.bf16.mxu0 0
      %638 = vmatpush1.bf16.msra.mxu0 0
      %639 = vmatprep.subr.bf16.mxu0 0
      %640 = vmatpush1.bf16.msra.mxu0 0
      %641 = vmatprep.subr.bf16.mxu0 0
      %642 = vmatpush1.bf16.msra.mxu0 0
      %643 = vmatprep.subr.bf16.mxu0 0
      %644 = vmatpush1.bf16.msra.mxu0 0
      %645 = vmatprep.subr.bf16.mxu0 0
      %646 = vmatpush1.bf16.msra.mxu0 0
      %647 = vmatprep.subr.bf16.mxu0 0
      %648 = vmatpush1.bf16.msra.mxu0 0
      %649 = vmatprep.subr.bf16.mxu0 0
      %650 = vmatpush1.bf16.msra.mxu0 0
      %651 = vmatprep.mubr.bf16.mxu0 0
      %652 = vmatmul.mubr.bf16.gmra.mrb[0].mxu0 %v605
      %v653 = vpop.f32.mrb[0].mxu0
      %v654 = vadd.f32 0.0, %v653
      %v655 = vpop.f32.mrb[0].mxu0
      %v656 = vpop.f32.mrb[0].mxu0
      %v657 = vadd.f32 0.0, %v656
      %v658 = vpop.f32.mrb[0].mxu0
      %659 = vmatprep.mubr.bf16.mxu0 0
      %660 = vmatmul.mubr.bf16.gmra.mrb[0].mxu0 %v608
      %v661 = vpop.f32.mrb[0].mxu0
      %v662 = vadd.f32 0.0, %v661
      %v663 = vpop.f32.mrb[0].mxu0
      %v664 = vpop.f32.mrb[0].mxu0
      %v665 = vadd.f32 0.0, %v664
      %v666 = vpop.f32.mrb[0].mxu0
      %667 = vmatprep.mubr.bf16.mxu0 0
      %668 = vmatmul.mubr.bf16.gmra.mrb[0].mxu0 %v611
      %v669 = vpop.f32.mrb[0].mxu0
      %v670 = vadd.f32 0.0, %v669
      %v671 = vpop.f32.mrb[0].mxu0
      %v672 = vpop.f32.mrb[0].mxu0
      %v673 = vadd.f32 0.0, %v672
      %v674 = vpop.f32.mrb[0].mxu0
      %675 = vmatprep.mubr.bf16.mxu0 0
      %676 = vmatmul.mubr.bf16.gmra.mrb[0].mxu0 %v614
      %v677 = vpop.f32.mrb[0].mxu0
      %v678 = vadd.f32 0.0, %v677
      %v679 = vpop.f32.mrb[0].mxu0
      %v680 = vpop.f32.mrb[0].mxu0
      %v681 = vadd.f32 0.0, %v680
      %v682 = vpop.f32.mrb[0].mxu0
      %683 = vdwg.mxu0
      %v684 = vadd.f32 %v517, %v654
      %v685 = vadd.f32 %v520, %v657
      %v686 = vadd.f32 %v525, %v662
      %v687 = vadd.f32 %v528, %v665
      %v688 = vadd.f32 %v533, %v670
      %v689 = vadd.f32 %v536, %v673
      %v690 = vadd.f32 %v541, %v678
      %v691 = vadd.f32 %v544, %v681
      %s692 = sadd.s32 %s215, 1
      %s693 = smul.u32 %s692, 2
      %s694 = smul.addr %s693, 4
      %s695 = scalar_lea.vmem %s198, %s694
      %v696 = vld [vmem:[%s695] sm:$0xf]
      %v697 = vld [vmem:[%s695 + $0x4] sm:$0x1]
      %v698 = vld [vmem:[%s695 + $0x8] sm:$0xf]
      %v699 = vld [vmem:[%s695 + $0xc] sm:$0x1]
      %v700 = vld [vmem:[%s695 + $0x10] sm:$0xf]
      %v701 = vld [vmem:[%s695 + $0x14] sm:$0x1]
      %v702 = vld [vmem:[%s695 + $0x18] sm:$0xf]
      %v703 = vld [vmem:[%s695 + $0x1c] sm:$0x1]
      %v704 = vld [vmem:[%s695 + $0x20] sm:$0xf]
      %v705 = vld [vmem:[%s695 + $0x24] sm:$0x1]
      %v706 = vld [vmem:[%s695 + $0x28] sm:$0xf]
      %v707 = vld [vmem:[%s695 + $0x2c] sm:$0x1]
      %v708 = vld [vmem:[%s695 + $0x30] sm:$0xf]
      %v709 = vld [vmem:[%s695 + $0x34] sm:$0x1]
      %v710 = vld [vmem:[%s695 + $0x38] sm:$0xf]
      %v711 = vld [vmem:[%s695 + $0x3c] sm:$0x1]
      %s712 = scalar_lea.vmem %s203, 6
      %v713 = vld [vmem:[%s712] sm:$0x3]
      %v722 = vunpack.c.l.b16 %v696
      %v723 = vunpack.c.l.b16 %v698
      %v724 = vunpack.c.l.b16 %v700
      %v725 = vunpack.c.l.b16 %v702
      %v726 = vunpack.c.l.b16 %v704
      %v727 = vunpack.c.l.b16 %v706
      %v728 = vunpack.c.l.b16 %v708
      %v729 = vunpack.c.l.b16 %v710
      %v730 = vpack.c.b16 %v723, %v722
      %v731 = vpack.c.b16 %v725, %v724
      %v732 = vpack.c.b16 %v727, %v726
      %v733 = vpack.c.b16 %v729, %v728
      %v735 = vsel %vm365, %v730, 0
      %v738 = vsel %vm365, %v731, 0
      %v741 = vsel %vm365, %v732, 0
      %v744 = vsel %vm365, %v733, 0
      %v747 = vsel %vm378, %v713, 0
      %749 = vmatprep.subr.bf16.mxu0 0
      %750 = vmatpush1.bf16.msra.mxu0 %v747
      %751 = vmatprep.subr.bf16.mxu0 0
      %752 = vmatpush1.bf16.msra.mxu0 0
      %753 = vmatprep.subr.bf16.mxu0 0
      %754 = vmatpush1.bf16.msra.mxu0 0
      %755 = vmatprep.subr.bf16.mxu0 0
      %756 = vmatpush1.bf16.msra.mxu0 0
      %757 = vmatprep.subr.bf16.mxu0 0
      %758 = vmatpush1.bf16.msra.mxu0 0
      %759 = vmatprep.subr.bf16.mxu0 0
      %760 = vmatpush1.bf16.msra.mxu0 0
      %761 = vmatprep.subr.bf16.mxu0 0
      %762 = vmatpush1.bf16.msra.mxu0 0
      %763 = vmatprep.subr.bf16.mxu0 0
      %764 = vmatpush1.bf16.msra.mxu0 0
      %765 = vmatprep.subr.bf16.mxu0 0
      %766 = vmatpush1.bf16.msra.mxu0 0
      %767 = vmatprep.subr.bf16.mxu0 0
      %768 = vmatpush1.bf16.msra.mxu0 0
      %769 = vmatprep.subr.bf16.mxu0 0
      %770 = vmatpush1.bf16.msra.mxu0 0
      %771 = vmatprep.subr.bf16.mxu0 0
      %772 = vmatpush1.bf16.msra.mxu0 0
      %773 = vmatprep.subr.bf16.mxu0 0
      %774 = vmatpush1.bf16.msra.mxu0 0
      %775 = vmatprep.subr.bf16.mxu0 0
      %776 = vmatpush1.bf16.msra.mxu0 0
      %777 = vmatprep.subr.bf16.mxu0 0
      %778 = vmatpush1.bf16.msra.mxu0 0
      %779 = vmatprep.subr.bf16.mxu0 0
      %780 = vmatpush1.bf16.msra.mxu0 0
      %781 = vmatprep.mubr.bf16.mxu0 0
      %782 = vmatmul.mubr.bf16.gmra.mrb[0].mxu0 %v735
      %v783 = vpop.f32.mrb[0].mxu0
      %v784 = vadd.f32 0.0, %v783
      %v785 = vpop.f32.mrb[0].mxu0
      %v786 = vpop.f32.mrb[0].mxu0
      %v787 = vadd.f32 0.0, %v786
      %v788 = vpop.f32.mrb[0].mxu0
      %789 = vmatprep.mubr.bf16.mxu0 0
      %790 = vmatmul.mubr.bf16.gmra.mrb[0].mxu0 %v738
      %v791 = vpop.f32.mrb[0].mxu0
      %v792 = vadd.f32 0.0, %v791
      %v793 = vpop.f32.mrb[0].mxu0
      %v794 = vpop.f32.mrb[0].mxu0
      %v795 = vadd.f32 0.0, %v794
      %v796 = vpop.f32.mrb[0].mxu0
      %797 = vmatprep.mubr.bf16.mxu0 0
      %798 = vmatmul.mubr.bf16.gmra.mrb[0].mxu0 %v741
      %v799 = vpop.f32.mrb[0].mxu0
      %v800 = vadd.f32 0.0, %v799
      %v801 = vpop.f32.mrb[0].mxu0
      %v802 = vpop.f32.mrb[0].mxu0
      %v803 = vadd.f32 0.0, %v802
      %v804 = vpop.f32.mrb[0].mxu0
      %805 = vmatprep.mubr.bf16.mxu0 0
      %806 = vmatmul.mubr.bf16.gmra.mrb[0].mxu0 %v744
      %v807 = vpop.f32.mrb[0].mxu0
      %v808 = vadd.f32 0.0, %v807
      %v809 = vpop.f32.mrb[0].mxu0
      %v810 = vpop.f32.mrb[0].mxu0
      %v811 = vadd.f32 0.0, %v810
      %v812 = vpop.f32.mrb[0].mxu0
      %813 = vdwg.mxu0
      %v814 = vadd.f32 %v684, %v784
      %v815 = vadd.f32 %v685, %v787
      %v816 = vadd.f32 %v686, %v792
      %v817 = vadd.f32 %v687, %v795
      %v818 = vadd.f32 %v688, %v800
      %v819 = vadd.f32 %v689, %v803
      %v820 = vadd.f32 %v690, %v808
      %v821 = vadd.f32 %v691, %v811
      %v823 = vshrl.u32 %v696, 16
      %v825 = vrot.slane %v823, 4
      %v826 = vshll.u32 %v696, 16
      %v828 = vrot.slane %v826, 5
      %v829 = vor.u32 %v825, %v828
      %v830 = vrot.slane %v829, 4
      %v832 = vshll.u32 %v697, 16
      %v834 = vrot.slane %v832, 5
      %v835 = vsel %vm238, %v830, %v834
      %v837 = vshrl.u32 %v698, 16
      %v839 = vrot.slane %v837, 4
      %v840 = vshll.u32 %v698, 16
      %v842 = vrot.slane %v840, 5
      %v843 = vor.u32 %v839, %v842
      %v844 = vrot.slane %v843, 4
      %v846 = vshll.u32 %v699, 16
      %v848 = vrot.slane %v846, 5
      %v849 = vsel %vm238, %v844, %v848
      %v851 = vshrl.u32 %v700, 16
      %v853 = vrot.slane %v851, 4
      %v854 = vshll.u32 %v700, 16
      %v856 = vrot.slane %v854, 5
      %v857 = vor.u32 %v853, %v856
      %v858 = vrot.slane %v857, 4
      %v860 = vshll.u32 %v701, 16
      %v862 = vrot.slane %v860, 5
      %v863 = vsel %vm238, %v858, %v862
      %v865 = vshrl.u32 %v702, 16
      %v867 = vrot.slane %v865, 4
      %v868 = vshll.u32 %v702, 16
      %v870 = vrot.slane %v868, 5
      %v871 = vor.u32 %v867, %v870
      %v872 = vrot.slane %v871, 4
      %v874 = vshll.u32 %v703, 16
      %v876 = vrot.slane %v874, 5
      %v877 = vsel %vm238, %v872, %v876
      %v879 = vshrl.u32 %v704, 16
      %v881 = vrot.slane %v879, 4
      %v882 = vshll.u32 %v704, 16
      %v884 = vrot.slane %v882, 5
      %v885 = vor.u32 %v881, %v884
      %v886 = vrot.slane %v885, 4
      %v888 = vshll.u32 %v705, 16
      %v890 = vrot.slane %v888, 5
      %v891 = vsel %vm238, %v886, %v890
      %v893 = vshrl.u32 %v706, 16
      %v895 = vrot.slane %v893, 4
      %v896 = vshll.u32 %v706, 16
      %v898 = vrot.slane %v896, 5
      %v899 = vor.u32 %v895, %v898
      %v900 = vrot.slane %v899, 4
      %v902 = vshll.u32 %v707, 16
      %v904 = vrot.slane %v902, 5
      %v905 = vsel %vm238, %v900, %v904
      %v907 = vshrl.u32 %v708, 16
      %v909 = vrot.slane %v907, 4
      %v910 = vshll.u32 %v708, 16
      %v912 = vrot.slane %v910, 5
      %v913 = vor.u32 %v909, %v912
      %v914 = vrot.slane %v913, 4
      %v916 = vshll.u32 %v709, 16
      %v918 = vrot.slane %v916, 5
      %v919 = vsel %vm238, %v914, %v918
      %v921 = vshrl.u32 %v710, 16
      %v923 = vrot.slane %v921, 4
      %v924 = vshll.u32 %v710, 16
      %v926 = vrot.slane %v924, 5
      %v927 = vor.u32 %v923, %v926
      %v928 = vrot.slane %v927, 4
      %v930 = vshll.u32 %v711, 16
      %v932 = vrot.slane %v930, 5
      %v933 = vsel %vm238, %v928, %v932
      %s934 = scalar_lea.vmem %s203, 8
      %v935 = vld [vmem:[%s934] sm:$0x3]
      %v936 = vunpack.c.l.b16 %v835
      %v937 = vunpack.c.l.b16 %v849
      %v938 = vunpack.c.l.b16 %v863
      %v939 = vunpack.c.l.b16 %v877
      %v940 = vunpack.c.l.b16 %v891
      %v941 = vunpack.c.l.b16 %v905
      %v942 = vunpack.c.l.b16 %v919
      %v943 = vunpack.c.l.b16 %v933
      %v944 = vpack.c.b16 %v937, %v936
      %v945 = vpack.c.b16 %v939, %v938
      %v946 = vpack.c.b16 %v941, %v940
      %v947 = vpack.c.b16 %v943, %v942
      %v949 = vsel %vm365, %v944, 0
      %v952 = vsel %vm365, %v945, 0
      %v955 = vsel %vm365, %v946, 0
      %v958 = vsel %vm365, %v947, 0
      %v961 = vsel %vm378, %v935, 0
      %963 = vmatprep.subr.bf16.mxu0 0
      %964 = vmatpush1.bf16.msra.mxu0 %v961
      %965 = vmatprep.subr.bf16.mxu0 0
      %966 = vmatpush1.bf16.msra.mxu0 0
      %967 = vmatprep.subr.bf16.mxu0 0
      %968 = vmatpush1.bf16.msra.mxu0 0
      %969 = vmatprep.subr.bf16.mxu0 0
      %970 = vmatpush1.bf16.msra.mxu0 0
      %971 = vmatprep.subr.bf16.mxu0 0
      %972 = vmatpush1.bf16.msra.mxu0 0
      %973 = vmatprep.subr.bf16.mxu0 0
      %974 = vmatpush1.bf16.msra.mxu0 0
      %975 = vmatprep.subr.bf16.mxu0 0
      %976 = vmatpush1.bf16.msra.mxu0 0
      %977 = vmatprep.subr.bf16.mxu0 0
      %978 = vmatpush1.bf16.msra.mxu0 0
      %979 = vmatprep.subr.bf16.mxu0 0
      %980 = vmatpush1.bf16.msra.mxu0 0
      %981 = vmatprep.subr.bf16.mxu0 0
      %982 = vmatpush1.bf16.msra.mxu0 0
      %983 = vmatprep.subr.bf16.mxu0 0
      %984 = vmatpush1.bf16.msra.mxu0 0
      %985 = vmatprep.subr.bf16.mxu0 0
      %986 = vmatpush1.bf16.msra.mxu0 0
      %987 = vmatprep.subr.bf16.mxu0 0
      %988 = vmatpush1.bf16.msra.mxu0 0
      %989 = vmatprep.subr.bf16.mxu0 0
      %990 = vmatpush1.bf16.msra.mxu0 0
      %991 = vmatprep.subr.bf16.mxu0 0
      %992 = vmatpush1.bf16.msra.mxu0 0
      %993 = vmatprep.subr.bf16.mxu0 0
      %994 = vmatpush1.bf16.msra.mxu0 0
      %995 = vmatprep.mubr.bf16.mxu0 0
      %996 = vmatmul.mubr.bf16.gmra.mrb[0].mxu0 %v949
      %v997 = vpop.f32.mrb[0].mxu0
      %v998 = vadd.f32 0.0, %v997
      %v999 = vpop.f32.mrb[0].mxu0
      %v1000 = vpop.f32.mrb[0].mxu0
      %v1001 = vadd.f32 0.0, %v1000
      %v1002 = vpop.f32.mrb[0].mxu0
      %1003 = vmatprep.mubr.bf16.mxu0 0
      %1004 = vmatmul.mubr.bf16.gmra.mrb[0].mxu0 %v952
      %v1005 = vpop.f32.mrb[0].mxu0
      %v1006 = vadd.f32 0.0, %v1005
      %v1007 = vpop.f32.mrb[0].mxu0
      %v1008 = vpop.f32.mrb[0].mxu0
      %v1009 = vadd.f32 0.0, %v1008
      %v1010 = vpop.f32.mrb[0].mxu0
      %1011 = vmatprep.mubr.bf16.mxu0 0
      %1012 = vmatmul.mubr.bf16.gmra.mrb[0].mxu0 %v955
      %v1013 = vpop.f32.mrb[0].mxu0
      %v1014 = vadd.f32 0.0, %v1013
      %v1015 = vpop.f32.mrb[0].mxu0
      %v1016 = vpop.f32.mrb[0].mxu0
      %v1017 = vadd.f32 0.0, %v1016
      %v1018 = vpop.f32.mrb[0].mxu0
      %1019 = vmatprep.mubr.bf16.mxu0 0
      %1020 = vmatmul.mubr.bf16.gmra.mrb[0].mxu0 %v958
      %v1021 = vpop.f32.mrb[0].mxu0
      %v1022 = vadd.f32 0.0, %v1021
      %v1023 = vpop.f32.mrb[0].mxu0
      %v1024 = vpop.f32.mrb[0].mxu0
      %v1025 = vadd.f32 0.0, %v1024
      %v1026 = vpop.f32.mrb[0].mxu0
      %1027 = vdwg.mxu0
      %v1028 = vadd.f32 %v814, %v998
      %v1029 = vadd.f32 %v815, %v1001
      %v1030 = vadd.f32 %v816, %v1006
      %v1031 = vadd.f32 %v817, %v1009
      %v1032 = vadd.f32 %v818, %v1014
      %v1033 = vadd.f32 %v819, %v1017
      %v1034 = vadd.f32 %v820, %v1022
      %v1035 = vadd.f32 %v821, %v1025
      %v1044 = vrot.slane %v696, 5
      %v1045 = vrot.slane %v1044, 4
      %v1046 = vrot.slane %v697, 5
      %v1047 = vsel %vm557, %v1045, %v1046
      %v1048 = vrot.slane %v698, 5
      %v1049 = vrot.slane %v1048, 4
      %v1050 = vrot.slane %v699, 5
      %v1051 = vsel %vm557, %v1049, %v1050
      %v1052 = vrot.slane %v700, 5
      %v1053 = vrot.slane %v1052, 4
      %v1054 = vrot.slane %v701, 5
      %v1055 = vsel %vm557, %v1053, %v1054
      %v1056 = vrot.slane %v702, 5
      %v1057 = vrot.slane %v1056, 4
      %v1058 = vrot.slane %v703, 5
      %v1059 = vsel %vm557, %v1057, %v1058
      %v1060 = vrot.slane %v704, 5
      %v1061 = vrot.slane %v1060, 4
      %v1062 = vrot.slane %v705, 5
      %v1063 = vsel %vm557, %v1061, %v1062
      %v1064 = vrot.slane %v706, 5
      %v1065 = vrot.slane %v1064, 4
      %v1066 = vrot.slane %v707, 5
      %v1067 = vsel %vm557, %v1065, %v1066
      %v1068 = vrot.slane %v708, 5
      %v1069 = vrot.slane %v1068, 4
      %v1070 = vrot.slane %v709, 5
      %v1071 = vsel %vm557, %v1069, %v1070
      %v1072 = vrot.slane %v710, 5
      %v1073 = vrot.slane %v1072, 4
      %v1074 = vrot.slane %v711, 5
      %v1075 = vsel %vm557, %v1073, %v1074
      %s1076 = scalar_lea.vmem %s203, 10
      %v1077 = vld [vmem:[%s1076] sm:$0x3]
      %v1078 = vunpack.c.l.b16 %v1047
      %v1079 = vunpack.c.l.b16 %v1051
      %v1080 = vunpack.c.l.b16 %v1055
      %v1081 = vunpack.c.l.b16 %v1059
      %v1082 = vunpack.c.l.b16 %v1063
      %v1083 = vunpack.c.l.b16 %v1067
      %v1084 = vunpack.c.l.b16 %v1071
      %v1085 = vunpack.c.l.b16 %v1075
      %v1086 = vpack.c.b16 %v1079, %v1078
      %v1087 = vpack.c.b16 %v1081, %v1080
      %v1088 = vpack.c.b16 %v1083, %v1082
      %v1089 = vpack.c.b16 %v1085, %v1084
      %v1091 = vsel %vm365, %v1086, 0
      %v1094 = vsel %vm365, %v1087, 0
      %v1097 = vsel %vm365, %v1088, 0
      %v1100 = vsel %vm365, %v1089, 0
      %v1103 = vsel %vm378, %v1077, 0
      %1105 = vmatprep.subr.bf16.mxu0 0
      %1106 = vmatpush1.bf16.msra.mxu0 %v1103
      %1107 = vmatprep.subr.bf16.mxu0 0
      %1108 = vmatpush1.bf16.msra.mxu0 0
      %1109 = vmatprep.subr.bf16.mxu0 0
      %1110 = vmatpush1.bf16.msra.mxu0 0
      %1111 = vmatprep.subr.bf16.mxu0 0
      %1112 = vmatpush1.bf16.msra.mxu0 0
      %1113 = vmatprep.subr.bf16.mxu0 0
      %1114 = vmatpush1.bf16.msra.mxu0 0
      %1115 = vmatprep.subr.bf16.mxu0 0
      %1116 = vmatpush1.bf16.msra.mxu0 0
      %1117 = vmatprep.subr.bf16.mxu0 0
      %1118 = vmatpush1.bf16.msra.mxu0 0
      %1119 = vmatprep.subr.bf16.mxu0 0
      %1120 = vmatpush1.bf16.msra.mxu0 0
      %1121 = vmatprep.subr.bf16.mxu0 0
      %1122 = vmatpush1.bf16.msra.mxu0 0
      %1123 = vmatprep.subr.bf16.mxu0 0
      %1124 = vmatpush1.bf16.msra.mxu0 0
      %1125 = vmatprep.subr.bf16.mxu0 0
      %1126 = vmatpush1.bf16.msra.mxu0 0
      %1127 = vmatprep.subr.bf16.mxu0 0
      %1128 = vmatpush1.bf16.msra.mxu0 0
      %1129 = vmatprep.subr.bf16.mxu0 0
      %1130 = vmatpush1.bf16.msra.mxu0 0
      %1131 = vmatprep.subr.bf16.mxu0 0
      %1132 = vmatpush1.bf16.msra.mxu0 0
      %1133 = vmatprep.subr.bf16.mxu0 0
      %1134 = vmatpush1.bf16.msra.mxu0 0
      %1135 = vmatprep.subr.bf16.mxu0 0
      %1136 = vmatpush1.bf16.msra.mxu0 0
      %1137 = vmatprep.mubr.bf16.mxu0 0
      %1138 = vmatmul.mubr.bf16.gmra.mrb[0].mxu0 %v1091
      %v1139 = vpop.f32.mrb[0].mxu0
      %v1140 = vadd.f32 0.0, %v1139
      %v1141 = vpop.f32.mrb[0].mxu0
      %v1142 = vpop.f32.mrb[0].mxu0
      %v1143 = vadd.f32 0.0, %v1142
      %v1144 = vpop.f32.mrb[0].mxu0
      %1145 = vmatprep.mubr.bf16.mxu0 0
      %1146 = vmatmul.mubr.bf16.gmra.mrb[0].mxu0 %v1094
      %v1147 = vpop.f32.mrb[0].mxu0
      %v1148 = vadd.f32 0.0, %v1147
      %v1149 = vpop.f32.mrb[0].mxu0
      %v1150 = vpop.f32.mrb[0].mxu0
      %v1151 = vadd.f32 0.0, %v1150
      %v1152 = vpop.f32.mrb[0].mxu0
      %1153 = vmatprep.mubr.bf16.mxu0 0
      %1154 = vmatmul.mubr.bf16.gmra.mrb[0].mxu0 %v1097
      %v1155 = vpop.f32.mrb[0].mxu0
      %v1156 = vadd.f32 0.0, %v1155
      %v1157 = vpop.f32.mrb[0].mxu0
      %v1158 = vpop.f32.mrb[0].mxu0
      %v1159 = vadd.f32 0.0, %v1158
      %v1160 = vpop.f32.mrb[0].mxu0
      %1161 = vmatprep.mubr.bf16.mxu0 0
      %1162 = vmatmul.mubr.bf16.gmra.mrb[0].mxu0 %v1100
      %v1163 = vpop.f32.mrb[0].mxu0
      %v1164 = vadd.f32 0.0, %v1163
      %v1165 = vpop.f32.mrb[0].mxu0
      %v1166 = vpop.f32.mrb[0].mxu0
      %v1167 = vadd.f32 0.0, %v1166
      %v1168 = vpop.f32.mrb[0].mxu0
      %1169 = vdwg.mxu0
      %v1170 = vadd.f32 %v1028, %v1140
      %v1171 = vadd.f32 %v1029, %v1143
      %v1172 = vadd.f32 %v1030, %v1148
      %v1173 = vadd.f32 %v1031, %v1151
      %v1174 = vadd.f32 %v1032, %v1156
      %v1175 = vadd.f32 %v1033, %v1159
      %v1176 = vadd.f32 %v1034, %v1164
      %v1177 = vadd.f32 %v1035, %v1167
      %s1178 = sadd.s32 %s215, 2
      %s1179 = smul.u32 %s1178, 2
      %s1180 = smul.addr %s1179, 4
      %s1181 = scalar_lea.vmem %s198, %s1180
      %v1182 = vld [vmem:[%s1181] sm:$0xf]
      %v1183 = vld [vmem:[%s1181 + $0x4] sm:$0x1]
      %v1184 = vld [vmem:[%s1181 + $0x8] sm:$0xf]
      %v1185 = vld [vmem:[%s1181 + $0xc] sm:$0x1]
      %v1186 = vld [vmem:[%s1181 + $0x10] sm:$0xf]
      %v1187 = vld [vmem:[%s1181 + $0x14] sm:$0x1]
      %v1188 = vld [vmem:[%s1181 + $0x18] sm:$0xf]
      %v1189 = vld [vmem:[%s1181 + $0x1c] sm:$0x1]
      %v1190 = vld [vmem:[%s1181 + $0x20] sm:$0xf]
      %v1191 = vld [vmem:[%s1181 + $0x24] sm:$0x1]
      %v1192 = vld [vmem:[%s1181 + $0x28] sm:$0xf]
      %v1193 = vld [vmem:[%s1181 + $0x2c] sm:$0x1]
      %v1194 = vld [vmem:[%s1181 + $0x30] sm:$0xf]
      %v1195 = vld [vmem:[%s1181 + $0x34] sm:$0x1]
      %v1196 = vld [vmem:[%s1181 + $0x38] sm:$0xf]
      %v1197 = vld [vmem:[%s1181 + $0x3c] sm:$0x1]
      %s1198 = scalar_lea.vmem %s203, 12
      %v1199 = vld [vmem:[%s1198] sm:$0x3]
      %v1208 = vunpack.c.l.b16 %v1182
      %v1209 = vunpack.c.l.b16 %v1184
      %v1210 = vunpack.c.l.b16 %v1186
      %v1211 = vunpack.c.l.b16 %v1188
      %v1212 = vunpack.c.l.b16 %v1190
      %v1213 = vunpack.c.l.b16 %v1192
      %v1214 = vunpack.c.l.b16 %v1194
      %v1215 = vunpack.c.l.b16 %v1196
      %v1216 = vpack.c.b16 %v1209, %v1208
      %v1217 = vpack.c.b16 %v1211, %v1210
      %v1218 = vpack.c.b16 %v1213, %v1212
      %v1219 = vpack.c.b16 %v1215, %v1214
      %v1221 = vsel %vm365, %v1216, 0
      %v1224 = vsel %vm365, %v1217, 0
      %v1227 = vsel %vm365, %v1218, 0
      %v1230 = vsel %vm365, %v1219, 0
      %v1233 = vsel %vm378, %v1199, 0
      %1235 = vmatprep.subr.bf16.mxu0 0
      %1236 = vmatpush1.bf16.msra.mxu0 %v1233
      %1237 = vmatprep.subr.bf16.mxu0 0
      %1238 = vmatpush1.bf16.msra.mxu0 0
      %1239 = vmatprep.subr.bf16.mxu0 0
      %1240 = vmatpush1.bf16.msra.mxu0 0
      %1241 = vmatprep.subr.bf16.mxu0 0
      %1242 = vmatpush1.bf16.msra.mxu0 0
      %1243 = vmatprep.subr.bf16.mxu0 0
      %1244 = vmatpush1.bf16.msra.mxu0 0
      %1245 = vmatprep.subr.bf16.mxu0 0
      %1246 = vmatpush1.bf16.msra.mxu0 0
      %1247 = vmatprep.subr.bf16.mxu0 0
      %1248 = vmatpush1.bf16.msra.mxu0 0
      %1249 = vmatprep.subr.bf16.mxu0 0
      %1250 = vmatpush1.bf16.msra.mxu0 0
      %1251 = vmatprep.subr.bf16.mxu0 0
      %1252 = vmatpush1.bf16.msra.mxu0 0
      %1253 = vmatprep.subr.bf16.mxu0 0
      %1254 = vmatpush1.bf16.msra.mxu0 0
      %1255 = vmatprep.subr.bf16.mxu0 0
      %1256 = vmatpush1.bf16.msra.mxu0 0
      %1257 = vmatprep.subr.bf16.mxu0 0
      %1258 = vmatpush1.bf16.msra.mxu0 0
      %1259 = vmatprep.subr.bf16.mxu0 0
      %1260 = vmatpush1.bf16.msra.mxu0 0
      %1261 = vmatprep.subr.bf16.mxu0 0
      %1262 = vmatpush1.bf16.msra.mxu0 0
      %1263 = vmatprep.subr.bf16.mxu0 0
      %1264 = vmatpush1.bf16.msra.mxu0 0
      %1265 = vmatprep.subr.bf16.mxu0 0
      %1266 = vmatpush1.bf16.msra.mxu0 0
      %1267 = vmatprep.mubr.bf16.mxu0 0
      %1268 = vmatmul.mubr.bf16.gmra.mrb[0].mxu0 %v1221
      %v1269 = vpop.f32.mrb[0].mxu0
      %v1270 = vadd.f32 0.0, %v1269
      %v1271 = vpop.f32.mrb[0].mxu0
      %v1272 = vpop.f32.mrb[0].mxu0
      %v1273 = vadd.f32 0.0, %v1272
      %v1274 = vpop.f32.mrb[0].mxu0
      %1275 = vmatprep.mubr.bf16.mxu0 0
      %1276 = vmatmul.mubr.bf16.gmra.mrb[0].mxu0 %v1224
      %v1277 = vpop.f32.mrb[0].mxu0
      %v1278 = vadd.f32 0.0, %v1277
      %v1279 = vpop.f32.mrb[0].mxu0
      %v1280 = vpop.f32.mrb[0].mxu0
      %v1281 = vadd.f32 0.0, %v1280
      %v1282 = vpop.f32.mrb[0].mxu0
      %1283 = vmatprep.mubr.bf16.mxu0 0
      %1284 = vmatmul.mubr.bf16.gmra.mrb[0].mxu0 %v1227
      %v1285 = vpop.f32.mrb[0].mxu0
      %v1286 = vadd.f32 0.0, %v1285
      %v1287 = vpop.f32.mrb[0].mxu0
      %v1288 = vpop.f32.mrb[0].mxu0
      %v1289 = vadd.f32 0.0, %v1288
      %v1290 = vpop.f32.mrb[0].mxu0
      %1291 = vmatprep.mubr.bf16.mxu0 0
      %1292 = vmatmul.mubr.bf16.gmra.mrb[0].mxu0 %v1230
      %v1293 = vpop.f32.mrb[0].mxu0
      %v1294 = vadd.f32 0.0, %v1293
      %v1295 = vpop.f32.mrb[0].mxu0
      %v1296 = vpop.f32.mrb[0].mxu0
      %v1297 = vadd.f32 0.0, %v1296
      %v1298 = vpop.f32.mrb[0].mxu0
      %1299 = vdwg.mxu0
      %v1300 = vadd.f32 %v1170, %v1270
      %v1301 = vadd.f32 %v1171, %v1273
      %v1302 = vadd.f32 %v1172, %v1278
      %v1303 = vadd.f32 %v1173, %v1281
      %v1304 = vadd.f32 %v1174, %v1286
      %v1305 = vadd.f32 %v1175, %v1289
      %v1306 = vadd.f32 %v1176, %v1294
      %v1307 = vadd.f32 %v1177, %v1297
      %v1309 = vshrl.u32 %v1182, 16
      %v1311 = vrot.slane %v1309, 4
      %v1312 = vshll.u32 %v1182, 16
      %v1314 = vrot.slane %v1312, 5
      %v1315 = vor.u32 %v1311, %v1314
      %v1316 = vrot.slane %v1315, 4
      %v1318 = vshll.u32 %v1183, 16
      %v1320 = vrot.slane %v1318, 5
      %v1321 = vsel %vm238, %v1316, %v1320
      %v1323 = vshrl.u32 %v1184, 16
      %v1325 = vrot.slane %v1323, 4
      %v1326 = vshll.u32 %v1184, 16
      %v1328 = vrot.slane %v1326, 5
      %v1329 = vor.u32 %v1325, %v1328
      %v1330 = vrot.slane %v1329, 4
      %v1332 = vshll.u32 %v1185, 16
      %v1334 = vrot.slane %v1332, 5
      %v1335 = vsel %vm238, %v1330, %v1334
      %v1337 = vshrl.u32 %v1186, 16
      %v1339 = vrot.slane %v1337, 4
      %v1340 = vshll.u32 %v1186, 16
      %v1342 = vrot.slane %v1340, 5
      %v1343 = vor.u32 %v1339, %v1342
      %v1344 = vrot.slane %v1343, 4
      %v1346 = vshll.u32 %v1187, 16
      %v1348 = vrot.slane %v1346, 5
      %v1349 = vsel %vm238, %v1344, %v1348
      %v1351 = vshrl.u32 %v1188, 16
      %v1353 = vrot.slane %v1351, 4
      %v1354 = vshll.u32 %v1188, 16
      %v1356 = vrot.slane %v1354, 5
      %v1357 = vor.u32 %v1353, %v1356
      %v1358 = vrot.slane %v1357, 4
      %v1360 = vshll.u32 %v1189, 16
      %v1362 = vrot.slane %v1360, 5
      %v1363 = vsel %vm238, %v1358, %v1362
      %v1365 = vshrl.u32 %v1190, 16
      %v1367 = vrot.slane %v1365, 4
      %v1368 = vshll.u32 %v1190, 16
      %v1370 = vrot.slane %v1368, 5
      %v1371 = vor.u32 %v1367, %v1370
      %v1372 = vrot.slane %v1371, 4
      %v1374 = vshll.u32 %v1191, 16
      %v1376 = vrot.slane %v1374, 5
      %v1377 = vsel %vm238, %v1372, %v1376
      %v1379 = vshrl.u32 %v1192, 16
      %v1381 = vrot.slane %v1379, 4
      %v1382 = vshll.u32 %v1192, 16
      %v1384 = vrot.slane %v1382, 5
      %v1385 = vor.u32 %v1381, %v1384
      %v1386 = vrot.slane %v1385, 4
      %v1388 = vshll.u32 %v1193, 16
      %v1390 = vrot.slane %v1388, 5
      %v1391 = vsel %vm238, %v1386, %v1390
      %v1393 = vshrl.u32 %v1194, 16
      %v1395 = vrot.slane %v1393, 4
      %v1396 = vshll.u32 %v1194, 16
      %v1398 = vrot.slane %v1396, 5
      %v1399 = vor.u32 %v1395, %v1398
      %v1400 = vrot.slane %v1399, 4
      %v1402 = vshll.u32 %v1195, 16
      %v1404 = vrot.slane %v1402, 5
      %v1405 = vsel %vm238, %v1400, %v1404
      %v1407 = vshrl.u32 %v1196, 16
      %v1409 = vrot.slane %v1407, 4
      %v1410 = vshll.u32 %v1196, 16
      %v1412 = vrot.slane %v1410, 5
      %v1413 = vor.u32 %v1409, %v1412
      %v1414 = vrot.slane %v1413, 4
      %v1416 = vshll.u32 %v1197, 16
      %v1418 = vrot.slane %v1416, 5
      %v1419 = vsel %vm238, %v1414, %v1418
      %s1420 = scalar_lea.vmem %s203, 14
      %v1421 = vld [vmem:[%s1420] sm:$0x3]
      %v1422 = vunpack.c.l.b16 %v1321
      %v1423 = vunpack.c.l.b16 %v1335
      %v1424 = vunpack.c.l.b16 %v1349
      %v1425 = vunpack.c.l.b16 %v1363
      %v1426 = vunpack.c.l.b16 %v1377
      %v1427 = vunpack.c.l.b16 %v1391
      %v1428 = vunpack.c.l.b16 %v1405
      %v1429 = vunpack.c.l.b16 %v1419
      %v1430 = vpack.c.b16 %v1423, %v1422
      %v1431 = vpack.c.b16 %v1425, %v1424
      %v1432 = vpack.c.b16 %v1427, %v1426
      %v1433 = vpack.c.b16 %v1429, %v1428
      %v1435 = vsel %vm365, %v1430, 0
      %v1438 = vsel %vm365, %v1431, 0
      %v1441 = vsel %vm365, %v1432, 0
      %v1444 = vsel %vm365, %v1433, 0
      %v1447 = vsel %vm378, %v1421, 0
      %1449 = vmatprep.subr.bf16.mxu0 0
      %1450 = vmatpush1.bf16.msra.mxu0 %v1447
      %1451 = vmatprep.subr.bf16.mxu0 0
      %1452 = vmatpush1.bf16.msra.mxu0 0
      %1453 = vmatprep.subr.bf16.mxu0 0
      %1454 = vmatpush1.bf16.msra.mxu0 0
      %1455 = vmatprep.subr.bf16.mxu0 0
      %1456 = vmatpush1.bf16.msra.mxu0 0
      %1457 = vmatprep.subr.bf16.mxu0 0
      %1458 = vmatpush1.bf16.msra.mxu0 0
      %1459 = vmatprep.subr.bf16.mxu0 0
      %1460 = vmatpush1.bf16.msra.mxu0 0
      %1461 = vmatprep.subr.bf16.mxu0 0
      %1462 = vmatpush1.bf16.msra.mxu0 0
      %1463 = vmatprep.subr.bf16.mxu0 0
      %1464 = vmatpush1.bf16.msra.mxu0 0
      %1465 = vmatprep.subr.bf16.mxu0 0
      %1466 = vmatpush1.bf16.msra.mxu0 0
      %1467 = vmatprep.subr.bf16.mxu0 0
      %1468 = vmatpush1.bf16.msra.mxu0 0
      %1469 = vmatprep.subr.bf16.mxu0 0
      %1470 = vmatpush1.bf16.msra.mxu0 0
      %1471 = vmatprep.subr.bf16.mxu0 0
      %1472 = vmatpush1.bf16.msra.mxu0 0
      %1473 = vmatprep.subr.bf16.mxu0 0
      %1474 = vmatpush1.bf16.msra.mxu0 0
      %1475 = vmatprep.subr.bf16.mxu0 0
      %1476 = vmatpush1.bf16.msra.mxu0 0
      %1477 = vmatprep.subr.bf16.mxu0 0
      %1478 = vmatpush1.bf16.msra.mxu0 0
      %1479 = vmatprep.subr.bf16.mxu0 0
      %1480 = vmatpush1.bf16.msra.mxu0 0
      %1481 = vmatprep.mubr.bf16.mxu0 0
      %1482 = vmatmul.mubr.bf16.gmra.mrb[0].mxu0 %v1435
      %v1483 = vpop.f32.mrb[0].mxu0
      %v1484 = vadd.f32 0.0, %v1483
      %v1485 = vpop.f32.mrb[0].mxu0
      %v1486 = vpop.f32.mrb[0].mxu0
      %v1487 = vadd.f32 0.0, %v1486
      %v1488 = vpop.f32.mrb[0].mxu0
      %1489 = vmatprep.mubr.bf16.mxu0 0
      %1490 = vmatmul.mubr.bf16.gmra.mrb[0].mxu0 %v1438
      %v1491 = vpop.f32.mrb[0].mxu0
      %v1492 = vadd.f32 0.0, %v1491
      %v1493 = vpop.f32.mrb[0].mxu0
      %v1494 = vpop.f32.mrb[0].mxu0
      %v1495 = vadd.f32 0.0, %v1494
      %v1496 = vpop.f32.mrb[0].mxu0
      %1497 = vmatprep.mubr.bf16.mxu0 0
      %1498 = vmatmul.mubr.bf16.gmra.mrb[0].mxu0 %v1441
      %v1499 = vpop.f32.mrb[0].mxu0
      %v1500 = vadd.f32 0.0, %v1499
      %v1501 = vpop.f32.mrb[0].mxu0
      %v1502 = vpop.f32.mrb[0].mxu0
      %v1503 = vadd.f32 0.0, %v1502
      %v1504 = vpop.f32.mrb[0].mxu0
      %1505 = vmatprep.mubr.bf16.mxu0 0
      %1506 = vmatmul.mubr.bf16.gmra.mrb[0].mxu0 %v1444
      %v1507 = vpop.f32.mrb[0].mxu0
      %v1508 = vadd.f32 0.0, %v1507
      %v1509 = vpop.f32.mrb[0].mxu0
      %v1510 = vpop.f32.mrb[0].mxu0
      %v1511 = vadd.f32 0.0, %v1510
      %v1512 = vpop.f32.mrb[0].mxu0
      %1513 = vdwg.mxu0
      %v1514 = vadd.f32 %v1300, %v1484
      %v1515 = vadd.f32 %v1301, %v1487
      %v1516 = vadd.f32 %v1302, %v1492
      %v1517 = vadd.f32 %v1303, %v1495
      %v1518 = vadd.f32 %v1304, %v1500
      %v1519 = vadd.f32 %v1305, %v1503
      %v1520 = vadd.f32 %v1306, %v1508
      %v1521 = vadd.f32 %v1307, %v1511
      %v1530 = vrot.slane %v1182, 5
      %v1531 = vrot.slane %v1530, 4
      %v1532 = vrot.slane %v1183, 5
      %v1533 = vsel %vm557, %v1531, %v1532
      %v1534 = vrot.slane %v1184, 5
      %v1535 = vrot.slane %v1534, 4
      %v1536 = vrot.slane %v1185, 5
      %v1537 = vsel %vm557, %v1535, %v1536
      %v1538 = vrot.slane %v1186, 5
      %v1539 = vrot.slane %v1538, 4
      %v1540 = vrot.slane %v1187, 5
      %v1541 = vsel %vm557, %v1539, %v1540
      %v1542 = vrot.slane %v1188, 5
      %v1543 = vrot.slane %v1542, 4
      %v1544 = vrot.slane %v1189, 5
      %v1545 = vsel %vm557, %v1543, %v1544
      %v1546 = vrot.slane %v1190, 5
      %v1547 = vrot.slane %v1546, 4
      %v1548 = vrot.slane %v1191, 5
      %v1549 = vsel %vm557, %v1547, %v1548
      %v1550 = vrot.slane %v1192, 5
      %v1551 = vrot.slane %v1550, 4
      %v1552 = vrot.slane %v1193, 5
      %v1553 = vsel %vm557, %v1551, %v1552
      %v1554 = vrot.slane %v1194, 5
      %v1555 = vrot.slane %v1554, 4
      %v1556 = vrot.slane %v1195, 5
      %v1557 = vsel %vm557, %v1555, %v1556
      %v1558 = vrot.slane %v1196, 5
      %v1559 = vrot.slane %v1558, 4
      %v1560 = vrot.slane %v1197, 5
      %v1561 = vsel %vm557, %v1559, %v1560
      %s1562 = scalar_lea.vmem %s203, 16
      %v1563 = vld [vmem:[%s1562] sm:$0x3]
      %v1564 = vunpack.c.l.b16 %v1533
      %v1565 = vunpack.c.l.b16 %v1537
      %v1566 = vunpack.c.l.b16 %v1541
      %v1567 = vunpack.c.l.b16 %v1545
      %v1568 = vunpack.c.l.b16 %v1549
      %v1569 = vunpack.c.l.b16 %v1553
      %v1570 = vunpack.c.l.b16 %v1557
      %v1571 = vunpack.c.l.b16 %v1561
      %v1572 = vpack.c.b16 %v1565, %v1564
      %v1573 = vpack.c.b16 %v1567, %v1566
      %v1574 = vpack.c.b16 %v1569, %v1568
      %v1575 = vpack.c.b16 %v1571, %v1570
      %v1577 = vsel %vm365, %v1572, 0
      %v1580 = vsel %vm365, %v1573, 0
      %v1583 = vsel %vm365, %v1574, 0
      %v1586 = vsel %vm365, %v1575, 0
      %v1589 = vsel %vm378, %v1563, 0
      %1591 = vmatprep.subr.bf16.mxu0 0
      %1592 = vmatpush1.bf16.msra.mxu0 %v1589
      %1593 = vmatprep.subr.bf16.mxu0 0
      %1594 = vmatpush1.bf16.msra.mxu0 0
      %1595 = vmatprep.subr.bf16.mxu0 0
      %1596 = vmatpush1.bf16.msra.mxu0 0
      %1597 = vmatprep.subr.bf16.mxu0 0
      %1598 = vmatpush1.bf16.msra.mxu0 0
      %1599 = vmatprep.subr.bf16.mxu0 0
      %1600 = vmatpush1.bf16.msra.mxu0 0
      %1601 = vmatprep.subr.bf16.mxu0 0
      %1602 = vmatpush1.bf16.msra.mxu0 0
      %1603 = vmatprep.subr.bf16.mxu0 0
      %1604 = vmatpush1.bf16.msra.mxu0 0
      %1605 = vmatprep.subr.bf16.mxu0 0
      %1606 = vmatpush1.bf16.msra.mxu0 0
      %1607 = vmatprep.subr.bf16.mxu0 0
      %1608 = vmatpush1.bf16.msra.mxu0 0
      %1609 = vmatprep.subr.bf16.mxu0 0
      %1610 = vmatpush1.bf16.msra.mxu0 0
      %1611 = vmatprep.subr.bf16.mxu0 0
      %1612 = vmatpush1.bf16.msra.mxu0 0
      %1613 = vmatprep.subr.bf16.mxu0 0
      %1614 = vmatpush1.bf16.msra.mxu0 0
      %1615 = vmatprep.subr.bf16.mxu0 0
      %1616 = vmatpush1.bf16.msra.mxu0 0
      %1617 = vmatprep.subr.bf16.mxu0 0
      %1618 = vmatpush1.bf16.msra.mxu0 0
      %1619 = vmatprep.subr.bf16.mxu0 0
      %1620 = vmatpush1.bf16.msra.mxu0 0
      %1621 = vmatprep.subr.bf16.mxu0 0
      %1622 = vmatpush1.bf16.msra.mxu0 0
      %1623 = vmatprep.mubr.bf16.mxu0 0
      %1624 = vmatmul.mubr.bf16.gmra.mrb[0].mxu0 %v1577
      %v1625 = vpop.f32.mrb[0].mxu0
      %v1626 = vadd.f32 0.0, %v1625
      %v1627 = vpop.f32.mrb[0].mxu0
      %v1628 = vpop.f32.mrb[0].mxu0
      %v1629 = vadd.f32 0.0, %v1628
      %v1630 = vpop.f32.mrb[0].mxu0
      %1631 = vmatprep.mubr.bf16.mxu0 0
      %1632 = vmatmul.mubr.bf16.gmra.mrb[0].mxu0 %v1580
      %v1633 = vpop.f32.mrb[0].mxu0
      %v1634 = vadd.f32 0.0, %v1633
      %v1635 = vpop.f32.mrb[0].mxu0
      %v1636 = vpop.f32.mrb[0].mxu0
      %v1637 = vadd.f32 0.0, %v1636
      %v1638 = vpop.f32.mrb[0].mxu0
      %1639 = vmatprep.mubr.bf16.mxu0 0
      %1640 = vmatmul.mubr.bf16.gmra.mrb[0].mxu0 %v1583
      %v1641 = vpop.f32.mrb[0].mxu0
      %v1642 = vadd.f32 0.0, %v1641
      %v1643 = vpop.f32.mrb[0].mxu0
      %v1644 = vpop.f32.mrb[0].mxu0
      %v1645 = vadd.f32 0.0, %v1644
      %v1646 = vpop.f32.mrb[0].mxu0
      %1647 = vmatprep.mubr.bf16.mxu0 0
      %1648 = vmatmul.mubr.bf16.gmra.mrb[0].mxu0 %v1586
      %v1649 = vpop.f32.mrb[0].mxu0
      %v1650 = vadd.f32 0.0, %v1649
      %v1651 = vpop.f32.mrb[0].mxu0
      %v1652 = vpop.f32.mrb[0].mxu0
      %v1653 = vadd.f32 0.0, %v1652
      %v1654 = vpop.f32.mrb[0].mxu0
      %1655 = vdwg.mxu0
      %v1656 = vadd.f32 %v1514, %v1626
      %v1657 = vadd.f32 %v1515, %v1629
      %v1658 = vadd.f32 %v1516, %v1634
      %v1659 = vadd.f32 %v1517, %v1637
      %v1660 = vadd.f32 %v1518, %v1642
      %v1661 = vadd.f32 %v1519, %v1645
      %v1662 = vadd.f32 %v1520, %v1650
      %v1663 = vadd.f32 %v1521, %v1653
      %v1664 = vld [vmem:[%s2] sm:$0x1]
      %v1666 = vlaneseq
      %v1667 = vshrl.u32 %v1666, 7
      %v1668 = vsub.s32 0, %v1667
      %v1669 = vrot.slane %v1664, %v1668
      %v1671 = vadd.f32 %v1656, %v1669
      %v1672 = vadd.f32 %v1657, %v1669
      %v1673 = vadd.f32 %v1658, %v1669
      %v1674 = vadd.f32 %v1659, %v1669
      %v1675 = vadd.f32 %v1660, %v1669
      %v1676 = vadd.f32 %v1661, %v1669
      %v1677 = vadd.f32 %v1662, %v1669
      %v1678 = vadd.f32 %v1663, %v1669
      %vm1679 = vcmp.ge.f32.partialorder %v1671, 0.0
      %vm1680 = vcmp.ge.f32.partialorder %v1672, 0.0
      %vm1681 = vcmp.ge.f32.partialorder %v1673, 0.0
      %vm1682 = vcmp.ge.f32.partialorder %v1674, 0.0
      %vm1683 = vcmp.ge.f32.partialorder %v1675, 0.0
      %vm1684 = vcmp.ge.f32.partialorder %v1676, 0.0
      %vm1685 = vcmp.ge.f32.partialorder %v1677, 0.0
      %vm1686 = vcmp.ge.f32.partialorder %v1678, 0.0
      %v1687 = vsel %vm1679, 1.4142135, 0.28284273
      %v1688 = vsel %vm1680, 1.4142135, 0.28284273
      %v1689 = vsel %vm1681, 1.4142135, 0.28284273
      %v1690 = vsel %vm1682, 1.4142135, 0.28284273
      %v1691 = vsel %vm1683, 1.4142135, 0.28284273
      %v1692 = vsel %vm1684, 1.4142135, 0.28284273
      %v1693 = vsel %vm1685, 1.4142135, 0.28284273
      %v1694 = vsel %vm1686, 1.4142135, 0.28284273
      %v1695 = vmul.f32 %v1671, %v1687
      %v1696 = vmul.f32 %v1672, %v1688
      %v1697 = vmul.f32 %v1673, %v1689
      %v1698 = vmul.f32 %v1674, %v1690
      %v1699 = vmul.f32 %v1675, %v1691
      %v1700 = vmul.f32 %v1676, %v1692
      %v1701 = vmul.f32 %v1677, %v1693
      %v1702 = vmul.f32 %v1678, %v1694
      %v1703 = vpack.c.bf16 %v1695, %v1695
      %v1704 = vpack.c.bf16 %v1696, %v1696
      %v1705 = vpack.c.bf16 %v1697, %v1697
      %v1706 = vpack.c.bf16 %v1698, %v1698
      %v1707 = vpack.c.bf16 %v1699, %v1699
      %v1708 = vpack.c.bf16 %v1700, %v1700
      %v1709 = vpack.c.bf16 %v1701, %v1701
      %v1710 = vpack.c.bf16 %v1702, %v1702
      %vm1711 = vcmask 125952
      %1712 = vst.msk [vmem:[%s212] sm:$0xf] %vm1711, %v1703
      %1713 = vst.msk [vmem:[%s212 + $0x4] sm:$0xf] %vm1711, %v1704
      %1714 = vst.msk [vmem:[%s212 + $0x8] sm:$0xf] %vm1711, %v1705
      %1715 = vst.msk [vmem:[%s212 + $0xc] sm:$0xf] %vm1711, %v1706
      %1716 = vst.msk [vmem:[%s212 + $0x10] sm:$0xf] %vm1711, %v1707
      %1717 = vst.msk [vmem:[%s212 + $0x14] sm:$0xf] %vm1711, %v1708
      %1718 = vst.msk [vmem:[%s212 + $0x18] sm:$0xf] %vm1711, %v1709
      %1719 = vst.msk [vmem:[%s212 + $0x1c] sm:$0xf] %vm1711, %v1710
      %s1720 = smul.u32 8, %s19
      %p1721 = scmp.lt.s32.totalorder %s18, 1
      %s1722 = scalar_select %p1721, %s18, 1
      %p1723 = scmp.lt.s32.totalorder %s1720, 7
      %s1724 = scalar_select %p1723, %s1720, 7
      %s1725 = smul.addr %s1722, 8
      %s1726 = sadd.s32 %s1724, %s1725
      %s1727 = smul.addr %s1726, 4
      %s1728 = scalar_lea.vmem %s3, %s1727
      // Predicated region
      $region33: #{upsampling_block_forward.2} parent=31 // pred_check
        %p1729 = pneg %p119
      $region34: #{upsampling_block_forward.2} parent=31 // pred_check_branch
        %1731 = sbr.rel (%p1729) target = $region36
      $region35: #{upsampling_block_forward.2} parent=31 // pred_region
        %s1732 = smul.u32 8, %s19
      $region36: #{upsampling_block_forward.2} parent=31 // pred_fallthru
        _
    $region32: #{upsampling_block_forward.2} parent=5 // pred_fallthru
      _
    %p1733 = scmp.le.s32.totalorder 2, %s9
    // Predicated region
    $region37: #{upsampling_block_forward.2} parent=5 // pred_check
      %p1734 = pneg %p1733
    $region38: #{upsampling_block_forward.2} parent=5 // pred_check_branch
      %1736 = sbr.rel (%p1734) target = $region40
    $region39: #{upsampling_block_forward.2} parent=5 // pred_region
      %s1737 = ssub.s32 %s9, 2
      // Predicated region
      $region41: #{upsampling_block_forward.2} parent=39 // pred_check
        %p1738 = pneg %p125
      $region42: #{upsampling_block_forward.2} parent=39 // pred_check_branch
        %1740 = sbr.rel (%p1738) target = $region44
      $region43: #{upsampling_block_forward.2} parent=39 // pred_region
        %s1741 = smul.u32 8, %s21
        %p1742 = scmp.lt.s32.totalorder %s20, 1
        %s1743 = scalar_select %p1742, %s20, 1
        %p1744 = scmp.lt.s32.totalorder %s1741, 7
        %s1745 = scalar_select %p1744, %s1741, 7
        %s1746 = smul.addr %s1743, 8
        %s1747 = sadd.s32 %s1745, %s1746
        %s1748 = smul.addr %s1747, 4
        %s1749 = scalar_lea.vmem %s3, %s1748
      $region44: #{upsampling_block_forward.2} parent=39 // pred_fallthru
        _
    $region40: #{upsampling_block_forward.2} parent=5 // pred_fallthru
      _
  $region6: #{upsampling_block_forward.2} parent=0 // loop_footer
    %s13 = sadd.s32 1, %s9
  $region7: #{upsampling_block_forward.2} parent=0 // loop_footer_branch
    %8 = sbr.rel target = $region3
  $region8: #{upsampling_block_forward.2} parent=0 // loop_exit
    _

// kernel: upsampling_block_forward.3
$region0: #{upsampling_block_forward.3}
  #allocation0 [shape = 'u32[]', space=smem, size = 0x4, offset = 0x4, fixed_abs, tag = 'smem constant byte address 0x4 - core index']
  #allocation1 [shape = 'u32[144,128]{1,0:T(1,128)}', space=vmem, size = 0x12000, scoped, tag = 'internal scratch']
  %s0 = inlined_call_operand.vmem [shape: bf16[2,18,18,4], index: 0, kind: input, shape index: {}]
  %s1 = inlined_call_operand.vmem [shape: bf16[2,3,3,4,4], index: 1, kind: input, shape index: {}]
  %s2 = inlined_call_operand.vmem [shape: f32[1,4], index: 2, kind: input, shape index: {}]
  %s3 = inlined_call_operand.vmem [shape: f32[2,16,16,4], index: 3, kind: output, shape index: {}]
  %s4 = sld [smem:[#allocation0]]
  $region45: #{upsampling_block_forward.3} parent=0
    _
  %s6 = ssub.s32 1, %s4
  %s7 = scalar_select 0, %s6, %s4
  loop: start=0, step=1, limit=4
  $region2: #{upsampling_block_forward.3} parent=0 // loop_pre_header
    _
  $region3: #{upsampling_block_forward.3} parent=0 // loop_header
    %s9 = sphi 0, %s13
    %p10 = scmp.ge.s32.totalorder %s9, 4
    %s16 = sphi 0, %s28
    %s17 = sphi 0, %s24
    %s18 = sphi 0, %s16
    %s19 = sphi 0, %s17
    %s20 = sphi 0, %s18
    %s21 = sphi 0, %s19
    %s31 = sphi 0, %s33
    %s34 = sphi 0, %s31
    %s35 = sphi 0, %s34
    %s51 = sphi 0, %s35
    %s57 = sphi 0, %s59
    %s60 = sphi 0, %s57
    %s61 = sphi 0, %s60
    %s77 = sphi 0, %s61
    %s81 = sphi 0, %s81
    %s83 = sphi 0, %s81
    %s84 = sphi 0, %s83
    %s98 = sphi 0, %s84
    %s106 = sphi 0, %s108
    %s109 = sphi 0, %s106
    %s110 = sphi 0, %s109
    %s126 = sphi 0, %s110
  $region4: #{upsampling_block_forward.3} parent=0 // loop_header_branch
    %12 = sbr.rel (%p10) target = $region8
  $region5: #{upsampling_block_forward.3} parent=0 // loop_body
    %s14 = ssub.s32 %s9, 1
    %s15 = ssub.s32 %s9, 2
    %s22 = sadd.s32 1, %s17
    %p23 = scmp.ge.s32.totalorder %s22, 1
    %s24 = scalar_select %p23, 0, %s22
    %s25 = sadd.s32 1, %s16
    %s26 = scalar_select %p23, %s25, %s16
    %p27 = scmp.ge.s32.totalorder %s26, 2
    %s28 = scalar_select %p27, 0, %s26
    %s29 = ssub.s32 %s16, %s28
    %p30 = scmp.eq.s32.totalorder %s29, 0
    %s32 = sadd.s32 %s31, 1
    %s33 = scalar_select %p30, %s31, %s32
    %p36 = pneg %p30
    %p37 = scmp.eq.s32.totalorder %s9, 1
    %p38 = por %p36, %p37
    %p39 = scmp.ne.s32.totalorder %s31, %s34
    %p40 = scmp.eq.s32.totalorder %s9, 0
    %p41 = por %p39, %p40
    %p42 = scmp.ne.s32.totalorder %s31, %s34
    %p43 = scmp.eq.s32.totalorder %s14, 1
    %p44 = por %p42, %p43
    %p45 = scmp.ne.s32.totalorder %s34, %s35
    %p46 = scmp.eq.s32.totalorder %s14, 0
    %p47 = por %p45, %p46
    %p48 = scmp.ne.s32.totalorder %s34, %s35
    %p49 = scmp.eq.s32.totalorder %s15, 1
    %p50 = por %p48, %p49
    %p52 = scmp.ne.s32.totalorder %s35, %s51
    %p53 = scmp.eq.s32.totalorder %s15, 0
    %p54 = por %p52, %p53
    %s55 = ssub.s32 %s16, %s28
    %p56 = scmp.eq.s32.totalorder %s55, 0
    %s58 = sadd.s32 %s57, 1
    %s59 = scalar_select %p56, %s57, %s58
    %p62 = pneg %p56
    %p63 = scmp.eq.s32.totalorder %s9, 1
    %p64 = por %p62, %p63
    %p65 = scmp.ne.s32.totalorder %s57, %s60
    %p66 = scmp.eq.s32.totalorder %s9, 0
    %p67 = por %p65, %p66
    %p68 = scmp.ne.s32.totalorder %s57, %s60
    %p69 = scmp.eq.s32.totalorder %s14, 1
    %p70 = por %p68, %p69
    %p71 = scmp.ne.s32.totalorder %s60, %s61
    %p72 = scmp.eq.s32.totalorder %s14, 0
    %p73 = por %p71, %p72
    %p74 = scmp.ne.s32.totalorder %s60, %s61
    %p75 = scmp.eq.s32.totalorder %s15, 1
    %p76 = por %p74, %p75
    %p78 = scmp.ne.s32.totalorder %s61, %s77
    %p79 = scmp.eq.s32.totalorder %s15, 0
    %p80 = por %p78, %p79
    %s82 = sadd.s32 %s81, 1
    %p85 = scmp.eq.s32.totalorder %s9, 1
    %p86 = scmp.ne.s32.totalorder %s81, %s83
    %p87 = scmp.eq.s32.totalorder %s9, 0
    %p88 = por %p86, %p87
    %p89 = scmp.ne.s32.totalorder %s81, %s83
    %p90 = scmp.eq.s32.totalorder %s14, 1
    %p91 = por %p89, %p90
    %p92 = scmp.ne.s32.totalorder %s83, %s84
    %p93 = scmp.eq.s32.totalorder %s14, 0
    %p94 = por %p92, %p93
    %p95 = scmp.ne.s32.totalorder %s83, %s84
    %p96 = scmp.eq.s32.totalorder %s15, 1
    %p97 = por %p95, %p96
    %p99 = scmp.ne.s32.totalorder %s84, %s98
    %p100 = scmp.eq.s32.totalorder %s15, 0
    %p101 = por %p99, %p100
    %s102 = ssub.s32 %s16, %s28
    %s103 = ssub.s32 %s17, %s24
    %s104 = sor.u32 %s102, %s103
    %p105 = scmp.eq.s32.totalorder %s104, 0
    %s107 = sadd.s32 %s106, 1
    %s108 = scalar_select %p105, %s106, %s107
    %p111 = pneg %p105
    %p112 = scmp.eq.s32.totalorder %s9, 1
    %p113 = por %p111, %p112
    %p114 = scmp.ne.s32.totalorder %s106, %s109
    %p115 = scmp.eq.s32.totalorder %s9, 0
    %p116 = por %p114, %p115
    %p117 = scmp.ne.s32.totalorder %s106, %s109
    %p118 = scmp.eq.s32.totalorder %s14, 1
    %p119 = por %p117, %p118
    %p120 = scmp.ne.s32.totalorder %s109, %s110
    %p121 = scmp.eq.s32.totalorder %s14, 0
    %p122 = por %p120, %p121
    %p123 = scmp.ne.s32.totalorder %s109, %s110
    %p124 = scmp.eq.s32.totalorder %s15, 1
    %p125 = por %p123, %p124
    %p127 = scmp.ne.s32.totalorder %s110, %s126
    %p128 = scmp.eq.s32.totalorder %s15, 0
    %p129 = por %p127, %p128
    %p130 = scmp.le.s32.totalorder 1, %s9
    %p131 = scmp.lt.s32.totalorder %s9, 3
    %p132 = pnand %p130, %p131
    %p133 = pneg %p132
    // Predicated region
    $region9: #{upsampling_block_forward.3} parent=5 // pred_check
      _
    $region10: #{upsampling_block_forward.3} parent=5 // pred_check_branch
      %135 = sbr.rel (%p132) target = $region12
    $region11: #{upsampling_block_forward.3} parent=5 // pred_region
      %s136 = ssub.s32 %s9, 1
      // Predicated region
      $region13: #{upsampling_block_forward.3} parent=11 // pred_check
        %p137 = pneg %p94
      $region14: #{upsampling_block_forward.3} parent=11 // pred_check_branch
        %139 = sbr.rel (%p137) target = $region16
      $region15: #{upsampling_block_forward.3} parent=11 // pred_region
        _
      $region16: #{upsampling_block_forward.3} parent=11 // pred_fallthru
        _
    $region12: #{upsampling_block_forward.3} parent=5 // pred_fallthru
      _
    %p140 = scmp.lt.s32.totalorder %s9, 2
    // Predicated region
    $region17: #{upsampling_block_forward.3} parent=5 // pred_check
      %p141 = pneg %p140
    $region18: #{upsampling_block_forward.3} parent=5 // pred_check_branch
      %143 = sbr.rel (%p141) target = $region20
    $region19: #{upsampling_block_forward.3} parent=5 // pred_region
      // Predicated region
      $region21: #{upsampling_block_forward.3} parent=19 // pred_check
        %p144 = pneg %p41
      $region22: #{upsampling_block_forward.3} parent=19 // pred_check_branch
        %146 = sbr.rel (%p144) target = $region24
      $region23: #{upsampling_block_forward.3} parent=19 // pred_region
        %p147 = scmp.lt.s32.totalorder %s16, 1
        %s148 = scalar_select %p147, %s16, 1
        %s149 = smul.addr %s148, 54
        %s150 = smul.addr %s149, 4
        %s151 = scalar_lea.vmem %s0, %s150
      $region24: #{upsampling_block_forward.3} parent=19 // pred_fallthru
        _
      // Predicated region
      $region25: #{upsampling_block_forward.3} parent=19 // pred_check
        %p152 = pneg %p67
      $region26: #{upsampling_block_forward.3} parent=19 // pred_check_branch
        %154 = sbr.rel (%p152) target = $region28
      $region27: #{upsampling_block_forward.3} parent=19 // pred_region
        %p155 = scmp.lt.s32.totalorder %s16, 1
        %s156 = scalar_select %p155, %s16, 1
        %s157 = smul.addr %s156, 9
        %s158 = smul.addr %s157, 2
        %s159 = scalar_lea.vmem %s1, %s158
      $region28: #{upsampling_block_forward.3} parent=19 // pred_fallthru
        _
    $region20: #{upsampling_block_forward.3} parent=5 // pred_fallthru
      _
    %p160 = scmp.le.s32.totalorder 1, %s9
    %p161 = scmp.lt.s32.totalorder %s9, 3
    %p162 = pnand %p160, %p161
    %p163 = pneg %p162
    // Predicated region
    $region29: #{upsampling_block_forward.3} parent=5 // pred_check
      _
    $region30: #{upsampling_block_forward.3} parent=5 // pred_check_branch
      %165 = sbr.rel (%p162) target = $region32
    $region31: #{upsampling_block_forward.3} parent=5 // pred_region
      %s166 = ssub.s32 %s9, 1
      %p167 = scmp.lt.s32.totalorder %s18, 1
      %s168 = scalar_select %p167, %s18, 1
      %s169 = smul.addr %s168, 54
      %s170 = smul.addr %s169, 4
      %s171 = scalar_lea.vmem %s0, %s170
      %p172 = pneg %p47
      %p173 = pneg %p44
      %p174 = scmp.lt.s32.totalorder %s18, 1
      %s175 = scalar_select %p174, %s18, 1
      %s176 = smul.addr %s175, 9
      %s177 = smul.addr %s176, 2
      %s178 = scalar_lea.vmem %s1, %s177
      %p179 = pneg %p73
      %p180 = pneg %p70
      %p181 = pneg %p94
      %p182 = pneg %p91
      %p183 = pneg %p122
      %p184 = pneg %p119
      %s185 = smul.u32 16, %s19
      %p186 = scmp.lt.s32.totalorder %s18, 1
      %s187 = scalar_select %p186, %s18, 1
      %p188 = scmp.lt.s32.totalorder %s185, 15
      %s189 = scalar_select %p188, %s185, 15
      %s190 = smul.addr %s189, 2
      %s191 = smul.addr %s187, 32
      %s192 = sadd.s32 %s190, %s191
      %s193 = smul.addr %s192, 8
      %s194 = scalar_lea.vmem %s3, %s193
      %p195 = scmp.lt.s32.totalorder %s18, 1
      %s196 = scalar_select %p195, %s18, 1
      %s197 = smul.addr %s196, 54
      %s198 = smul.addr %s197, 4
      %s199 = scalar_lea.vmem %s0, %s198
      %p200 = scmp.lt.s32.totalorder %s18, 1
      %s201 = scalar_select %p200, %s18, 1
      %s202 = smul.addr %s201, 9
      %s203 = smul.addr %s202, 2
      %s204 = scalar_lea.vmem %s1, %s203
      %s205 = smul.u32 16, %s19
      %p206 = scmp.lt.s32.totalorder %s18, 1
      %s207 = scalar_select %p206, %s18, 1
      %p208 = scmp.lt.s32.totalorder %s205, 15
      %s209 = scalar_select %p208, %s205, 15
      %s210 = smul.addr %s209, 2
      %s211 = smul.addr %s207, 32
      %s212 = sadd.s32 %s210, %s211
      %s213 = smul.addr %s212, 8
      %s214 = scalar_lea.vmem %s3, %s213
      %s215 = smul.u32 16, %s19
      %s217 = smul.u32 %s19, 16
      %s218 = smul.u32 %s217, 3
      %s219 = smul.addr %s218, 4
      %s220 = scalar_lea.vmem %s199, %s219
      %v221 = vld [vmem:[%s220] sm:$0xf]
      %v222 = vld [vmem:[%s220 + $0x4] sm:$0xf]
      %v223 = vld [vmem:[%s220 + $0x8] sm:$0x1]
      %v224 = vld [vmem:[%s220 + $0xc] sm:$0xf]
      %v225 = vld [vmem:[%s220 + $0x10] sm:$0xf]
      %v226 = vld [vmem:[%s220 + $0x14] sm:$0x1]
      %v227 = vld [vmem:[%s220 + $0x18] sm:$0xf]
      %v228 = vld [vmem:[%s220 + $0x1c] sm:$0xf]
      %v229 = vld [vmem:[%s220 + $0x20] sm:$0x1]
      %v230 = vld [vmem:[%s220 + $0x24] sm:$0xf]
      %v231 = vld [vmem:[%s220 + $0x28] sm:$0xf]
      %v232 = vld [vmem:[%s220 + $0x2c] sm:$0x1]
      %v233 = vld [vmem:[%s220 + $0x30] sm:$0xf]
      %v234 = vld [vmem:[%s220 + $0x34] sm:$0xf]
      %v235 = vld [vmem:[%s220 + $0x38] sm:$0x1]
      %v236 = vld [vmem:[%s220 + $0x3c] sm:$0xf]
      %v237 = vld [vmem:[%s220 + $0x40] sm:$0xf]
      %v238 = vld [vmem:[%s220 + $0x44] sm:$0x1]
      %v239 = vld [vmem:[%s220 + $0x48] sm:$0xf]
      %v240 = vld [vmem:[%s220 + $0x4c] sm:$0xf]
      %v241 = vld [vmem:[%s220 + $0x50] sm:$0x1]
      %v242 = vld [vmem:[%s220 + $0x54] sm:$0xf]
      %v243 = vld [vmem:[%s220 + $0x58] sm:$0xf]
      %v244 = vld [vmem:[%s220 + $0x5c] sm:$0x1]
      %v245 = vld [vmem:[%s220 + $0x60] sm:$0xf]
      %v246 = vld [vmem:[%s220 + $0x64] sm:$0xf]
      %v247 = vld [vmem:[%s220 + $0x68] sm:$0x1]
      %v248 = vld [vmem:[%s220 + $0x6c] sm:$0xf]
      %v249 = vld [vmem:[%s220 + $0x70] sm:$0xf]
      %v250 = vld [vmem:[%s220 + $0x74] sm:$0x1]
      %v251 = vld [vmem:[%s220 + $0x78] sm:$0xf]
      %v252 = vld [vmem:[%s220 + $0x7c] sm:$0xf]
      %v253 = vld [vmem:[%s220 + $0x80] sm:$0x1]
      %v254 = vld [vmem:[%s220 + $0x84] sm:$0xf]
      %v255 = vld [vmem:[%s220 + $0x88] sm:$0xf]
      %v256 = vld [vmem:[%s220 + $0x8c] sm:$0x1]
      %v257 = vld [vmem:[%s220 + $0x90] sm:$0xf]
      %v258 = vld [vmem:[%s220 + $0x94] sm:$0xf]
      %v259 = vld [vmem:[%s220 + $0x98] sm:$0x1]
      %v260 = vld [vmem:[%s220 + $0x9c] sm:$0xf]
      %v261 = vld [vmem:[%s220 + $0xa0] sm:$0xf]
      %v262 = vld [vmem:[%s220 + $0xa4] sm:$0x1]
      %v263 = vld [vmem:[%s220 + $0xa8] sm:$0xf]
      %v264 = vld [vmem:[%s220 + $0xac] sm:$0xf]
      %v265 = vld [vmem:[%s220 + $0xb0] sm:$0x1]
      %v266 = vld [vmem:[%s220 + $0xb4] sm:$0xf]
      %v267 = vld [vmem:[%s220 + $0xb8] sm:$0xf]
      %v268 = vld [vmem:[%s220 + $0xbc] sm:$0x1]
      %v269 = vld [vmem:[%s204] sm:$0x3]
      %vm270 = vsmask.f32 3328
      %vm271 = vsmask.f32 7440
      %vm272 = vmor %vm270, %vm271
      %v274 = vshrl.u32 %v221, 16
      %v276 = vrot.slane %v274, 4
      %v277 = vshll.u32 %v221, 16
      %v279 = vrot.slane %v277, 5
      %v280 = vor.u32 %v276, %v279
      %v281 = vrot.slane %v280, 4
      %v283 = vshll.u32 %v222, 16
      %v285 = vrot.slane %v283, 5
      %v286 = vsel %vm272, %v281, %v285
      %v287 = vshrl.u32 %v222, 16
      %v289 = vrot.slane %v287, 4
      %v290 = vor.u32 %v289, %v285
      %v291 = vrot.slane %v290, 4
      %v293 = vshll.u32 %v223, 16
      %v295 = vrot.slane %v293, 5
      %v296 = vsel %vm272, %v291, %v295
      %v298 = vshrl.u32 %v224, 16
      %v300 = vrot.slane %v298, 4
      %v301 = vshll.u32 %v224, 16
      %v303 = vrot.slane %v301, 5
      %v304 = vor.u32 %v300, %v303
      %v305 = vrot.slane %v304, 4
      %v307 = vshll.u32 %v225, 16
      %v309 = vrot.slane %v307, 5
      %v310 = vsel %vm272, %v305, %v309
      %v311 = vshrl.u32 %v225, 16
      %v313 = vrot.slane %v311, 4
      %v314 = vor.u32 %v313, %v309
      %v315 = vrot.slane %v314, 4
      %v317 = vshll.u32 %v226, 16
      %v319 = vrot.slane %v317, 5
      %v320 = vsel %vm272, %v315, %v319
      %v322 = vshrl.u32 %v227, 16
      %v324 = vrot.slane %v322, 4
      %v325 = vshll.u32 %v227, 16
      %v327 = vrot.slane %v325, 5
      %v328 = vor.u32 %v324, %v327
      %v329 = vrot.slane %v328, 4
      %v331 = vshll.u32 %v228, 16
      %v333 = vrot.slane %v331, 5
      %v334 = vsel %vm272, %v329, %v333
      %v335 = vshrl.u32 %v228, 16
      %v337 = vrot.slane %v335, 4
      %v338 = vor.u32 %v337, %v333
      %v339 = vrot.slane %v338, 4
      %v341 = vshll.u32 %v229, 16
      %v343 = vrot.slane %v341, 5
      %v344 = vsel %vm272, %v339, %v343
      %v346 = vshrl.u32 %v230, 16
      %v348 = vrot.slane %v346, 4
      %v349 = vshll.u32 %v230, 16
      %v351 = vrot.slane %v349, 5
      %v352 = vor.u32 %v348, %v351
      %v353 = vrot.slane %v352, 4
      %v355 = vshll.u32 %v231, 16
      %v357 = vrot.slane %v355, 5
      %v358 = vsel %vm272, %v353, %v357
      %v359 = vshrl.u32 %v231, 16
      %v361 = vrot.slane %v359, 4
      %v362 = vor.u32 %v361, %v357
      %v363 = vrot.slane %v362, 4
      %v365 = vshll.u32 %v232, 16
      %v367 = vrot.slane %v365, 5
      %v368 = vsel %vm272, %v363, %v367
      %v370 = vshrl.u32 %v233, 16
      %v372 = vrot.slane %v370, 4
      %v373 = vshll.u32 %v233, 16
      %v375 = vrot.slane %v373, 5
      %v376 = vor.u32 %v372, %v375
      %v377 = vrot.slane %v376, 4
      %v379 = vshll.u32 %v234, 16
      %v381 = vrot.slane %v379, 5
      %v382 = vsel %vm272, %v377, %v381
      %v383 = vshrl.u32 %v234, 16
      %v385 = vrot.slane %v383, 4
      %v386 = vor.u32 %v385, %v381
      %v387 = vrot.slane %v386, 4
      %v389 = vshll.u32 %v235, 16
      %v391 = vrot.slane %v389, 5
      %v392 = vsel %vm272, %v387, %v391
      %v394 = vshrl.u32 %v236, 16
      %v396 = vrot.slane %v394, 4
      %v397 = vshll.u32 %v236, 16
      %v399 = vrot.slane %v397, 5
      %v400 = vor.u32 %v396, %v399
      %v401 = vrot.slane %v400, 4
      %v403 = vshll.u32 %v237, 16
      %v405 = vrot.slane %v403, 5
      %v406 = vsel %vm272, %v401, %v405
      %v407 = vshrl.u32 %v237, 16
      %v409 = vrot.slane %v407, 4
      %v410 = vor.u32 %v409, %v405
      %v411 = vrot.slane %v410, 4
      %v413 = vshll.u32 %v238, 16
      %v415 = vrot.slane %v413, 5
      %v416 = vsel %vm272, %v411, %v415
      %v418 = vshrl.u32 %v239, 16
      %v420 = vrot.slane %v418, 4
      %v421 = vshll.u32 %v239, 16
      %v423 = vrot.slane %v421, 5
      %v424 = vor.u32 %v420, %v423
      %v425 = vrot.slane %v424, 4
      %v427 = vshll.u32 %v240, 16
      %v429 = vrot.slane %v427, 5
      %v430 = vsel %vm272, %v425, %v429
      %v431 = vshrl.u32 %v240, 16
      %v433 = vrot.slane %v431, 4
      %v434 = vor.u32 %v433, %v429
      %v435 = vrot.slane %v434, 4
      %v437 = vshll.u32 %v241, 16
      %v439 = vrot.slane %v437, 5
      %v440 = vsel %vm272, %v435, %v439
      %v442 = vshrl.u32 %v242, 16
      %v444 = vrot.slane %v442, 4
      %v445 = vshll.u32 %v242, 16
      %v447 = vrot.slane %v445, 5
      %v448 = vor.u32 %v444, %v447
      %v449 = vrot.slane %v448, 4
      %v451 = vshll.u32 %v243, 16
      %v453 = vrot.slane %v451, 5
      %v454 = vsel %vm272, %v449, %v453
      %v455 = vshrl.u32 %v243, 16
      %v457 = vrot.slane %v455, 4
      %v458 = vor.u32 %v457, %v453
      %v459 = vrot.slane %v458, 4
      %v461 = vshll.u32 %v244, 16
      %v463 = vrot.slane %v461, 5
      %v464 = vsel %vm272, %v459, %v463
      %v466 = vshrl.u32 %v245, 16
      %v468 = vrot.slane %v466, 4
      %v469 = vshll.u32 %v245, 16
      %v471 = vrot.slane %v469, 5
      %v472 = vor.u32 %v468, %v471
      %v473 = vrot.slane %v472, 4
      %v475 = vshll.u32 %v246, 16
      %v477 = vrot.slane %v475, 5
      %v478 = vsel %vm272, %v473, %v477
      %v479 = vshrl.u32 %v246, 16
      %v481 = vrot.slane %v479, 4
      %v482 = vor.u32 %v481, %v477
      %v483 = vrot.slane %v482, 4
      %v485 = vshll.u32 %v247, 16
      %v487 = vrot.slane %v485, 5
      %v488 = vsel %vm272, %v483, %v487
      %v490 = vshrl.u32 %v248, 16
      %v492 = vrot.slane %v490, 4
      %v493 = vshll.u32 %v248, 16
      %v495 = vrot.slane %v493, 5
      %v496 = vor.u32 %v492, %v495
      %v497 = vrot.slane %v496, 4
      %v499 = vshll.u32 %v249, 16
      %v501 = vrot.slane %v499, 5
      %v502 = vsel %vm272, %v497, %v501
      %v503 = vshrl.u32 %v249, 16
      %v505 = vrot.slane %v503, 4
      %v506 = vor.u32 %v505, %v501
      %v507 = vrot.slane %v506, 4
      %v509 = vshll.u32 %v250, 16
      %v511 = vrot.slane %v509, 5
      %v512 = vsel %vm272, %v507, %v511
      %v514 = vshrl.u32 %v251, 16
      %v516 = vrot.slane %v514, 4
      %v517 = vshll.u32 %v251, 16
      %v519 = vrot.slane %v517, 5
      %v520 = vor.u32 %v516, %v519
      %v521 = vrot.slane %v520, 4
      %v523 = vshll.u32 %v252, 16
      %v525 = vrot.slane %v523, 5
      %v526 = vsel %vm272, %v521, %v525
      %v527 = vshrl.u32 %v252, 16
      %v529 = vrot.slane %v527, 4
      %v530 = vor.u32 %v529, %v525
      %v531 = vrot.slane %v530, 4
      %v533 = vshll.u32 %v253, 16
      %v535 = vrot.slane %v533, 5
      %v536 = vsel %vm272, %v531, %v535
      %v538 = vshrl.u32 %v254, 16
      %v540 = vrot.slane %v538, 4
      %v541 = vshll.u32 %v254, 16
      %v543 = vrot.slane %v541, 5
      %v544 = vor.u32 %v540, %v543
      %v545 = vrot.slane %v544, 4
      %v547 = vshll.u32 %v255, 16
      %v549 = vrot.slane %v547, 5
      %v550 = vsel %vm272, %v545, %v549
      %v551 = vshrl.u32 %v255, 16
      %v553 = vrot.slane %v551, 4
      %v554 = vor.u32 %v553, %v549
      %v555 = vrot.slane %v554, 4
      %v557 = vshll.u32 %v256, 16
      %v559 = vrot.slane %v557, 5
      %v560 = vsel %vm272, %v555, %v559
      %v562 = vshrl.u32 %v257, 16
      %v564 = vrot.slane %v562, 4
      %v565 = vshll.u32 %v257, 16
      %v567 = vrot.slane %v565, 5
      %v568 = vor.u32 %v564, %v567
      %v569 = vrot.slane %v568, 4
      %v571 = vshll.u32 %v258, 16
      %v573 = vrot.slane %v571, 5
      %v574 = vsel %vm272, %v569, %v573
      %v575 = vshrl.u32 %v258, 16
      %v577 = vrot.slane %v575, 4
      %v578 = vor.u32 %v577, %v573
      %v579 = vrot.slane %v578, 4
      %v581 = vshll.u32 %v259, 16
      %v583 = vrot.slane %v581, 5
      %v584 = vsel %vm272, %v579, %v583
      %v586 = vshrl.u32 %v260, 16
      %v588 = vrot.slane %v586, 4
      %v589 = vshll.u32 %v260, 16
      %v591 = vrot.slane %v589, 5
      %v592 = vor.u32 %v588, %v591
      %v593 = vrot.slane %v592, 4
      %v595 = vshll.u32 %v261, 16
      %v597 = vrot.slane %v595, 5
      %v598 = vsel %vm272, %v593, %v597
      %v599 = vshrl.u32 %v261, 16
      %v601 = vrot.slane %v599, 4
      %v602 = vor.u32 %v601, %v597
      %v603 = vrot.slane %v602, 4
      %v605 = vshll.u32 %v262, 16
      %v607 = vrot.slane %v605, 5
      %v608 = vsel %vm272, %v603, %v607
      %v610 = vshrl.u32 %v263, 16
      %v612 = vrot.slane %v610, 4
      %v613 = vshll.u32 %v263, 16
      %v615 = vrot.slane %v613, 5
      %v616 = vor.u32 %v612, %v615
      %v617 = vrot.slane %v616, 4
      %v619 = vshll.u32 %v264, 16
      %v621 = vrot.slane %v619, 5
      %v622 = vsel %vm272, %v617, %v621
      %v623 = vshrl.u32 %v264, 16
      %v625 = vrot.slane %v623, 4
      %v626 = vor.u32 %v625, %v621
      %v627 = vrot.slane %v626, 4
      %v629 = vshll.u32 %v265, 16
      %v631 = vrot.slane %v629, 5
      %v632 = vsel %vm272, %v627, %v631
      %v634 = vshrl.u32 %v266, 16
      %v636 = vrot.slane %v634, 4
      %v637 = vshll.u32 %v266, 16
      %v639 = vrot.slane %v637, 5
      %v640 = vor.u32 %v636, %v639
      %v641 = vrot.slane %v640, 4
      %v643 = vshll.u32 %v267, 16
      %v645 = vrot.slane %v643, 5
      %v646 = vsel %vm272, %v641, %v645
      %v647 = vshrl.u32 %v267, 16
      %v649 = vrot.slane %v647, 4
      %v650 = vor.u32 %v649, %v645
      %v651 = vrot.slane %v650, 4
      %v653 = vshll.u32 %v268, 16
      %v655 = vrot.slane %v653, 5
      %v656 = vsel %vm272, %v651, %v655
      %s657 = scalar_lea.vmem %s204, 2
      %v658 = vld [vmem:[%s657] sm:$0x3]
      %v659 = vunpack.c.l.b16 %v286
      %v660 = vunpack.c.l.b16 %v296
      %v661 = vunpack.c.l.b16 %v310
      %v662 = vunpack.c.l.b16 %v320
      %v663 = vunpack.c.l.b16 %v334
      %v664 = vunpack.c.l.b16 %v344
      %v665 = vunpack.c.l.b16 %v358
      %v666 = vunpack.c.l.b16 %v368
      %v667 = vunpack.c.l.b16 %v382
      %v668 = vunpack.c.l.b16 %v392
      %v669 = vunpack.c.l.b16 %v406
      %v670 = vunpack.c.l.b16 %v416
      %v671 = vunpack.c.l.b16 %v430
      %v672 = vunpack.c.l.b16 %v440
      %v673 = vunpack.c.l.b16 %v454
      %v674 = vunpack.c.l.b16 %v464
      %v675 = vunpack.c.l.b16 %v478
      %v676 = vunpack.c.l.b16 %v488
      %v677 = vunpack.c.l.b16 %v502
      %v678 = vunpack.c.l.b16 %v512
      %v679 = vunpack.c.l.b16 %v526
      %v680 = vunpack.c.l.b16 %v536
      %v681 = vunpack.c.l.b16 %v550
      %v682 = vunpack.c.l.b16 %v560
      %v683 = vunpack.c.l.b16 %v574
      %v684 = vunpack.c.l.b16 %v584
      %v685 = vunpack.c.l.b16 %v598
      %v686 = vunpack.c.l.b16 %v608
      %v687 = vunpack.c.l.b16 %v622
      %v688 = vunpack.c.l.b16 %v632
      %v689 = vunpack.c.l.b16 %v646
      %v690 = vunpack.c.l.b16 %v656
      %v691 = vpack.c.b16 %v660, %v659
      %v692 = vpack.c.b16 %v662, %v661
      %v693 = vpack.c.b16 %v664, %v663
      %v694 = vpack.c.b16 %v666, %v665
      %v695 = vpack.c.b16 %v668, %v667
      %v696 = vpack.c.b16 %v670, %v669
      %v697 = vpack.c.b16 %v672, %v671
      %v698 = vpack.c.b16 %v674, %v673
      %v699 = vpack.c.b16 %v676, %v675
      %v700 = vpack.c.b16 %v678, %v677
      %v701 = vpack.c.b16 %v680, %v679
      %v702 = vpack.c.b16 %v682, %v681
      %v703 = vpack.c.b16 %v684, %v683
      %v704 = vpack.c.b16 %v686, %v685
      %v705 = vpack.c.b16 %v688, %v687
      %v706 = vpack.c.b16 %v690, %v689
      %vm707 = vcmask 31744
      %v709 = vsel %vm707, %v691, 0
      %v712 = vsel %vm707, %v692, 0
      %v715 = vsel %vm707, %v693, 0
      %v718 = vsel %vm707, %v694, 0
      %v721 = vsel %vm707, %v695, 0
      %v724 = vsel %vm707, %v696, 0
      %v727 = vsel %vm707, %v697, 0
      %v730 = vsel %vm707, %v698, 0
      %v733 = vsel %vm707, %v699, 0
      %v736 = vsel %vm707, %v700, 0
      %v739 = vsel %vm707, %v701, 0
      %v742 = vsel %vm707, %v702, 0
      %v745 = vsel %vm707, %v703, 0
      %v748 = vsel %vm707, %v704, 0
      %v751 = vsel %vm707, %v705, 0
      %v754 = vsel %vm707, %v706, 0
      %vm756 = vcmask 1041408
      %v758 = vsel %vm756, %v658, 0
      %760 = vmatprep.subr.bf16.mxu0 0
      %761 = vmatpush1.bf16.msra.mxu0 %v758
      %762 = vmatprep.subr.bf16.mxu0 0
      %763 = vmatpush1.bf16.msra.mxu0 0
      %764 = vmatprep.subr.bf16.mxu0 0
      %765 = vmatpush1.bf16.msra.mxu0 0
      %766 = vmatprep.subr.bf16.mxu0 0
      %767 = vmatpush1.bf16.msra.mxu0 0
      %768 = vmatprep.subr.bf16.mxu0 0
      %769 = vmatpush1.bf16.msra.mxu0 0
      %770 = vmatprep.subr.bf16.mxu0 0
      %771 = vmatpush1.bf16.msra.mxu0 0
      %772 = vmatprep.subr.bf16.mxu0 0
      %773 = vmatpush1.bf16.msra.mxu0 0
      %774 = vmatprep.subr.bf16.mxu0 0
      %775 = vmatpush1.bf16.msra.mxu0 0
      %776 = vmatprep.subr.bf16.mxu0 0
      %777 = vmatpush1.bf16.msra.mxu0 0
      %778 = vmatprep.subr.bf16.mxu0 0
      %779 = vmatpush1.bf16.msra.mxu0 0
      %780 = vmatprep.subr.bf16.mxu0 0
      %781 = vmatpush1.bf16.msra.mxu0 0
      %782 = vmatprep.subr.bf16.mxu0 0
      %783 = vmatpush1.bf16.msra.mxu0 0
      %784 = vmatprep.subr.bf16.mxu0 0
      %785 = vmatpush1.bf16.msra.mxu0 0
      %786 = vmatprep.subr.bf16.mxu0 0
      %787 = vmatpush1.bf16.msra.mxu0 0
      %788 = vmatprep.subr.bf16.mxu0 0
      %789 = vmatpush1.bf16.msra.mxu0 0
      %790 = vmatprep.subr.bf16.mxu0 0
      %791 = vmatpush1.bf16.msra.mxu0 0
      %792 = vmatprep.mubr.bf16.mxu0 0
      %793 = vmatmul.mubr.bf16.gmra.mrb[0].mxu0 %v709
      %v794 = vpop.f32.mrb[0].mxu0
      %v795 = vadd.f32 0.0, %v794
      %v796 = vpop.f32.mrb[0].mxu0
      %v797 = vpop.f32.mrb[0].mxu0
      %v798 = vadd.f32 0.0, %v797
      %v799 = vpop.f32.mrb[0].mxu0
      %800 = vmatprep.mubr.bf16.mxu0 0
      %801 = vmatmul.mubr.bf16.gmra.mrb[0].mxu0 %v712
      %v802 = vpop.f32.mrb[0].mxu0
      %v803 = vadd.f32 0.0, %v802
      %v804 = vpop.f32.mrb[0].mxu0
      %v805 = vpop.f32.mrb[0].mxu0
      %v806 = vadd.f32 0.0, %v805
      %v807 = vpop.f32.mrb[0].mxu0
      %808 = vmatprep.mubr.bf16.mxu0 0
      %809 = vmatmul.mubr.bf16.gmra.mrb[0].mxu0 %v715
      %v810 = vpop.f32.mrb[0].mxu0
      %v811 = vadd.f32 0.0, %v810
      %v812 = vpop.f32.mrb[0].mxu0
      %v813 = vpop.f32.mrb[0].mxu0
      %v814 = vadd.f32 0.0, %v813
      %v815 = vpop.f32.mrb[0].mxu0
      %816 = vmatprep.mubr.bf16.mxu0 0
      %817 = vmatmul.mubr.bf16.gmra.mrb[0].mxu0 %v718
      %v818 = vpop.f32.mrb[0].mxu0
      %v819 = vadd.f32 0.0, %v818
      %v820 = vpop.f32.mrb[0].mxu0
      %v821 = vpop.f32.mrb[0].mxu0
      %v822 = vadd.f32 0.0, %v821
      %v823 = vpop.f32.mrb[0].mxu0
      %824 = vmatprep.mubr.bf16.mxu0 0
      %825 = vmatmul.mubr.bf16.gmra.mrb[0].mxu0 %v721
      %v826 = vpop.f32.mrb[0].mxu0
      %v827 = vadd.f32 0.0, %v826
      %v828 = vpop.f32.mrb[0].mxu0
      %v829 = vpop.f32.mrb[0].mxu0
      %v830 = vadd.f32 0.0, %v829
      %v831 = vpop.f32.mrb[0].mxu0
      %832 = vmatprep.mubr.bf16.mxu0 0
      %833 = vmatmul.mubr.bf16.gmra.mrb[0].mxu0 %v724
      %v834 = vpop.f32.mrb[0].mxu0
      %v835 = vadd.f32 0.0, %v834
      %v836 = vpop.f32.mrb[0].mxu0
      %v837 = vpop.f32.mrb[0].mxu0
      %v838 = vadd.f32 0.0, %v837
      %v839 = vpop.f32.mrb[0].mxu0
      %840 = vmatprep.mubr.bf16.mxu0 0
      %841 = vmatmul.mubr.bf16.gmra.mrb[0].mxu0 %v727
      %v842 = vpop.f32.mrb[0].mxu0
      %v843 = vadd.f32 0.0, %v842
      %v844 = vpop.f32.mrb[0].mxu0
      %v845 = vpop.f32.mrb[0].mxu0
      %v846 = vadd.f32 0.0, %v845
      %v847 = vpop.f32.mrb[0].mxu0
      %848 = vmatprep.mubr.bf16.mxu0 0
      %849 = vmatmul.mubr.bf16.gmra.mrb[0].mxu0 %v730
      %v850 = vpop.f32.mrb[0].mxu0
      %v851 = vadd.f32 0.0, %v850
      %v852 = vpop.f32.mrb[0].mxu0
      %v853 = vpop.f32.mrb[0].mxu0
      %v854 = vadd.f32 0.0, %v853
      %v855 = vpop.f32.mrb[0].mxu0
      %856 = vmatprep.mubr.bf16.mxu0 0
      %857 = vmatmul.mubr.bf16.gmra.mrb[0].mxu0 %v733
      %v858 = vpop.f32.mrb[0].mxu0
      %v859 = vadd.f32 0.0, %v858
      %v860 = vpop.f32.mrb[0].mxu0
      %v861 = vpop.f32.mrb[0].mxu0
      %v862 = vadd.f32 0.0, %v861
      %v863 = vpop.f32.mrb[0].mxu0
      %864 = vmatprep.mubr.bf16.mxu0 0
      %865 = vmatmul.mubr.bf16.gmra.mrb[0].mxu0 %v736
      %v866 = vpop.f32.mrb[0].mxu0
      %v867 = vadd.f32 0.0, %v866
      %v868 = vpop.f32.mrb[0].mxu0
      %v869 = vpop.f32.mrb[0].mxu0
      %v870 = vadd.f32 0.0, %v869
      %v871 = vpop.f32.mrb[0].mxu0
      %872 = vmatprep.mubr.bf16.mxu0 0
      %873 = vmatmul.mubr.bf16.gmra.mrb[0].mxu0 %v739
      %v874 = vpop.f32.mrb[0].mxu0
      %v875 = vadd.f32 0.0, %v874
      %v876 = vpop.f32.mrb[0].mxu0
      %v877 = vpop.f32.mrb[0].mxu0
      %v878 = vadd.f32 0.0, %v877
      %v879 = vpop.f32.mrb[0].mxu0
      %880 = vmatprep.mubr.bf16.mxu0 0
      %881 = vmatmul.mubr.bf16.gmra.mrb[0].mxu0 %v742
      %v882 = vpop.f32.mrb[0].mxu0
      %v883 = vadd.f32 0.0, %v882
      %v884 = vpop.f32.mrb[0].mxu0
      %v885 = vpop.f32.mrb[0].mxu0
      %v886 = vadd.f32 0.0, %v885
      %v887 = vpop.f32.mrb[0].mxu0
      %888 = vmatprep.mubr.bf16.mxu0 0
      %889 = vmatmul.mubr.bf16.gmra.mrb[0].mxu0 %v745
      %v890 = vpop.f32.mrb[0].mxu0
      %v891 = vadd.f32 0.0, %v890
      %v892 = vpop.f32.mrb[0].mxu0
      %v893 = vpop.f32.mrb[0].mxu0
      %v894 = vadd.f32 0.0, %v893
      %v895 = vpop.f32.mrb[0].mxu0
      %896 = vmatprep.mubr.bf16.mxu0 0
      %897 = vmatmul.mubr.bf16.gmra.mrb[0].mxu0 %v748
      %v898 = vpop.f32.mrb[0].mxu0
      %v899 = vadd.f32 0.0, %v898
      %v900 = vpop.f32.mrb[0].mxu0
      %v901 = vpop.f32.mrb[0].mxu0
      %v902 = vadd.f32 0.0, %v901
      %v903 = vpop.f32.mrb[0].mxu0
      %904 = vmatprep.mubr.bf16.mxu0 0
      %905 = vmatmul.mubr.bf16.gmra.mrb[0].mxu0 %v751
      %v906 = vpop.f32.mrb[0].mxu0
      %v907 = vadd.f32 0.0, %v906
      %v908 = vpop.f32.mrb[0].mxu0
      %v909 = vpop.f32.mrb[0].mxu0
      %v910 = vadd.f32 0.0, %v909
      %v911 = vpop.f32.mrb[0].mxu0
      %912 = vmatprep.mubr.bf16.mxu0 0
      %913 = vmatmul.mubr.bf16.gmra.mrb[0].mxu0 %v754
      %v914 = vpop.f32.mrb[0].mxu0
      %v915 = vadd.f32 0.0, %v914
      %v916 = vpop.f32.mrb[0].mxu0
      %v917 = vpop.f32.mrb[0].mxu0
      %v918 = vadd.f32 0.0, %v917
      %v919 = vpop.f32.mrb[0].mxu0
      %920 = vdwg.mxu0
      %v953 = vunpack.c.l.b16 %v221
      %v954 = vunpack.c.l.b16 %v222
      %v955 = vunpack.c.l.b16 %v224
      %v956 = vunpack.c.l.b16 %v225
      %v957 = vunpack.c.l.b16 %v227
      %v958 = vunpack.c.l.b16 %v228
      %v959 = vunpack.c.l.b16 %v230
      %v960 = vunpack.c.l.b16 %v231
      %v961 = vunpack.c.l.b16 %v233
      %v962 = vunpack.c.l.b16 %v234
      %v963 = vunpack.c.l.b16 %v236
      %v964 = vunpack.c.l.b16 %v237
      %v965 = vunpack.c.l.b16 %v239
      %v966 = vunpack.c.l.b16 %v240
      %v967 = vunpack.c.l.b16 %v242
      %v968 = vunpack.c.l.b16 %v243
      %v969 = vunpack.c.l.b16 %v245
      %v970 = vunpack.c.l.b16 %v246
      %v971 = vunpack.c.l.b16 %v248
      %v972 = vunpack.c.l.b16 %v249
      %v973 = vunpack.c.l.b16 %v251
      %v974 = vunpack.c.l.b16 %v252
      %v975 = vunpack.c.l.b16 %v254
      %v976 = vunpack.c.l.b16 %v255
      %v977 = vunpack.c.l.b16 %v257
      %v978 = vunpack.c.l.b16 %v258
      %v979 = vunpack.c.l.b16 %v260
      %v980 = vunpack.c.l.b16 %v261
      %v981 = vunpack.c.l.b16 %v263
      %v982 = vunpack.c.l.b16 %v264
      %v983 = vunpack.c.l.b16 %v266
      %v984 = vunpack.c.l.b16 %v267
      %v985 = vpack.c.b16 %v954, %v953
      %v986 = vpack.c.b16 %v956, %v955
      %v987 = vpack.c.b16 %v958, %v957
      %v988 = vpack.c.b16 %v960, %v959
      %v989 = vpack.c.b16 %v962, %v961
      %v990 = vpack.c.b16 %v964, %v963
      %v991 = vpack.c.b16 %v966, %v965
      %v992 = vpack.c.b16 %v968, %v967
      %v993 = vpack.c.b16 %v970, %v969
      %v994 = vpack.c.b16 %v972, %v971
      %v995 = vpack.c.b16 %v974, %v973
      %v996 = vpack.c.b16 %v976, %v975
      %v997 = vpack.c.b16 %v978, %v977
      %v998 = vpack.c.b16 %v980, %v979
      %v999 = vpack.c.b16 %v982, %v981
      %v1000 = vpack.c.b16 %v984, %v983
      %v1002 = vsel %vm707, %v985, 0
      %v1005 = vsel %vm707, %v986, 0
      %v1008 = vsel %vm707, %v987, 0
      %v1011 = vsel %vm707, %v988, 0
      %v1014 = vsel %vm707, %v989, 0
      %v1017 = vsel %vm707, %v990, 0
      %v1020 = vsel %vm707, %v991, 0
      %v1023 = vsel %vm707, %v992, 0
      %v1026 = vsel %vm707, %v993, 0
      %v1029 = vsel %vm707, %v994, 0
      %v1032 = vsel %vm707, %v995, 0
      %v1035 = vsel %vm707, %v996, 0
      %v1038 = vsel %vm707, %v997, 0
      %v1041 = vsel %vm707, %v998, 0
      %v1044 = vsel %vm707, %v999, 0
      %v1047 = vsel %vm707, %v1000, 0
      %v1050 = vsel %vm756, %v269, 0
      %1052 = vmatprep.subr.bf16.mxu0 0
      %1053 = vmatpush1.bf16.msra.mxu0 %v1050
      %1054 = vmatprep.subr.bf16.mxu0 0
      %1055 = vmatpush1.bf16.msra.mxu0 0
      %1056 = vmatprep.subr.bf16.mxu0 0
      %1057 = vmatpush1.bf16.msra.mxu0 0
      %1058 = vmatprep.subr.bf16.mxu0 0
      %1059 = vmatpush1.bf16.msra.mxu0 0
      %1060 = vmatprep.subr.bf16.mxu0 0
      %1061 = vmatpush1.bf16.msra.mxu0 0
      %1062 = vmatprep.subr.bf16.mxu0 0
      %1063 = vmatpush1.bf16.msra.mxu0 0
      %1064 = vmatprep.subr.bf16.mxu0 0
      %1065 = vmatpush1.bf16.msra.mxu0 0
      %1066 = vmatprep.subr.bf16.mxu0 0
      %1067 = vmatpush1.bf16.msra.mxu0 0
      %1068 = vmatprep.subr.bf16.mxu0 0
      %1069 = vmatpush1.bf16.msra.mxu0 0
      %1070 = vmatprep.subr.bf16.mxu0 0
      %1071 = vmatpush1.bf16.msra.mxu0 0
      %1072 = vmatprep.subr.bf16.mxu0 0
      %1073 = vmatpush1.bf16.msra.mxu0 0
      %1074 = vmatprep.subr.bf16.mxu0 0
      %1075 = vmatpush1.bf16.msra.mxu0 0
      %1076 = vmatprep.subr.bf16.mxu0 0
      %1077 = vmatpush1.bf16.msra.mxu0 0
      %1078 = vmatprep.subr.bf16.mxu0 0
      %1079 = vmatpush1.bf16.msra.mxu0 0
      %1080 = vmatprep.subr.bf16.mxu0 0
      %1081 = vmatpush1.bf16.msra.mxu0 0
      %1082 = vmatprep.subr.bf16.mxu0 0
      %1083 = vmatpush1.bf16.msra.mxu0 0
      %1084 = vmatprep.mubr.bf16.mxu0 0
      %1085 = vmatmul.mubr.bf16.gmra.mrb[0].mxu0 %v1002
      %v1086 = vpop.f32.mrb[0].mxu0
      %v1087 = vadd.f32 %v795, %v1086
      %v1088 = vpop.f32.mrb[0].mxu0
      %v1089 = vpop.f32.mrb[0].mxu0
      %v1090 = vadd.f32 %v798, %v1089
      %v1091 = vpop.f32.mrb[0].mxu0
      %1092 = vmatprep.mubr.bf16.mxu0 0
      %1093 = vmatmul.mubr.bf16.gmra.mrb[0].mxu0 %v1005
      %v1094 = vpop.f32.mrb[0].mxu0
      %v1095 = vadd.f32 %v803, %v1094
      %v1096 = vpop.f32.mrb[0].mxu0
      %v1097 = vpop.f32.mrb[0].mxu0
      %v1098 = vadd.f32 %v806, %v1097
      %v1099 = vpop.f32.mrb[0].mxu0
      %1100 = vmatprep.mubr.bf16.mxu0 0
      %1101 = vmatmul.mubr.bf16.gmra.mrb[0].mxu0 %v1008
      %v1102 = vpop.f32.mrb[0].mxu0
      %v1103 = vadd.f32 %v811, %v1102
      %v1104 = vpop.f32.mrb[0].mxu0
      %v1105 = vpop.f32.mrb[0].mxu0
      %v1106 = vadd.f32 %v814, %v1105
      %v1107 = vpop.f32.mrb[0].mxu0
      %1108 = vmatprep.mubr.bf16.mxu0 0
      %1109 = vmatmul.mubr.bf16.gmra.mrb[0].mxu0 %v1011
      %v1110 = vpop.f32.mrb[0].mxu0
      %v1111 = vadd.f32 %v819, %v1110
      %v1112 = vpop.f32.mrb[0].mxu0
      %v1113 = vpop.f32.mrb[0].mxu0
      %v1114 = vadd.f32 %v822, %v1113
      %v1115 = vpop.f32.mrb[0].mxu0
      %1116 = vmatprep.mubr.bf16.mxu0 0
      %1117 = vmatmul.mubr.bf16.gmra.mrb[0].mxu0 %v1014
      %v1118 = vpop.f32.mrb[0].mxu0
      %v1119 = vadd.f32 %v827, %v1118
      %v1120 = vpop.f32.mrb[0].mxu0
      %v1121 = vpop.f32.mrb[0].mxu0
      %v1122 = vadd.f32 %v830, %v1121
      %v1123 = vpop.f32.mrb[0].mxu0
      %1124 = vmatprep.mubr.bf16.mxu0 0
      %1125 = vmatmul.mubr.bf16.gmra.mrb[0].mxu0 %v1017
      %v1126 = vpop.f32.mrb[0].mxu0
      %v1127 = vadd.f32 %v835, %v1126
      %v1128 = vpop.f32.mrb[0].mxu0
      %v1129 = vpop.f32.mrb[0].mxu0
      %v1130 = vadd.f32 %v838, %v1129
      %v1131 = vpop.f32.mrb[0].mxu0
      %1132 = vmatprep.mubr.bf16.mxu0 0
      %1133 = vmatmul.mubr.bf16.gmra.mrb[0].mxu0 %v1020
      %v1134 = vpop.f32.mrb[0].mxu0
      %v1135 = vadd.f32 %v843, %v1134
      %v1136 = vpop.f32.mrb[0].mxu0
      %v1137 = vpop.f32.mrb[0].mxu0
      %v1138 = vadd.f32 %v846, %v1137
      %v1139 = vpop.f32.mrb[0].mxu0
      %1140 = vmatprep.mubr.bf16.mxu0 0
      %1141 = vmatmul.mubr.bf16.gmra.mrb[0].mxu0 %v1023
      %v1142 = vpop.f32.mrb[0].mxu0
      %v1143 = vadd.f32 %v851, %v1142
      %v1144 = vpop.f32.mrb[0].mxu0
      %v1145 = vpop.f32.mrb[0].mxu0
      %v1146 = vadd.f32 %v854, %v1145
      %v1147 = vpop.f32.mrb[0].mxu0
      %1148 = vmatprep.mubr.bf16.mxu0 0
      %1149 = vmatmul.mubr.bf16.gmra.mrb[0].mxu0 %v1026
      %v1150 = vpop.f32.mrb[0].mxu0
      %v1151 = vadd.f32 %v859, %v1150
      %v1152 = vpop.f32.mrb[0].mxu0
      %v1153 = vpop.f32.mrb[0].mxu0
      %v1154 = vadd.f32 %v862, %v1153
      %v1155 = vpop.f32.mrb[0].mxu0
      %1156 = vmatprep.mubr.bf16.mxu0 0
      %1157 = vmatmul.mubr.bf16.gmra.mrb[0].mxu0 %v1029
      %v1158 = vpop.f32.mrb[0].mxu0
      %v1159 = vadd.f32 %v867, %v1158
      %v1160 = vpop.f32.mrb[0].mxu0
      %v1161 = vpop.f32.mrb[0].mxu0
      %v1162 = vadd.f32 %v870, %v1161
      %v1163 = vpop.f32.mrb[0].mxu0
      %1164 = vmatprep.mubr.bf16.mxu0 0
      %1165 = vmatmul.mubr.bf16.gmra.mrb[0].mxu0 %v1032
      %v1166 = vpop.f32.mrb[0].mxu0
      %v1167 = vadd.f32 %v875, %v1166
      %v1168 = vpop.f32.mrb[0].mxu0
      %v1169 = vpop.f32.mrb[0].mxu0
      %v1170 = vadd.f32 %v878, %v1169
      %v1171 = vpop.f32.mrb[0].mxu0
      %1172 = vmatprep.mubr.bf16.mxu0 0
      %1173 = vmatmul.mubr.bf16.gmra.mrb[0].mxu0 %v1035
      %v1174 = vpop.f32.mrb[0].mxu0
      %v1175 = vadd.f32 %v883, %v1174
      %v1176 = vpop.f32.mrb[0].mxu0
      %v1177 = vpop.f32.mrb[0].mxu0
      %v1178 = vadd.f32 %v886, %v1177
      %v1179 = vpop.f32.mrb[0].mxu0
      %1180 = vmatprep.mubr.bf16.mxu0 0
      %1181 = vmatmul.mubr.bf16.gmra.mrb[0].mxu0 %v1038
      %v1182 = vpop.f32.mrb[0].mxu0
      %v1183 = vadd.f32 %v891, %v1182
      %v1184 = vpop.f32.mrb[0].mxu0
      %v1185 = vpop.f32.mrb[0].mxu0
      %v1186 = vadd.f32 %v894, %v1185
      %v1187 = vpop.f32.mrb[0].mxu0
      %1188 = vmatprep.mubr.bf16.mxu0 0
      %1189 = vmatmul.mubr.bf16.gmra.mrb[0].mxu0 %v1041
      %v1190 = vpop.f32.mrb[0].mxu0
      %v1191 = vadd.f32 %v899, %v1190
      %v1192 = vpop.f32.mrb[0].mxu0
      %v1193 = vpop.f32.mrb[0].mxu0
      %v1194 = vadd.f32 %v902, %v1193
      %v1195 = vpop.f32.mrb[0].mxu0
      %1196 = vmatprep.mubr.bf16.mxu0 0
      %1197 = vmatmul.mubr.bf16.gmra.mrb[0].mxu0 %v1044
      %v1198 = vpop.f32.mrb[0].mxu0
      %v1199 = vadd.f32 %v907, %v1198
      %v1200 = vpop.f32.mrb[0].mxu0
      %v1201 = vpop.f32.mrb[0].mxu0
      %v1202 = vadd.f32 %v910, %v1201
      %v1203 = vpop.f32.mrb[0].mxu0
      %1204 = vmatprep.mubr.bf16.mxu0 0
      %1205 = vmatmul.mubr.bf16.gmra.mrb[0].mxu0 %v1047
      %v1206 = vpop.f32.mrb[0].mxu0
      %v1207 = vadd.f32 %v915, %v1206
      %v1208 = vpop.f32.mrb[0].mxu0
      %v1209 = vpop.f32.mrb[0].mxu0
      %v1210 = vadd.f32 %v918, %v1209
      %v1211 = vpop.f32.mrb[0].mxu0
      %1212 = vdwg.mxu0
      %vm1229 = vcmask 1042432
      %vm1230 = vcmask 1046532
      %vm1231 = vmor %vm1229, %vm1230
      %v1232 = vrot.slane %v221, 5
      %v1233 = vrot.slane %v1232, 4
      %v1234 = vrot.slane %v222, 5
      %v1235 = vsel %vm1231, %v1233, %v1234
      %v1236 = vrot.slane %v1234, 4
      %v1237 = vrot.slane %v223, 5
      %v1238 = vsel %vm1231, %v1236, %v1237
      %v1239 = vrot.slane %v224, 5
      %v1240 = vrot.slane %v1239, 4
      %v1241 = vrot.slane %v225, 5
      %v1242 = vsel %vm1231, %v1240, %v1241
      %v1243 = vrot.slane %v1241, 4
      %v1244 = vrot.slane %v226, 5
      %v1245 = vsel %vm1231, %v1243, %v1244
      %v1246 = vrot.slane %v227, 5
      %v1247 = vrot.slane %v1246, 4
      %v1248 = vrot.slane %v228, 5
      %v1249 = vsel %vm1231, %v1247, %v1248
      %v1250 = vrot.slane %v1248, 4
      %v1251 = vrot.slane %v229, 5
      %v1252 = vsel %vm1231, %v1250, %v1251
      %v1253 = vrot.slane %v230, 5
      %v1254 = vrot.slane %v1253, 4
      %v1255 = vrot.slane %v231, 5
      %v1256 = vsel %vm1231, %v1254, %v1255
      %v1257 = vrot.slane %v1255, 4
      %v1258 = vrot.slane %v232, 5
      %v1259 = vsel %vm1231, %v1257, %v1258
      %v1260 = vrot.slane %v233, 5
      %v1261 = vrot.slane %v1260, 4
      %v1262 = vrot.slane %v234, 5
      %v1263 = vsel %vm1231, %v1261, %v1262
      %v1264 = vrot.slane %v1262, 4
      %v1265 = vrot.slane %v235, 5
      %v1266 = vsel %vm1231, %v1264, %v1265
      %v1267 = vrot.slane %v236, 5
      %v1268 = vrot.slane %v1267, 4
      %v1269 = vrot.slane %v237, 5
      %v1270 = vsel %vm1231, %v1268, %v1269
      %v1271 = vrot.slane %v1269, 4
      %v1272 = vrot.slane %v238, 5
      %v1273 = vsel %vm1231, %v1271, %v1272
      %v1274 = vrot.slane %v239, 5
      %v1275 = vrot.slane %v1274, 4
      %v1276 = vrot.slane %v240, 5
      %v1277 = vsel %vm1231, %v1275, %v1276
      %v1278 = vrot.slane %v1276, 4
      %v1279 = vrot.slane %v241, 5
      %v1280 = vsel %vm1231, %v1278, %v1279
      %v1281 = vrot.slane %v242, 5
      %v1282 = vrot.slane %v1281, 4
      %v1283 = vrot.slane %v243, 5
      %v1284 = vsel %vm1231, %v1282, %v1283
      %v1285 = vrot.slane %v1283, 4
      %v1286 = vrot.slane %v244, 5
      %v1287 = vsel %vm1231, %v1285, %v1286
      %v1288 = vrot.slane %v245, 5
      %v1289 = vrot.slane %v1288, 4
      %v1290 = vrot.slane %v246, 5
      %v1291 = vsel %vm1231, %v1289, %v1290
      %v1292 = vrot.slane %v1290, 4
      %v1293 = vrot.slane %v247, 5
      %v1294 = vsel %vm1231, %v1292, %v1293
      %v1295 = vrot.slane %v248, 5
      %v1296 = vrot.slane %v1295, 4
      %v1297 = vrot.slane %v249, 5
      %v1298 = vsel %vm1231, %v1296, %v1297
      %v1299 = vrot.slane %v1297, 4
      %v1300 = vrot.slane %v250, 5
      %v1301 = vsel %vm1231, %v1299, %v1300
      %v1302 = vrot.slane %v251, 5
      %v1303 = vrot.slane %v1302, 4
      %v1304 = vrot.slane %v252, 5
      %v1305 = vsel %vm1231, %v1303, %v1304
      %v1306 = vrot.slane %v1304, 4
      %v1307 = vrot.slane %v253, 5
      %v1308 = vsel %vm1231, %v1306, %v1307
      %v1309 = vrot.slane %v254, 5
      %v1310 = vrot.slane %v1309, 4
      %v1311 = vrot.slane %v255, 5
      %v1312 = vsel %vm1231, %v1310, %v1311
      %v1313 = vrot.slane %v1311, 4
      %v1314 = vrot.slane %v256, 5
      %v1315 = vsel %vm1231, %v1313, %v1314
      %v1316 = vrot.slane %v257, 5
      %v1317 = vrot.slane %v1316, 4
      %v1318 = vrot.slane %v258, 5
      %v1319 = vsel %vm1231, %v1317, %v1318
      %v1320 = vrot.slane %v1318, 4
      %v1321 = vrot.slane %v259, 5
      %v1322 = vsel %vm1231, %v1320, %v1321
      %v1323 = vrot.slane %v260, 5
      %v1324 = vrot.slane %v1323, 4
      %v1325 = vrot.slane %v261, 5
      %v1326 = vsel %vm1231, %v1324, %v1325
      %v1327 = vrot.slane %v1325, 4
      %v1328 = vrot.slane %v262, 5
      %v1329 = vsel %vm1231, %v1327, %v1328
      %v1330 = vrot.slane %v263, 5
      %v1331 = vrot.slane %v1330, 4
      %v1332 = vrot.slane %v264, 5
      %v1333 = vsel %vm1231, %v1331, %v1332
      %v1334 = vrot.slane %v1332, 4
      %v1335 = vrot.slane %v265, 5
      %v1336 = vsel %vm1231, %v1334, %v1335
      %v1337 = vrot.slane %v266, 5
      %v1338 = vrot.slane %v1337, 4
      %v1339 = vrot.slane %v267, 5
      %v1340 = vsel %vm1231, %v1338, %v1339
      %v1341 = vrot.slane %v1339, 4
      %v1342 = vrot.slane %v268, 5
      %v1343 = vsel %vm1231, %v1341, %v1342
      %s1344 = scalar_lea.vmem %s204, 4
      %v1345 = vld [vmem:[%s1344] sm:$0x3]
      %v1346 = vunpack.c.l.b16 %v1235
      %v1347 = vunpack.c.l.b16 %v1238
      %v1348 = vunpack.c.l.b16 %v1242
      %v1349 = vunpack.c.l.b16 %v1245
      %v1350 = vunpack.c.l.b16 %v1249
      %v1351 = vunpack.c.l.b16 %v1252
      %v1352 = vunpack.c.l.b16 %v1256
      %v1353 = vunpack.c.l.b16 %v1259
      %v1354 = vunpack.c.l.b16 %v1263
      %v1355 = vunpack.c.l.b16 %v1266
      %v1356 = vunpack.c.l.b16 %v1270
      %v1357 = vunpack.c.l.b16 %v1273
      %v1358 = vunpack.c.l.b16 %v1277
      %v1359 = vunpack.c.l.b16 %v1280
      %v1360 = vunpack.c.l.b16 %v1284
      %v1361 = vunpack.c.l.b16 %v1287
      %v1362 = vunpack.c.l.b16 %v1291
      %v1363 = vunpack.c.l.b16 %v1294
      %v1364 = vunpack.c.l.b16 %v1298
      %v1365 = vunpack.c.l.b16 %v1301
      %v1366 = vunpack.c.l.b16 %v1305
      %v1367 = vunpack.c.l.b16 %v1308
      %v1368 = vunpack.c.l.b16 %v1312
      %v1369 = vunpack.c.l.b16 %v1315
      %v1370 = vunpack.c.l.b16 %v1319
      %v1371 = vunpack.c.l.b16 %v1322
      %v1372 = vunpack.c.l.b16 %v1326
      %v1373 = vunpack.c.l.b16 %v1329
      %v1374 = vunpack.c.l.b16 %v1333
      %v1375 = vunpack.c.l.b16 %v1336
      %v1376 = vunpack.c.l.b16 %v1340
      %v1377 = vunpack.c.l.b16 %v1343
      %v1378 = vpack.c.b16 %v1347, %v1346
      %v1379 = vpack.c.b16 %v1349, %v1348
      %v1380 = vpack.c.b16 %v1351, %v1350
      %v1381 = vpack.c.b16 %v1353, %v1352
      %v1382 = vpack.c.b16 %v1355, %v1354
      %v1383 = vpack.c.b16 %v1357, %v1356
      %v1384 = vpack.c.b16 %v1359, %v1358
      %v1385 = vpack.c.b16 %v1361, %v1360
      %v1386 = vpack.c.b16 %v1363, %v1362
      %v1387 = vpack.c.b16 %v1365, %v1364
      %v1388 = vpack.c.b16 %v1367, %v1366
      %v1389 = vpack.c.b16 %v1369, %v1368
      %v1390 = vpack.c.b16 %v1371, %v1370
      %v1391 = vpack.c.b16 %v1373, %v1372
      %v1392 = vpack.c.b16 %v1375, %v1374
      %v1393 = vpack.c.b16 %v1377, %v1376
      %v1395 = vsel %vm707, %v1378, 0
      %v1398 = vsel %vm707, %v1379, 0
      %v1401 = vsel %vm707, %v1380, 0
      %v1404 = vsel %vm707, %v1381, 0
      %v1407 = vsel %vm707, %v1382, 0
      %v1410 = vsel %vm707, %v1383, 0
      %v1413 = vsel %vm707, %v1384, 0
      %v1416 = vsel %vm707, %v1385, 0
      %v1419 = vsel %vm707, %v1386, 0
      %v1422 = vsel %vm707, %v1387, 0
      %v1425 = vsel %vm707, %v1388, 0
      %v1428 = vsel %vm707, %v1389, 0
      %v1431 = vsel %vm707, %v1390, 0
      %v1434 = vsel %vm707, %v1391, 0
      %v1437 = vsel %vm707, %v1392, 0
      %v1440 = vsel %vm707, %v1393, 0
      %v1443 = vsel %vm756, %v1345, 0
      %1445 = vmatprep.subr.bf16.mxu0 0
      %1446 = vmatpush1.bf16.msra.mxu0 %v1443
      %1447 = vmatprep.subr.bf16.mxu0 0
      %1448 = vmatpush1.bf16.msra.mxu0 0
      %1449 = vmatprep.subr.bf16.mxu0 0
      %1450 = vmatpush1.bf16.msra.mxu0 0
      %1451 = vmatprep.subr.bf16.mxu0 0
      %1452 = vmatpush1.bf16.msra.mxu0 0
      %1453 = vmatprep.subr.bf16.mxu0 0
      %1454 = vmatpush1.bf16.msra.mxu0 0
      %1455 = vmatprep.subr.bf16.mxu0 0
      %1456 = vmatpush1.bf16.msra.mxu0 0
      %1457 = vmatprep.subr.bf16.mxu0 0
      %1458 = vmatpush1.bf16.msra.mxu0 0
      %1459 = vmatprep.subr.bf16.mxu0 0
      %1460 = vmatpush1.bf16.msra.mxu0 0
      %1461 = vmatprep.subr.bf16.mxu0 0
      %1462 = vmatpush1.bf16.msra.mxu0 0
      %1463 = vmatprep.subr.bf16.mxu0 0
      %1464 = vmatpush1.bf16.msra.mxu0 0
      %1465 = vmatprep.subr.bf16.mxu0 0
      %1466 = vmatpush1.bf16.msra.mxu0 0
      %1467 = vmatprep.subr.bf16.mxu0 0
      %1468 = vmatpush1.bf16.msra.mxu0 0
      %1469 = vmatprep.subr.bf16.mxu0 0
      %1470 = vmatpush1.bf16.msra.mxu0 0
      %1471 = vmatprep.subr.bf16.mxu0 0
      %1472 = vmatpush1.bf16.msra.mxu0 0
      %1473 = vmatprep.subr.bf16.mxu0 0
      %1474 = vmatpush1.bf16.msra.mxu0 0
      %1475 = vmatprep.subr.bf16.mxu0 0
      %1476 = vmatpush1.bf16.msra.mxu0 0
      %1477 = vmatprep.mubr.bf16.mxu0 0
      %1478 = vmatmul.mubr.bf16.gmra.mrb[0].mxu0 %v1395
      %v1479 = vpop.f32.mrb[0].mxu0
      %v1480 = vadd.f32 0.0, %v1479
      %v1481 = vpop.f32.mrb[0].mxu0
      %v1482 = vpop.f32.mrb[0].mxu0
      %v1483 = vadd.f32 0.0, %v1482
      %v1484 = vpop.f32.mrb[0].mxu0
      %1485 = vmatprep.mubr.bf16.mxu0 0
      %1486 = vmatmul.mubr.bf16.gmra.mrb[0].mxu0 %v1398
      %v1487 = vpop.f32.mrb[0].mxu0
      %v1488 = vadd.f32 0.0, %v1487
      %v1489 = vpop.f32.mrb[0].mxu0
      %v1490 = vpop.f32.mrb[0].mxu0
      %v1491 = vadd.f32 0.0, %v1490
      %v1492 = vpop.f32.mrb[0].mxu0
      %1493 = vmatprep.mubr.bf16.mxu0 0
      %1494 = vmatmul.mubr.bf16.gmra.mrb[0].mxu0 %v1401
      %v1495 = vpop.f32.mrb[0].mxu0
      %v1496 = vadd.f32 0.0, %v1495
      %v1497 = vpop.f32.mrb[0].mxu0
      %v1498 = vpop.f32.mrb[0].mxu0
      %v1499 = vadd.f32 0.0, %v1498
      %v1500 = vpop.f32.mrb[0].mxu0
      %1501 = vmatprep.mubr.bf16.mxu0 0
      %1502 = vmatmul.mubr.bf16.gmra.mrb[0].mxu0 %v1404
      %v1503 = vpop.f32.mrb[0].mxu0
      %v1504 = vadd.f32 0.0, %v1503
      %v1505 = vpop.f32.mrb[0].mxu0
      %v1506 = vpop.f32.mrb[0].mxu0
      %v1507 = vadd.f32 0.0, %v1506
      %v1508 = vpop.f32.mrb[0].mxu0
      %1509 = vmatprep.mubr.bf16.mxu0 0
      %1510 = vmatmul.mubr.bf16.gmra.mrb[0].mxu0 %v1407
      %v1511 = vpop.f32.mrb[0].mxu0
      %v1512 = vadd.f32 0.0, %v1511
      %v1513 = vpop.f32.mrb[0].mxu0
      %v1514 = vpop.f32.mrb[0].mxu0
      %v1515 = vadd.f32 0.0, %v1514
      %v1516 = vpop.f32.mrb[0].mxu0
      %1517 = vmatprep.mubr.bf16.mxu0 0
      %1518 = vmatmul.mubr.bf16.gmra.mrb[0].mxu0 %v1410
      %v1519 = vpop.f32.mrb[0].mxu0
      %v1520 = vadd.f32 0.0, %v1519
      %v1521 = vpop.f32.mrb[0].mxu0
      %v1522 = vpop.f32.mrb[0].mxu0
      %v1523 = vadd.f32 0.0, %v1522
      %v1524 = vpop.f32.mrb[0].mxu0
      %1525 = vmatprep.mubr.bf16.mxu0 0
      %1526 = vmatmul.mubr.bf16.gmra.mrb[0].mxu0 %v1413
      %v1527 = vpop.f32.mrb[0].mxu0
      %v1528 = vadd.f32 0.0, %v1527
      %v1529 = vpop.f32.mrb[0].mxu0
      %v1530 = vpop.f32.mrb[0].mxu0
      %v1531 = vadd.f32 0.0, %v1530
      %v1532 = vpop.f32.mrb[0].mxu0
      %1533 = vmatprep.mubr.bf16.mxu0 0
      %1534 = vmatmul.mubr.bf16.gmra.mrb[0].mxu0 %v1416
      %v1535 = vpop.f32.mrb[0].mxu0
      %v1536 = vadd.f32 0.0, %v1535
      %v1537 = vpop.f32.mrb[0].mxu0
      %v1538 = vpop.f32.mrb[0].mxu0
      %v1539 = vadd.f32 0.0, %v1538
      %v1540 = vpop.f32.mrb[0].mxu0
      %1541 = vmatprep.mubr.bf16.mxu0 0
      %1542 = vmatmul.mubr.bf16.gmra.mrb[0].mxu0 %v1419
      %v1543 = vpop.f32.mrb[0].mxu0
      %v1544 = vadd.f32 0.0, %v1543
      %v1545 = vpop.f32.mrb[0].mxu0
      %v1546 = vpop.f32.mrb[0].mxu0
      %v1547 = vadd.f32 0.0, %v1546
      %v1548 = vpop.f32.mrb[0].mxu0
      %1549 = vmatprep.mubr.bf16.mxu0 0
      %1550 = vmatmul.mubr.bf16.gmra.mrb[0].mxu0 %v1422
      %v1551 = vpop.f32.mrb[0].mxu0
      %v1552 = vadd.f32 0.0, %v1551
      %v1553 = vpop.f32.mrb[0].mxu0
      %v1554 = vpop.f32.mrb[0].mxu0
      %v1555 = vadd.f32 0.0, %v1554
      %v1556 = vpop.f32.mrb[0].mxu0
      %1557 = vmatprep.mubr.bf16.mxu0 0
      %1558 = vmatmul.mubr.bf16.gmra.mrb[0].mxu0 %v1425
      %v1559 = vpop.f32.mrb[0].mxu0
      %v1560 = vadd.f32 0.0, %v1559
      %v1561 = vpop.f32.mrb[0].mxu0
      %v1562 = vpop.f32.mrb[0].mxu0
      %v1563 = vadd.f32 0.0, %v1562
      %v1564 = vpop.f32.mrb[0].mxu0
      %1565 = vmatprep.mubr.bf16.mxu0 0
      %1566 = vmatmul.mubr.bf16.gmra.mrb[0].mxu0 %v1428
      %v1567 = vpop.f32.mrb[0].mxu0
      %v1568 = vadd.f32 0.0, %v1567
      %v1569 = vpop.f32.mrb[0].mxu0
      %v1570 = vpop.f32.mrb[0].mxu0
      %v1571 = vadd.f32 0.0, %v1570
      %v1572 = vpop.f32.mrb[0].mxu0
      %1573 = vmatprep.mubr.bf16.mxu0 0
      %1574 = vmatmul.mubr.bf16.gmra.mrb[0].mxu0 %v1431
      %v1575 = vpop.f32.mrb[0].mxu0
      %v1576 = vadd.f32 0.0, %v1575
      %v1577 = vpop.f32.mrb[0].mxu0
      %v1578 = vpop.f32.mrb[0].mxu0
      %v1579 = vadd.f32 0.0, %v1578
      %v1580 = vpop.f32.mrb[0].mxu0
      %1581 = vmatprep.mubr.bf16.mxu0 0
      %1582 = vmatmul.mubr.bf16.gmra.mrb[0].mxu0 %v1434
      %v1583 = vpop.f32.mrb[0].mxu0
      %v1584 = vadd.f32 0.0, %v1583
      %v1585 = vpop.f32.mrb[0].mxu0
      %v1586 = vpop.f32.mrb[0].mxu0
      %v1587 = vadd.f32 0.0, %v1586
      %v1588 = vpop.f32.mrb[0].mxu0
      %1589 = vmatprep.mubr.bf16.mxu0 0
      %1590 = vmatmul.mubr.bf16.gmra.mrb[0].mxu0 %v1437
      %v1591 = vpop.f32.mrb[0].mxu0
      %v1592 = vadd.f32 0.0, %v1591
      %v1593 = vpop.f32.mrb[0].mxu0
      %v1594 = vpop.f32.mrb[0].mxu0
      %v1595 = vadd.f32 0.0, %v1594
      %v1596 = vpop.f32.mrb[0].mxu0
      %1597 = vmatprep.mubr.bf16.mxu0 0
      %1598 = vmatmul.mubr.bf16.gmra.mrb[0].mxu0 %v1440
      %v1599 = vpop.f32.mrb[0].mxu0
      %v1600 = vadd.f32 0.0, %v1599
      %v1601 = vpop.f32.mrb[0].mxu0
      %v1602 = vpop.f32.mrb[0].mxu0
      %v1603 = vadd.f32 0.0, %v1602
      %v1604 = vpop.f32.mrb[0].mxu0
      %1605 = vdwg.mxu0
      %v1606 = vadd.f32 %v1087, %v1480
      %v1607 = vadd.f32 %v1090, %v1483
      %v1608 = vadd.f32 %v1095, %v1488
      %v1609 = vadd.f32 %v1098, %v1491
      %v1610 = vadd.f32 %v1103, %v1496
      %v1611 = vadd.f32 %v1106, %v1499
      %v1612 = vadd.f32 %v1111, %v1504
      %v1613 = vadd.f32 %v1114, %v1507
      %v1614 = vadd.f32 %v1119, %v1512
      %v1615 = vadd.f32 %v1122, %v1515
      %v1616 = vadd.f32 %v1127, %v1520
      %v1617 = vadd.f32 %v1130, %v1523
      %v1618 = vadd.f32 %v1135, %v1528
      %v1619 = vadd.f32 %v1138, %v1531
      %v1620 = vadd.f32 %v1143, %v1536
      %v1621 = vadd.f32 %v1146, %v1539
      %v1622 = vadd.f32 %v1151, %v1544
      %v1623 = vadd.f32 %v1154, %v1547
      %v1624 = vadd.f32 %v1159, %v1552
      %v1625 = vadd.f32 %v1162, %v1555
      %v1626 = vadd.f32 %v1167, %v1560
      %v1627 = vadd.f32 %v1170, %v1563
      %v1628 = vadd.f32 %v1175, %v1568
      %v1629 = vadd.f32 %v1178, %v1571
      %v1630 = vadd.f32 %v1183, %v1576
      %v1631 = vadd.f32 %v1186, %v1579
      %v1632 = vadd.f32 %v1191, %v1584
      %v1633 = vadd.f32 %v1194, %v1587
      %v1634 = vadd.f32 %v1199, %v1592
      %v1635 = vadd.f32 %v1202, %v1595
      %v1636 = vadd.f32 %v1207, %v1600
      %v1637 = vadd.f32 %v1210, %v1603
      %s1638 = sadd.s32 %s217, 1
      %s1639 = smul.u32 %s1638, 3
      %s1640 = smul.addr %s1639, 4
      %s1641 = scalar_lea.vmem %s199, %s1640
      %v1642 = vld [vmem:[%s1641] sm:$0xf]
      %v1643 = vld [vmem:[%s1641 + $0x4] sm:$0xf]
      %v1644 = vld [vmem:[%s1641 + $0x8] sm:$0x1]
      %v1645 = vld [vmem:[%s1641 + $0xc] sm:$0xf]
      %v1646 = vld [vmem:[%s1641 + $0x10] sm:$0xf]
      %v1647 = vld [vmem:[%s1641 + $0x14] sm:$0x1]
      %v1648 = vld [vmem:[%s1641 + $0x18] sm:$0xf]
      %v1649 = vld [vmem:[%s1641 + $0x1c] sm:$0xf]
      %v1650 = vld [vmem:[%s1641 + $0x20] sm:$0x1]
      %v1651 = vld [vmem:[%s1641 + $0x24] sm:$0xf]
      %v1652 = vld [vmem:[%s1641 + $0x28] sm:$0xf]
      %v1653 = vld [vmem:[%s1641 + $0x2c] sm:$0x1]
      %v1654 = vld [vmem:[%s1641 + $0x30] sm:$0xf]
      %v1655 = vld [vmem:[%s1641 + $0x34] sm:$0xf]
      %v1656 = vld [vmem:[%s1641 + $0x38] sm:$0x1]
      %v1657 = vld [vmem:[%s1641 + $0x3c] sm:$0xf]
      %v1658 = vld [vmem:[%s1641 + $0x40] sm:$0xf]
      %v1659 = vld [vmem:[%s1641 + $0x44] sm:$0x1]
      %v1660 = vld [vmem:[%s1641 + $0x48] sm:$0xf]
      %v1661 = vld [vmem:[%s1641 + $0x4c] sm:$0xf]
      %v1662 = vld [vmem:[%s1641 + $0x50] sm:$0x1]
      %v1663 = vld [vmem:[%s1641 + $0x54] sm:$0xf]
      %v1664 = vld [vmem:[%s1641 + $0x58] sm:$0xf]
      %v1665 = vld [vmem:[%s1641 + $0x5c] sm:$0x1]
      %v1666 = vld [vmem:[%s1641 + $0x60] sm:$0xf]
      %v1667 = vld [vmem:[%s1641 + $0x64] sm:$0xf]
      %v1668 = vld [vmem:[%s1641 + $0x68] sm:$0x1]
      %v1669 = vld [vmem:[%s1641 + $0x6c] sm:$0xf]
      %v1670 = vld [vmem:[%s1641 + $0x70] sm:$0xf]
      %v1671 = vld [vmem:[%s1641 + $0x74] sm:$0x1]
      %v1672 = vld [vmem:[%s1641 + $0x78] sm:$0xf]
      %v1673 = vld [vmem:[%s1641 + $0x7c] sm:$0xf]
      %v1674 = vld [vmem:[%s1641 + $0x80] sm:$0x1]
      %v1675 = vld [vmem:[%s1641 + $0x84] sm:$0xf]
      %v1676 = vld [vmem:[%s1641 + $0x88] sm:$0xf]
      %v1677 = vld [vmem:[%s1641 + $0x8c] sm:$0x1]
      %v1678 = vld [vmem:[%s1641 + $0x90] sm:$0xf]
      %v1679 = vld [vmem:[%s1641 + $0x94] sm:$0xf]
      %v1680 = vld [vmem:[%s1641 + $0x98] sm:$0x1]
      %v1681 = vld [vmem:[%s1641 + $0x9c] sm:$0xf]
      %v1682 = vld [vmem:[%s1641 + $0xa0] sm:$0xf]
      %v1683 = vld [vmem:[%s1641 + $0xa4] sm:$0x1]
      %v1684 = vld [vmem:[%s1641 + $0xa8] sm:$0xf]
      %v1685 = vld [vmem:[%s1641 + $0xac] sm:$0xf]
      %v1686 = vld [vmem:[%s1641 + $0xb0] sm:$0x1]
      %v1687 = vld [vmem:[%s1641 + $0xb4] sm:$0xf]
      %v1688 = vld [vmem:[%s1641 + $0xb8] sm:$0xf]
      %v1689 = vld [vmem:[%s1641 + $0xbc] sm:$0x1]
      %s1690 = scalar_lea.vmem %s204, 6
      %v1691 = vld [vmem:[%s1690] sm:$0x3]
      %v1724 = vunpack.c.l.b16 %v1642
      %v1725 = vunpack.c.l.b16 %v1643
      %v1726 = vunpack.c.l.b16 %v1645
      %v1727 = vunpack.c.l.b16 %v1646
      %v1728 = vunpack.c.l.b16 %v1648
      %v1729 = vunpack.c.l.b16 %v1649
      %v1730 = vunpack.c.l.b16 %v1651
      %v1731 = vunpack.c.l.b16 %v1652
      %v1732 = vunpack.c.l.b16 %v1654
      %v1733 = vunpack.c.l.b16 %v1655
      %v1734 = vunpack.c.l.b16 %v1657
      %v1735 = vunpack.c.l.b16 %v1658
      %v1736 = vunpack.c.l.b16 %v1660
      %v1737 = vunpack.c.l.b16 %v1661
      %v1738 = vunpack.c.l.b16 %v1663
      %v1739 = vunpack.c.l.b16 %v1664
      %v1740 = vunpack.c.l.b16 %v1666
      %v1741 = vunpack.c.l.b16 %v1667
      %v1742 = vunpack.c.l.b16 %v1669
      %v1743 = vunpack.c.l.b16 %v1670
      %v1744 = vunpack.c.l.b16 %v1672
      %v1745 = vunpack.c.l.b16 %v1673
      %v1746 = vunpack.c.l.b16 %v1675
      %v1747 = vunpack.c.l.b16 %v1676
      %v1748 = vunpack.c.l.b16 %v1678
      %v1749 = vunpack.c.l.b16 %v1679
      %v1750 = vunpack.c.l.b16 %v1681
      %v1751 = vunpack.c.l.b16 %v1682
      %v1752 = vunpack.c.l.b16 %v1684
      %v1753 = vunpack.c.l.b16 %v1685
      %v1754 = vunpack.c.l.b16 %v1687
      %v1755 = vunpack.c.l.b16 %v1688
      %v1756 = vpack.c.b16 %v1725, %v1724
      %v1757 = vpack.c.b16 %v1727, %v1726
      %v1758 = vpack.c.b16 %v1729, %v1728
      %v1759 = vpack.c.b16 %v1731, %v1730
      %v1760 = vpack.c.b16 %v1733, %v1732
      %v1761 = vpack.c.b16 %v1735, %v1734
      %v1762 = vpack.c.b16 %v1737, %v1736
      %v1763 = vpack.c.b16 %v1739, %v1738
      %v1764 = vpack.c.b16 %v1741, %v1740
      %v1765 = vpack.c.b16 %v1743, %v1742
      %v1766 = vpack.c.b16 %v1745, %v1744
      %v1767 = vpack.c.b16 %v1747, %v1746
      %v1768 = vpack.c.b16 %v1749, %v1748
      %v1769 = vpack.c.b16 %v1751, %v1750
      %v1770 = vpack.c.b16 %v1753, %v1752
      %v1771 = vpack.c.b16 %v1755, %v1754
      %v1773 = vsel %vm707, %v1756, 0
      %v1776 = vsel %vm707, %v1757, 0
      %v1779 = vsel %vm707, %v1758, 0
      %v1782 = vsel %vm707, %v1759, 0
      %v1785 = vsel %vm707, %v1760, 0
      %v1788 = vsel %vm707, %v1761, 0
      %v1791 = vsel %vm707, %v1762, 0
      %v1794 = vsel %vm707, %v1763, 0
      %v1797 = vsel %vm707, %v1764, 0
      %v1800 = vsel %vm707, %v1765, 0
      %v1803 = vsel %vm707, %v1766, 0
      %v1806 = vsel %vm707, %v1767, 0
      %v1809 = vsel %vm707, %v1768, 0
      %v1812 = vsel %vm707, %v1769, 0
      %v1815 = vsel %vm707, %v1770, 0
      %v1818 = vsel %vm707, %v1771, 0
      %v1821 = vsel %vm756, %v1691, 0
      %1823 = vmatprep.subr.bf16.mxu0 0
      %1824 = vmatpush1.bf16.msra.mxu0 %v1821
      %1825 = vmatprep.subr.bf16.mxu0 0
      %1826 = vmatpush1.bf16.msra.mxu0 0
      %1827 = vmatprep.subr.bf16.mxu0 0
      %1828 = vmatpush1.bf16.msra.mxu0 0
      %1829 = vmatprep.subr.bf16.mxu0 0
      %1830 = vmatpush1.bf16.msra.mxu0 0
      %1831 = vmatprep.subr.bf16.mxu0 0
      %1832 = vmatpush1.bf16.msra.mxu0 0
      %1833 = vmatprep.subr.bf16.mxu0 0
      %1834 = vmatpush1.bf16.msra.mxu0 0
      %1835 = vmatprep.subr.bf16.mxu0 0
      %1836 = vmatpush1.bf16.msra.mxu0 0
      %1837 = vmatprep.subr.bf16.mxu0 0
      %1838 = vmatpush1.bf16.msra.mxu0 0
      %1839 = vmatprep.subr.bf16.mxu0 0
      %1840 = vmatpush1.bf16.msra.mxu0 0
      %1841 = vmatprep.subr.bf16.mxu0 0
      %1842 = vmatpush1.bf16.msra.mxu0 0
      %1843 = vmatprep.subr.bf16.mxu0 0
      %1844 = vmatpush1.bf16.msra.mxu0 0
      %1845 = vmatprep.subr.bf16.mxu0 0
      %1846 = vmatpush1.bf16.msra.mxu0 0
      %1847 = vmatprep.subr.bf16.mxu0 0
      %1848 = vmatpush1.bf16.msra.mxu0 0
      %1849 = vmatprep.subr.bf16.mxu0 0
      %1850 = vmatpush1.bf16.msra.mxu0 0
      %1851 = vmatprep.subr.bf16.mxu0 0
      %1852 = vmatpush1.bf16.msra.mxu0 0
      %1853 = vmatprep.subr.bf16.mxu0 0
      %1854 = vmatpush1.bf16.msra.mxu0 0
      %1855 = vmatprep.mubr.bf16.mxu0 0
      %1856 = vmatmul.mubr.bf16.gmra.mrb[0].mxu0 %v1773
      %v1857 = vpop.f32.mrb[0].mxu0
      %v1858 = vadd.f32 0.0, %v1857
      %v1859 = vpop.f32.mrb[0].mxu0
      %v1860 = vpop.f32.mrb[0].mxu0
      %v1861 = vadd.f32 0.0, %v1860
      %v1862 = vpop.f32.mrb[0].mxu0
      %1863 = vmatprep.mubr.bf16.mxu0 0
      %1864 = vmatmul.mubr.bf16.gmra.mrb[0].mxu0 %v1776
      %v1865 = vpop.f32.mrb[0].mxu0
      %v1866 = vadd.f32 0.0, %v1865
      %v1867 = vpop.f32.mrb[0].mxu0
      %v1868 = vpop.f32.mrb[0].mxu0
      %v1869 = vadd.f32 0.0, %v1868
      %v1870 = vpop.f32.mrb[0].mxu0
      %1871 = vmatprep.mubr.bf16.mxu0 0
      %1872 = vmatmul.mubr.bf16.gmra.mrb[0].mxu0 %v1779
      %v1873 = vpop.f32.mrb[0].mxu0
      %v1874 = vadd.f32 0.0, %v1873
      %v1875 = vpop.f32.mrb[0].mxu0
      %v1876 = vpop.f32.mrb[0].mxu0
      %v1877 = vadd.f32 0.0, %v1876
      %v1878 = vpop.f32.mrb[0].mxu0
      %1879 = vmatprep.mubr.bf16.mxu0 0
      %1880 = vmatmul.mubr.bf16.gmra.mrb[0].mxu0 %v1782
      %v1881 = vpop.f32.mrb[0].mxu0
      %v1882 = vadd.f32 0.0, %v1881
      %v1883 = vpop.f32.mrb[0].mxu0
      %v1884 = vpop.f32.mrb[0].mxu0
      %v1885 = vadd.f32 0.0, %v1884
      %v1886 = vpop.f32.mrb[0].mxu0
      %1887 = vmatprep.mubr.bf16.mxu0 0
      %1888 = vmatmul.mubr.bf16.gmra.mrb[0].mxu0 %v1785
      %v1889 = vpop.f32.mrb[0].mxu0
      %v1890 = vadd.f32 0.0, %v1889
      %v1891 = vpop.f32.mrb[0].mxu0
      %v1892 = vpop.f32.mrb[0].mxu0
      %v1893 = vadd.f32 0.0, %v1892
      %v1894 = vpop.f32.mrb[0].mxu0
      %1895 = vmatprep.mubr.bf16.mxu0 0
      %1896 = vmatmul.mubr.bf16.gmra.mrb[0].mxu0 %v1788
      %v1897 = vpop.f32.mrb[0].mxu0
      %v1898 = vadd.f32 0.0, %v1897
      %v1899 = vpop.f32.mrb[0].mxu0
      %v1900 = vpop.f32.mrb[0].mxu0
      %v1901 = vadd.f32 0.0, %v1900
      %v1902 = vpop.f32.mrb[0].mxu0
      %1903 = vmatprep.mubr.bf16.mxu0 0
      %1904 = vmatmul.mubr.bf16.gmra.mrb[0].mxu0 %v1791
      %v1905 = vpop.f32.mrb[0].mxu0
      %v1906 = vadd.f32 0.0, %v1905
      %v1907 = vpop.f32.mrb[0].mxu0
      %v1908 = vpop.f32.mrb[0].mxu0
      %v1909 = vadd.f32 0.0, %v1908
      %v1910 = vpop.f32.mrb[0].mxu0
      %1911 = vmatprep.mubr.bf16.mxu0 0
      %1912 = vmatmul.mubr.bf16.gmra.mrb[0].mxu0 %v1794
      %v1913 = vpop.f32.mrb[0].mxu0
      %v1914 = vadd.f32 0.0, %v1913
      %v1915 = vpop.f32.mrb[0].mxu0
      %v1916 = vpop.f32.mrb[0].mxu0
      %v1917 = vadd.f32 0.0, %v1916
      %v1918 = vpop.f32.mrb[0].mxu0
      %1919 = vmatprep.mubr.bf16.mxu0 0
      %1920 = vmatmul.mubr.bf16.gmra.mrb[0].mxu0 %v1797
      %v1921 = vpop.f32.mrb[0].mxu0
      %v1922 = vadd.f32 0.0, %v1921
      %v1923 = vpop.f32.mrb[0].mxu0
      %v1924 = vpop.f32.mrb[0].mxu0
      %v1925 = vadd.f32 0.0, %v1924
      %v1926 = vpop.f32.mrb[0].mxu0
      %1927 = vmatprep.mubr.bf16.mxu0 0
      %1928 = vmatmul.mubr.bf16.gmra.mrb[0].mxu0 %v1800
      %v1929 = vpop.f32.mrb[0].mxu0
      %v1930 = vadd.f32 0.0, %v1929
      %v1931 = vpop.f32.mrb[0].mxu0
      %v1932 = vpop.f32.mrb[0].mxu0
      %v1933 = vadd.f32 0.0, %v1932
      %v1934 = vpop.f32.mrb[0].mxu0
      %1935 = vmatprep.mubr.bf16.mxu0 0
      %1936 = vmatmul.mubr.bf16.gmra.mrb[0].mxu0 %v1803
      %v1937 = vpop.f32.mrb[0].mxu0
      %v1938 = vadd.f32 0.0, %v1937
      %v1939 = vpop.f32.mrb[0].mxu0
      %v1940 = vpop.f32.mrb[0].mxu0
      %v1941 = vadd.f32 0.0, %v1940
      %v1942 = vpop.f32.mrb[0].mxu0
      %1943 = vmatprep.mubr.bf16.mxu0 0
      %1944 = vmatmul.mubr.bf16.gmra.mrb[0].mxu0 %v1806
      %v1945 = vpop.f32.mrb[0].mxu0
      %v1946 = vadd.f32 0.0, %v1945
      %v1947 = vpop.f32.mrb[0].mxu0
      %v1948 = vpop.f32.mrb[0].mxu0
      %v1949 = vadd.f32 0.0, %v1948
      %v1950 = vpop.f32.mrb[0].mxu0
      %1951 = vmatprep.mubr.bf16.mxu0 0
      %1952 = vmatmul.mubr.bf16.gmra.mrb[0].mxu0 %v1809
      %v1953 = vpop.f32.mrb[0].mxu0
      %v1954 = vadd.f32 0.0, %v1953
      %v1955 = vpop.f32.mrb[0].mxu0
      %v1956 = vpop.f32.mrb[0].mxu0
      %v1957 = vadd.f32 0.0, %v1956
      %v1958 = vpop.f32.mrb[0].mxu0
      %1959 = vmatprep.mubr.bf16.mxu0 0
      %1960 = vmatmul.mubr.bf16.gmra.mrb[0].mxu0 %v1812
      %v1961 = vpop.f32.mrb[0].mxu0
      %v1962 = vadd.f32 0.0, %v1961
      %v1963 = vpop.f32.mrb[0].mxu0
      %v1964 = vpop.f32.mrb[0].mxu0
      %v1965 = vadd.f32 0.0, %v1964
      %v1966 = vpop.f32.mrb[0].mxu0
      %1967 = vmatprep.mubr.bf16.mxu0 0
      %1968 = vmatmul.mubr.bf16.gmra.mrb[0].mxu0 %v1815
      %v1969 = vpop.f32.mrb[0].mxu0
      %v1970 = vadd.f32 0.0, %v1969
      %v1971 = vpop.f32.mrb[0].mxu0
      %v1972 = vpop.f32.mrb[0].mxu0
      %v1973 = vadd.f32 0.0, %v1972
      %v1974 = vpop.f32.mrb[0].mxu0
      %1975 = vmatprep.mubr.bf16.mxu0 0
      %1976 = vmatmul.mubr.bf16.gmra.mrb[0].mxu0 %v1818
      %v1977 = vpop.f32.mrb[0].mxu0
      %v1978 = vadd.f32 0.0, %v1977
      %v1979 = vpop.f32.mrb[0].mxu0
      %v1980 = vpop.f32.mrb[0].mxu0
      %v1981 = vadd.f32 0.0, %v1980
      %v1982 = vpop.f32.mrb[0].mxu0
      %1983 = vdwg.mxu0
      %v1984 = vadd.f32 %v1606, %v1858
      %v1985 = vadd.f32 %v1607, %v1861
      %v1986 = vadd.f32 %v1608, %v1866
      %v1987 = vadd.f32 %v1609, %v1869
      %v1988 = vadd.f32 %v1610, %v1874
      %v1989 = vadd.f32 %v1611, %v1877
      %v1990 = vadd.f32 %v1612, %v1882
      %v1991 = vadd.f32 %v1613, %v1885
      %v1992 = vadd.f32 %v1614, %v1890
      %v1993 = vadd.f32 %v1615, %v1893
      %v1994 = vadd.f32 %v1616, %v1898
      %v1995 = vadd.f32 %v1617, %v1901
      %v1996 = vadd.f32 %v1618, %v1906
      %v1997 = vadd.f32 %v1619, %v1909
      %v1998 = vadd.f32 %v1620, %v1914
      %v1999 = vadd.f32 %v1621, %v1917
      %v2000 = vadd.f32 %v1622, %v1922
      %v2001 = vadd.f32 %v1623, %v1925
      %v2002 = vadd.f32 %v1624, %v1930
      %v2003 = vadd.f32 %v1625, %v1933
      %v2004 = vadd.f32 %v1626, %v1938
      %v2005 = vadd.f32 %v1627, %v1941
      %v2006 = vadd.f32 %v1628, %v1946
      %v2007 = vadd.f32 %v1629, %v1949
      %v2008 = vadd.f32 %v1630, %v1954
      %v2009 = vadd.f32 %v1631, %v1957
      %v2010 = vadd.f32 %v1632, %v1962
      %v2011 = vadd.f32 %v1633, %v1965
      %v2012 = vadd.f32 %v1634, %v1970
      %v2013 = vadd.f32 %v1635, %v1973
      %v2014 = vadd.f32 %v1636, %v1978
      %v2015 = vadd.f32 %v1637, %v1981
      %v2017 = vshrl.u32 %v1642, 16
      %v2019 = vrot.slane %v2017, 4
      %v2020 = vshll.u32 %v1642, 16
      %v2022 = vrot.slane %v2020, 5
      %v2023 = vor.u32 %v2019, %v2022
      %v2024 = vrot.slane %v2023, 4
      %v2026 = vshll.u32 %v1643, 16
      %v2028 = vrot.slane %v2026, 5
      %v2029 = vsel %vm272, %v2024, %v2028
      %v2030 = vshrl.u32 %v1643, 16
      %v2032 = vrot.slane %v2030, 4
      %v2033 = vor.u32 %v2032, %v2028
      %v2034 = vrot.slane %v2033, 4
      %v2036 = vshll.u32 %v1644, 16
      %v2038 = vrot.slane %v2036, 5
      %v2039 = vsel %vm272, %v2034, %v2038
      %v2041 = vshrl.u32 %v1645, 16
      %v2043 = vrot.slane %v2041, 4
      %v2044 = vshll.u32 %v1645, 16
      %v2046 = vrot.slane %v2044, 5
      %v2047 = vor.u32 %v2043, %v2046
      %v2048 = vrot.slane %v2047, 4
      %v2050 = vshll.u32 %v1646, 16
      %v2052 = vrot.slane %v2050, 5
      %v2053 = vsel %vm272, %v2048, %v2052
      %v2054 = vshrl.u32 %v1646, 16
      %v2056 = vrot.slane %v2054, 4
      %v2057 = vor.u32 %v2056, %v2052
      %v2058 = vrot.slane %v2057, 4
      %v2060 = vshll.u32 %v1647, 16
      %v2062 = vrot.slane %v2060, 5
      %v2063 = vsel %vm272, %v2058, %v2062
      %v2065 = vshrl.u32 %v1648, 16
      %v2067 = vrot.slane %v2065, 4
      %v2068 = vshll.u32 %v1648, 16
      %v2070 = vrot.slane %v2068, 5
      %v2071 = vor.u32 %v2067, %v2070
      %v2072 = vrot.slane %v2071, 4
      %v2074 = vshll.u32 %v1649, 16
      %v2076 = vrot.slane %v2074, 5
      %v2077 = vsel %vm272, %v2072, %v2076
      %v2078 = vshrl.u32 %v1649, 16
      %v2080 = vrot.slane %v2078, 4
      %v2081 = vor.u32 %v2080, %v2076
      %v2082 = vrot.slane %v2081, 4
      %v2084 = vshll.u32 %v1650, 16
      %v2086 = vrot.slane %v2084, 5
      %v2087 = vsel %vm272, %v2082, %v2086
      %v2089 = vshrl.u32 %v1651, 16
      %v2091 = vrot.slane %v2089, 4
      %v2092 = vshll.u32 %v1651, 16
      %v2094 = vrot.slane %v2092, 5
      %v2095 = vor.u32 %v2091, %v2094
      %v2096 = vrot.slane %v2095, 4
      %v2098 = vshll.u32 %v1652, 16
      %v2100 = vrot.slane %v2098, 5
      %v2101 = vsel %vm272, %v2096, %v2100
      %v2102 = vshrl.u32 %v1652, 16
      %v2104 = vrot.slane %v2102, 4
      %v2105 = vor.u32 %v2104, %v2100
      %v2106 = vrot.slane %v2105, 4
      %v2108 = vshll.u32 %v1653, 16
      %v2110 = vrot.slane %v2108, 5
      %v2111 = vsel %vm272, %v2106, %v2110
      %v2113 = vshrl.u32 %v1654, 16
      %v2115 = vrot.slane %v2113, 4
      %v2116 = vshll.u32 %v1654, 16
      %v2118 = vrot.slane %v2116, 5
      %v2119 = vor.u32 %v2115, %v2118
      %v2120 = vrot.slane %v2119, 4
      %v2122 = vshll.u32 %v1655, 16
      %v2124 = vrot.slane %v2122, 5
      %v2125 = vsel %vm272, %v2120, %v2124
      %v2126 = vshrl.u32 %v1655, 16
      %v2128 = vrot.slane %v2126, 4
      %v2129 = vor.u32 %v2128, %v2124
      %v2130 = vrot.slane %v2129, 4
      %v2132 = vshll.u32 %v1656, 16
      %v2134 = vrot.slane %v2132, 5
      %v2135 = vsel %vm272, %v2130, %v2134
      %v2137 = vshrl.u32 %v1657, 16
      %v2139 = vrot.slane %v2137, 4
      %v2140 = vshll.u32 %v1657, 16
      %v2142 = vrot.slane %v2140, 5
      %v2143 = vor.u32 %v2139, %v2142
      %v2144 = vrot.slane %v2143, 4
      %v2146 = vshll.u32 %v1658, 16
      %v2148 = vrot.slane %v2146, 5
      %v2149 = vsel %vm272, %v2144, %v2148
      %v2150 = vshrl.u32 %v1658, 16
      %v2152 = vrot.slane %v2150, 4
      %v2153 = vor.u32 %v2152, %v2148
      %v2154 = vrot.slane %v2153, 4
      %v2156 = vshll.u32 %v1659, 16
      %v2158 = vrot.slane %v2156, 5
      %v2159 = vsel %vm272, %v2154, %v2158
      %v2161 = vshrl.u32 %v1660, 16
      %v2163 = vrot.slane %v2161, 4
      %v2164 = vshll.u32 %v1660, 16
      %v2166 = vrot.slane %v2164, 5
      %v2167 = vor.u32 %v2163, %v2166
      %v2168 = vrot.slane %v2167, 4
      %v2170 = vshll.u32 %v1661, 16
      %v2172 = vrot.slane %v2170, 5
      %v2173 = vsel %vm272, %v2168, %v2172
      %v2174 = vshrl.u32 %v1661, 16
      %v2176 = vrot.slane %v2174, 4
      %v2177 = vor.u32 %v2176, %v2172
      %v2178 = vrot.slane %v2177, 4
      %v2180 = vshll.u32 %v1662, 16
      %v2182 = vrot.slane %v2180, 5
      %v2183 = vsel %vm272, %v2178, %v2182
      %v2185 = vshrl.u32 %v1663, 16
      %v2187 = vrot.slane %v2185, 4
      %v2188 = vshll.u32 %v1663, 16
      %v2190 = vrot.slane %v2188, 5
      %v2191 = vor.u32 %v2187, %v2190
      %v2192 = vrot.slane %v2191, 4
      %v2194 = vshll.u32 %v1664, 16
      %v2196 = vrot.slane %v2194, 5
      %v2197 = vsel %vm272, %v2192, %v2196
      %v2198 = vshrl.u32 %v1664, 16
      %v2200 = vrot.slane %v2198, 4
      %v2201 = vor.u32 %v2200, %v2196
      %v2202 = vrot.slane %v2201, 4
      %v2204 = vshll.u32 %v1665, 16
      %v2206 = vrot.slane %v2204, 5
      %v2207 = vsel %vm272, %v2202, %v2206
      %v2209 = vshrl.u32 %v1666, 16
      %v2211 = vrot.slane %v2209, 4
      %v2212 = vshll.u32 %v1666, 16
      %v2214 = vrot.slane %v2212, 5
      %v2215 = vor.u32 %v2211, %v2214
      %v2216 = vrot.slane %v2215, 4
      %v2218 = vshll.u32 %v1667, 16
      %v2220 = vrot.slane %v2218, 5
      %v2221 = vsel %vm272, %v2216, %v2220
      %v2222 = vshrl.u32 %v1667, 16
      %v2224 = vrot.slane %v2222, 4
      %v2225 = vor.u32 %v2224, %v2220
      %v2226 = vrot.slane %v2225, 4
      %v2228 = vshll.u32 %v1668, 16
      %v2230 = vrot.slane %v2228, 5
      %v2231 = vsel %vm272, %v2226, %v2230
      %v2233 = vshrl.u32 %v1669, 16
      %v2235 = vrot.slane %v2233, 4
      %v2236 = vshll.u32 %v1669, 16
      %v2238 = vrot.slane %v2236, 5
      %v2239 = vor.u32 %v2235, %v2238
      %v2240 = vrot.slane %v2239, 4
      %v2242 = vshll.u32 %v1670, 16
      %v2244 = vrot.slane %v2242, 5
      %v2245 = vsel %vm272, %v2240, %v2244
      %v2246 = vshrl.u32 %v1670, 16
      %v2248 = vrot.slane %v2246, 4
      %v2249 = vor.u32 %v2248, %v2244
      %v2250 = vrot.slane %v2249, 4
      %v2252 = vshll.u32 %v1671, 16
      %v2254 = vrot.slane %v2252, 5
      %v2255 = vsel %vm272, %v2250, %v2254
      %v2257 = vshrl.u32 %v1672, 16
      %v2259 = vrot.slane %v2257, 4
      %v2260 = vshll.u32 %v1672, 16
      %v2262 = vrot.slane %v2260, 5
      %v2263 = vor.u32 %v2259, %v2262
      %v2264 = vrot.slane %v2263, 4
      %v2266 = vshll.u32 %v1673, 16
      %v2268 = vrot.slane %v2266, 5
      %v2269 = vsel %vm272, %v2264, %v2268
      %v2270 = vshrl.u32 %v1673, 16
      %v2272 = vrot.slane %v2270, 4
      %v2273 = vor.u32 %v2272, %v2268
      %v2274 = vrot.slane %v2273, 4
      %v2276 = vshll.u32 %v1674, 16
      %v2278 = vrot.slane %v2276, 5
      %v2279 = vsel %vm272, %v2274, %v2278
      %v2281 = vshrl.u32 %v1675, 16
      %v2283 = vrot.slane %v2281, 4
      %v2284 = vshll.u32 %v1675, 16
      %v2286 = vrot.slane %v2284, 5
      %v2287 = vor.u32 %v2283, %v2286
      %v2288 = vrot.slane %v2287, 4
      %v2290 = vshll.u32 %v1676, 16
      %v2292 = vrot.slane %v2290, 5
      %v2293 = vsel %vm272, %v2288, %v2292
      %v2294 = vshrl.u32 %v1676, 16
      %v2296 = vrot.slane %v2294, 4
      %v2297 = vor.u32 %v2296, %v2292
      %v2298 = vrot.slane %v2297, 4
      %v2300 = vshll.u32 %v1677, 16
      %v2302 = vrot.slane %v2300, 5
      %v2303 = vsel %vm272, %v2298, %v2302
      %v2305 = vshrl.u32 %v1678, 16
      %v2307 = vrot.slane %v2305, 4
      %v2308 = vshll.u32 %v1678, 16
      %v2310 = vrot.slane %v2308, 5
      %v2311 = vor.u32 %v2307, %v2310
      %v2312 = vrot.slane %v2311, 4
      %v2314 = vshll.u32 %v1679, 16
      %v2316 = vrot.slane %v2314, 5
      %v2317 = vsel %vm272, %v2312, %v2316
      %v2318 = vshrl.u32 %v1679, 16
      %v2320 = vrot.slane %v2318, 4
      %v2321 = vor.u32 %v2320, %v2316
      %v2322 = vrot.slane %v2321, 4
      %v2324 = vshll.u32 %v1680, 16
      %v2326 = vrot.slane %v2324, 5
      %v2327 = vsel %vm272, %v2322, %v2326
      %v2329 = vshrl.u32 %v1681, 16
      %v2331 = vrot.slane %v2329, 4
      %v2332 = vshll.u32 %v1681, 16
      %v2334 = vrot.slane %v2332, 5
      %v2335 = vor.u32 %v2331, %v2334
      %v2336 = vrot.slane %v2335, 4
      %v2338 = vshll.u32 %v1682, 16
      %v2340 = vrot.slane %v2338, 5
      %v2341 = vsel %vm272, %v2336, %v2340
      %v2342 = vshrl.u32 %v1682, 16
      %v2344 = vrot.slane %v2342, 4
      %v2345 = vor.u32 %v2344, %v2340
      %v2346 = vrot.slane %v2345, 4
      %v2348 = vshll.u32 %v1683, 16
      %v2350 = vrot.slane %v2348, 5
      %v2351 = vsel %vm272, %v2346, %v2350
      %v2353 = vshrl.u32 %v1684, 16
      %v2355 = vrot.slane %v2353, 4
      %v2356 = vshll.u32 %v1684, 16
      %v2358 = vrot.slane %v2356, 5
      %v2359 = vor.u32 %v2355, %v2358
      %v2360 = vrot.slane %v2359, 4
      %v2362 = vshll.u32 %v1685, 16
      %v2364 = vrot.slane %v2362, 5
      %v2365 = vsel %vm272, %v2360, %v2364
      %v2366 = vshrl.u32 %v1685, 16
      %v2368 = vrot.slane %v2366, 4
      %v2369 = vor.u32 %v2368, %v2364
      %v2370 = vrot.slane %v2369, 4
      %v2372 = vshll.u32 %v1686, 16
      %v2374 = vrot.slane %v2372, 5
      %v2375 = vsel %vm272, %v2370, %v2374
      %v2377 = vshrl.u32 %v1687, 16
      %v2379 = vrot.slane %v2377, 4
      %v2380 = vshll.u32 %v1687, 16
      %v2382 = vrot.slane %v2380, 5
      %v2383 = vor.u32 %v2379, %v2382
      %v2384 = vrot.slane %v2383, 4
      %v2386 = vshll.u32 %v1688, 16
      %v2388 = vrot.slane %v2386, 5
      %v2389 = vsel %vm272, %v2384, %v2388
      %v2390 = vshrl.u32 %v1688, 16
      %v2392 = vrot.slane %v2390, 4
      %v2393 = vor.u32 %v2392, %v2388
      %v2394 = vrot.slane %v2393, 4
      %v2396 = vshll.u32 %v1689, 16
      %v2398 = vrot.slane %v2396, 5
      %v2399 = vsel %vm272, %v2394, %v2398
      %s2400 = scalar_lea.vmem %s204, 8
      %v2401 = vld [vmem:[%s2400] sm:$0x3]
      %v2402 = vunpack.c.l.b16 %v2029
      %v2403 = vunpack.c.l.b16 %v2039
      %v2404 = vunpack.c.l.b16 %v2053
      %v2405 = vunpack.c.l.b16 %v2063
      %v2406 = vunpack.c.l.b16 %v2077
      %v2407 = vunpack.c.l.b16 %v2087
      %v2408 = vunpack.c.l.b16 %v2101
      %v2409 = vunpack.c.l.b16 %v2111
      %v2410 = vunpack.c.l.b16 %v2125
      %v2411 = vunpack.c.l.b16 %v2135
      %v2412 = vunpack.c.l.b16 %v2149
      %v2413 = vunpack.c.l.b16 %v2159
      %v2414 = vunpack.c.l.b16 %v2173
      %v2415 = vunpack.c.l.b16 %v2183
      %v2416 = vunpack.c.l.b16 %v2197
      %v2417 = vunpack.c.l.b16 %v2207
      %v2418 = vunpack.c.l.b16 %v2221
      %v2419 = vunpack.c.l.b16 %v2231
      %v2420 = vunpack.c.l.b16 %v2245
      %v2421 = vunpack.c.l.b16 %v2255
      %v2422 = vunpack.c.l.b16 %v2269
      %v2423 = vunpack.c.l.b16 %v2279
      %v2424 = vunpack.c.l.b16 %v2293
      %v2425 = vunpack.c.l.b16 %v2303
      %v2426 = vunpack.c.l.b16 %v2317
      %v2427 = vunpack.c.l.b16 %v2327
      %v2428 = vunpack.c.l.b16 %v2341
      %v2429 = vunpack.c.l.b16 %v2351
      %v2430 = vunpack.c.l.b16 %v2365
      %v2431 = vunpack.c.l.b16 %v2375
      %v2432 = vunpack.c.l.b16 %v2389
      %v2433 = vunpack.c.l.b16 %v2399
      %v2434 = vpack.c.b16 %v2403, %v2402
      %v2435 = vpack.c.b16 %v2405, %v2404
      %v2436 = vpack.c.b16 %v2407, %v2406
      %v2437 = vpack.c.b16 %v2409, %v2408
      %v2438 = vpack.c.b16 %v2411, %v2410
      %v2439 = vpack.c.b16 %v2413, %v2412
      %v2440 = vpack.c.b16 %v2415, %v2414
      %v2441 = vpack.c.b16 %v2417, %v2416
      %v2442 = vpack.c.b16 %v2419, %v2418
      %v2443 = vpack.c.b16 %v2421, %v2420
      %v2444 = vpack.c.b16 %v2423, %v2422
      %v2445 = vpack.c.b16 %v2425, %v2424
      %v2446 = vpack.c.b16 %v2427, %v2426
      %v2447 = vpack.c.b16 %v2429, %v2428
      %v2448 = vpack.c.b16 %v2431, %v2430
      %v2449 = vpack.c.b16 %v2433, %v2432
      %v2451 = vsel %vm707, %v2434, 0
      %v2454 = vsel %vm707, %v2435, 0
      %v2457 = vsel %vm707, %v2436, 0
      %v2460 = vsel %vm707, %v2437, 0
      %v2463 = vsel %vm707, %v2438, 0
      %v2466 = vsel %vm707, %v2439, 0
      %v2469 = vsel %vm707, %v2440, 0
      %v2472 = vsel %vm707, %v2441, 0
      %v2475 = vsel %vm707, %v2442, 0
      %v2478 = vsel %vm707, %v2443, 0
      %v2481 = vsel %vm707, %v2444, 0
      %v2484 = vsel %vm707, %v2445, 0
      %v2487 = vsel %vm707, %v2446, 0
      %v2490 = vsel %vm707, %v2447, 0
      %v2493 = vsel %vm707, %v2448, 0
      %v2496 = vsel %vm707, %v2449, 0
      %v2499 = vsel %vm756, %v2401, 0
      %2501 = vmatprep.subr.bf16.mxu0 0
      %2502 = vmatpush1.bf16.msra.mxu0 %v2499
      %2503 = vmatprep.subr.bf16.mxu0 0
      %2504 = vmatpush1.bf16.msra.mxu0 0
      %2505 = vmatprep.subr.bf16.mxu0 0
      %2506 = vmatpush1.bf16.msra.mxu0 0
      %2507 = vmatprep.subr.bf16.mxu0 0
      %2508 = vmatpush1.bf16.msra.mxu0 0
      %2509 = vmatprep.subr.bf16.mxu0 0
      %2510 = vmatpush1.bf16.msra.mxu0 0
      %2511 = vmatprep.subr.bf16.mxu0 0
      %2512 = vmatpush1.bf16.msra.mxu0 0
      %2513 = vmatprep.subr.bf16.mxu0 0
      %2514 = vmatpush1.bf16.msra.mxu0 0
      %2515 = vmatprep.subr.bf16.mxu0 0
      %2516 = vmatpush1.bf16.msra.mxu0 0
      %2517 = vmatprep.subr.bf16.mxu0 0
      %2518 = vmatpush1.bf16.msra.mxu0 0
      %2519 = vmatprep.subr.bf16.mxu0 0
      %2520 = vmatpush1.bf16.msra.mxu0 0
      %2521 = vmatprep.subr.bf16.mxu0 0
      %2522 = vmatpush1.bf16.msra.mxu0 0
      %2523 = vmatprep.subr.bf16.mxu0 0
      %2524 = vmatpush1.bf16.msra.mxu0 0
      %2525 = vmatprep.subr.bf16.mxu0 0
      %2526 = vmatpush1.bf16.msra.mxu0 0
      %2527 = vmatprep.subr.bf16.mxu0 0
      %2528 = vmatpush1.bf16.msra.mxu0 0
      %2529 = vmatprep.subr.bf16.mxu0 0
      %2530 = vmatpush1.bf16.msra.mxu0 0
      %2531 = vmatprep.subr.bf16.mxu0 0
      %2532 = vmatpush1.bf16.msra.mxu0 0
      %2533 = vmatprep.mubr.bf16.mxu0 0
      %2534 = vmatmul.mubr.bf16.gmra.mrb[0].mxu0 %v2451
      %v2535 = vpop.f32.mrb[0].mxu0
      %v2536 = vadd.f32 0.0, %v2535
      %v2537 = vpop.f32.mrb[0].mxu0
      %v2538 = vpop.f32.mrb[0].mxu0
      %v2539 = vadd.f32 0.0, %v2538
      %v2540 = vpop.f32.mrb[0].mxu0
      %2541 = vmatprep.mubr.bf16.mxu0 0
      %2542 = vmatmul.mubr.bf16.gmra.mrb[0].mxu0 %v2454
      %v2543 = vpop.f32.mrb[0].mxu0
      %v2544 = vadd.f32 0.0, %v2543
      %v2545 = vpop.f32.mrb[0].mxu0
      %v2546 = vpop.f32.mrb[0].mxu0
      %v2547 = vadd.f32 0.0, %v2546
      %v2548 = vpop.f32.mrb[0].mxu0
      %2549 = vmatprep.mubr.bf16.mxu0 0
      %2550 = vmatmul.mubr.bf16.gmra.mrb[0].mxu0 %v2457
      %v2551 = vpop.f32.mrb[0].mxu0
      %v2552 = vadd.f32 0.0, %v2551
      %v2553 = vpop.f32.mrb[0].mxu0
      %v2554 = vpop.f32.mrb[0].mxu0
      %v2555 = vadd.f32 0.0, %v2554
      %v2556 = vpop.f32.mrb[0].mxu0
      %2557 = vmatprep.mubr.bf16.mxu0 0
      %2558 = vmatmul.mubr.bf16.gmra.mrb[0].mxu0 %v2460
      %v2559 = vpop.f32.mrb[0].mxu0
      %v2560 = vadd.f32 0.0, %v2559
      %v2561 = vpop.f32.mrb[0].mxu0
      %v2562 = vpop.f32.mrb[0].mxu0
      %v2563 = vadd.f32 0.0, %v2562
      %v2564 = vpop.f32.mrb[0].mxu0
      %2565 = vmatprep.mubr.bf16.mxu0 0
      %2566 = vmatmul.mubr.bf16.gmra.mrb[0].mxu0 %v2463
      %v2567 = vpop.f32.mrb[0].mxu0
      %v2568 = vadd.f32 0.0, %v2567
      %v2569 = vpop.f32.mrb[0].mxu0
      %v2570 = vpop.f32.mrb[0].mxu0
      %v2571 = vadd.f32 0.0, %v2570
      %v2572 = vpop.f32.mrb[0].mxu0
      %2573 = vmatprep.mubr.bf16.mxu0 0
      %2574 = vmatmul.mubr.bf16.gmra.mrb[0].mxu0 %v2466
      %v2575 = vpop.f32.mrb[0].mxu0
      %v2576 = vadd.f32 0.0, %v2575
      %v2577 = vpop.f32.mrb[0].mxu0
      %v2578 = vpop.f32.mrb[0].mxu0
      %v2579 = vadd.f32 0.0, %v2578
      %v2580 = vpop.f32.mrb[0].mxu0
      %2581 = vmatprep.mubr.bf16.mxu0 0
      %2582 = vmatmul.mubr.bf16.gmra.mrb[0].mxu0 %v2469
      %v2583 = vpop.f32.mrb[0].mxu0
      %v2584 = vadd.f32 0.0, %v2583
      %v2585 = vpop.f32.mrb[0].mxu0
      %v2586 = vpop.f32.mrb[0].mxu0
      %v2587 = vadd.f32 0.0, %v2586
      %v2588 = vpop.f32.mrb[0].mxu0
      %2589 = vmatprep.mubr.bf16.mxu0 0
      %2590 = vmatmul.mubr.bf16.gmra.mrb[0].mxu0 %v2472
      %v2591 = vpop.f32.mrb[0].mxu0
      %v2592 = vadd.f32 0.0, %v2591
      %v2593 = vpop.f32.mrb[0].mxu0
      %v2594 = vpop.f32.mrb[0].mxu0
      %v2595 = vadd.f32 0.0, %v2594
      %v2596 = vpop.f32.mrb[0].mxu0
      %2597 = vmatprep.mubr.bf16.mxu0 0
      %2598 = vmatmul.mubr.bf16.gmra.mrb[0].mxu0 %v2475
      %v2599 = vpop.f32.mrb[0].mxu0
      %v2600 = vadd.f32 0.0, %v2599
      %v2601 = vpop.f32.mrb[0].mxu0
      %v2602 = vpop.f32.mrb[0].mxu0
      %v2603 = vadd.f32 0.0, %v2602
      %v2604 = vpop.f32.mrb[0].mxu0
      %2605 = vmatprep.mubr.bf16.mxu0 0
      %2606 = vmatmul.mubr.bf16.gmra.mrb[0].mxu0 %v2478
      %v2607 = vpop.f32.mrb[0].mxu0
      %v2608 = vadd.f32 0.0, %v2607
      %v2609 = vpop.f32.mrb[0].mxu0
      %v2610 = vpop.f32.mrb[0].mxu0
      %v2611 = vadd.f32 0.0, %v2610
      %v2612 = vpop.f32.mrb[0].mxu0
      %2613 = vmatprep.mubr.bf16.mxu0 0
      %2614 = vmatmul.mubr.bf16.gmra.mrb[0].mxu0 %v2481
      %v2615 = vpop.f32.mrb[0].mxu0
      %v2616 = vadd.f32 0.0, %v2615
      %v2617 = vpop.f32.mrb[0].mxu0
      %v2618 = vpop.f32.mrb[0].mxu0
      %v2619 = vadd.f32 0.0, %v2618
      %v2620 = vpop.f32.mrb[0].mxu0
      %2621 = vmatprep.mubr.bf16.mxu0 0
      %2622 = vmatmul.mubr.bf16.gmra.mrb[0].mxu0 %v2484
      %v2623 = vpop.f32.mrb[0].mxu0
      %v2624 = vadd.f32 0.0, %v2623
      %v2625 = vpop.f32.mrb[0].mxu0
      %v2626 = vpop.f32.mrb[0].mxu0
      %v2627 = vadd.f32 0.0, %v2626
      %v2628 = vpop.f32.mrb[0].mxu0
      %2629 = vmatprep.mubr.bf16.mxu0 0
      %2630 = vmatmul.mubr.bf16.gmra.mrb[0].mxu0 %v2487
      %v2631 = vpop.f32.mrb[0].mxu0
      %v2632 = vadd.f32 0.0, %v2631
      %v2633 = vpop.f32.mrb[0].mxu0
      %v2634 = vpop.f32.mrb[0].mxu0
      %v2635 = vadd.f32 0.0, %v2634
      %v2636 = vpop.f32.mrb[0].mxu0
      %2637 = vmatprep.mubr.bf16.mxu0 0
      %2638 = vmatmul.mubr.bf16.gmra.mrb[0].mxu0 %v2490
      %v2639 = vpop.f32.mrb[0].mxu0
      %v2640 = vadd.f32 0.0, %v2639
      %v2641 = vpop.f32.mrb[0].mxu0
      %v2642 = vpop.f32.mrb[0].mxu0
      %v2643 = vadd.f32 0.0, %v2642
      %v2644 = vpop.f32.mrb[0].mxu0
      %2645 = vmatprep.mubr.bf16.mxu0 0
      %2646 = vmatmul.mubr.bf16.gmra.mrb[0].mxu0 %v2493
      %v2647 = vpop.f32.mrb[0].mxu0
      %v2648 = vadd.f32 0.0, %v2647
      %v2649 = vpop.f32.mrb[0].mxu0
      %v2650 = vpop.f32.mrb[0].mxu0
      %v2651 = vadd.f32 0.0, %v2650
      %v2652 = vpop.f32.mrb[0].mxu0
      %2653 = vmatprep.mubr.bf16.mxu0 0
      %2654 = vmatmul.mubr.bf16.gmra.mrb[0].mxu0 %v2496
      %v2655 = vpop.f32.mrb[0].mxu0
      %v2656 = vadd.f32 0.0, %v2655
      %v2657 = vpop.f32.mrb[0].mxu0
      %v2658 = vpop.f32.mrb[0].mxu0
      %v2659 = vadd.f32 0.0, %v2658
      %v2660 = vpop.f32.mrb[0].mxu0
      %2661 = vdwg.mxu0
      %v2662 = vadd.f32 %v1984, %v2536
      %v2663 = vadd.f32 %v1985, %v2539
      %v2664 = vadd.f32 %v1986, %v2544
      %v2665 = vadd.f32 %v1987, %v2547
      %v2666 = vadd.f32 %v1988, %v2552
      %v2667 = vadd.f32 %v1989, %v2555
      %v2668 = vadd.f32 %v1990, %v2560
      %v2669 = vadd.f32 %v1991, %v2563
      %v2670 = vadd.f32 %v1992, %v2568
      %v2671 = vadd.f32 %v1993, %v2571
      %v2672 = vadd.f32 %v1994, %v2576
      %v2673 = vadd.f32 %v1995, %v2579
      %v2674 = vadd.f32 %v1996, %v2584
      %v2675 = vadd.f32 %v1997, %v2587
      %v2676 = vadd.f32 %v1998, %v2592
      %v2677 = vadd.f32 %v1999, %v2595
      %v2678 = vadd.f32 %v2000, %v2600
      %v2679 = vadd.f32 %v2001, %v2603
      %v2680 = vadd.f32 %v2002, %v2608
      %v2681 = vadd.f32 %v2003, %v2611
      %v2682 = vadd.f32 %v2004, %v2616
      %v2683 = vadd.f32 %v2005, %v2619
      %v2684 = vadd.f32 %v2006, %v2624
      %v2685 = vadd.f32 %v2007, %v2627
      %v2686 = vadd.f32 %v2008, %v2632
      %v2687 = vadd.f32 %v2009, %v2635
      %v2688 = vadd.f32 %v2010, %v2640
      %v2689 = vadd.f32 %v2011, %v2643
      %v2690 = vadd.f32 %v2012, %v2648
      %v2691 = vadd.f32 %v2013, %v2651
      %v2692 = vadd.f32 %v2014, %v2656
      %v2693 = vadd.f32 %v2015, %v2659
      %v2710 = vrot.slane %v1642, 5
      %v2711 = vrot.slane %v2710, 4
      %v2712 = vrot.slane %v1643, 5
      %v2713 = vsel %vm1231, %v2711, %v2712
      %v2714 = vrot.slane %v2712, 4
      %v2715 = vrot.slane %v1644, 5
      %v2716 = vsel %vm1231, %v2714, %v2715
      %v2717 = vrot.slane %v1645, 5
      %v2718 = vrot.slane %v2717, 4
      %v2719 = vrot.slane %v1646, 5
      %v2720 = vsel %vm1231, %v2718, %v2719
      %v2721 = vrot.slane %v2719, 4
      %v2722 = vrot.slane %v1647, 5
      %v2723 = vsel %vm1231, %v2721, %v2722
      %v2724 = vrot.slane %v1648, 5
      %v2725 = vrot.slane %v2724, 4
      %v2726 = vrot.slane %v1649, 5
      %v2727 = vsel %vm1231, %v2725, %v2726
      %v2728 = vrot.slane %v2726, 4
      %v2729 = vrot.slane %v1650, 5
      %v2730 = vsel %vm1231, %v2728, %v2729
      %v2731 = vrot.slane %v1651, 5
      %v2732 = vrot.slane %v2731, 4
      %v2733 = vrot.slane %v1652, 5
      %v2734 = vsel %vm1231, %v2732, %v2733
      %v2735 = vrot.slane %v2733, 4
      %v2736 = vrot.slane %v1653, 5
      %v2737 = vsel %vm1231, %v2735, %v2736
      %v2738 = vrot.slane %v1654, 5
      %v2739 = vrot.slane %v2738, 4
      %v2740 = vrot.slane %v1655, 5
      %v2741 = vsel %vm1231, %v2739, %v2740
      %v2742 = vrot.slane %v2740, 4
      %v2743 = vrot.slane %v1656, 5
      %v2744 = vsel %vm1231, %v2742, %v2743
      %v2745 = vrot.slane %v1657, 5
      %v2746 = vrot.slane %v2745, 4
      %v2747 = vrot.slane %v1658, 5
      %v2748 = vsel %vm1231, %v2746, %v2747
      %v2749 = vrot.slane %v2747, 4
      %v2750 = vrot.slane %v1659, 5
      %v2751 = vsel %vm1231, %v2749, %v2750
      %v2752 = vrot.slane %v1660, 5
      %v2753 = vrot.slane %v2752, 4
      %v2754 = vrot.slane %v1661, 5
      %v2755 = vsel %vm1231, %v2753, %v2754
      %v2756 = vrot.slane %v2754, 4
      %v2757 = vrot.slane %v1662, 5
      %v2758 = vsel %vm1231, %v2756, %v2757
      %v2759 = vrot.slane %v1663, 5
      %v2760 = vrot.slane %v2759, 4
      %v2761 = vrot.slane %v1664, 5
      %v2762 = vsel %vm1231, %v2760, %v2761
      %v2763 = vrot.slane %v2761, 4
      %v2764 = vrot.slane %v1665, 5
      %v2765 = vsel %vm1231, %v2763, %v2764
      %v2766 = vrot.slane %v1666, 5
      %v2767 = vrot.slane %v2766, 4
      %v2768 = vrot.slane %v1667, 5
      %v2769 = vsel %vm1231, %v2767, %v2768
      %v2770 = vrot.slane %v2768, 4
      %v2771 = vrot.slane %v1668, 5
      %v2772 = vsel %vm1231, %v2770, %v2771
      %v2773 = vrot.slane %v1669, 5
      %v2774 = vrot.slane %v2773, 4
      %v2775 = vrot.slane %v1670, 5
      %v2776 = vsel %vm1231, %v2774, %v2775
      %v2777 = vrot.slane %v2775, 4
      %v2778 = vrot.slane %v1671, 5
      %v2779 = vsel %vm1231, %v2777, %v2778
      %v2780 = vrot.slane %v1672, 5
      %v2781 = vrot.slane %v2780, 4
      %v2782 = vrot.slane %v1673, 5
      %v2783 = vsel %vm1231, %v2781, %v2782
      %v2784 = vrot.slane %v2782, 4
      %v2785 = vrot.slane %v1674, 5
      %v2786 = vsel %vm1231, %v2784, %v2785
      %v2787 = vrot.slane %v1675, 5
      %v2788 = vrot.slane %v2787, 4
      %v2789 = vrot.slane %v1676, 5
      %v2790 = vsel %vm1231, %v2788, %v2789
      %v2791 = vrot.slane %v2789, 4
      %v2792 = vrot.slane %v1677, 5
      %v2793 = vsel %vm1231, %v2791, %v2792
      %v2794 = vrot.slane %v1678, 5
      %v2795 = vrot.slane %v2794, 4
      %v2796 = vrot.slane %v1679, 5
      %v2797 = vsel %vm1231, %v2795, %v2796
      %v2798 = vrot.slane %v2796, 4
      %v2799 = vrot.slane %v1680, 5
      %v2800 = vsel %vm1231, %v2798, %v2799
      %v2801 = vrot.slane %v1681, 5
      %v2802 = vrot.slane %v2801, 4
      %v2803 = vrot.slane %v1682, 5
      %v2804 = vsel %vm1231, %v2802, %v2803
      %v2805 = vrot.slane %v2803, 4
      %v2806 = vrot.slane %v1683, 5
      %v2807 = vsel %vm1231, %v2805, %v2806
      %v2808 = vrot.slane %v1684, 5
      %v2809 = vrot.slane %v2808, 4
      %v2810 = vrot.slane %v1685, 5
      %v2811 = vsel %vm1231, %v2809, %v2810
      %v2812 = vrot.slane %v2810, 4
      %v2813 = vrot.slane %v1686, 5
      %v2814 = vsel %vm1231, %v2812, %v2813
      %v2815 = vrot.slane %v1687, 5
      %v2816 = vrot.slane %v2815, 4
      %v2817 = vrot.slane %v1688, 5
      %v2818 = vsel %vm1231, %v2816, %v2817
      %v2819 = vrot.slane %v2817, 4
      %v2820 = vrot.slane %v1689, 5
      %v2821 = vsel %vm1231, %v2819, %v2820
      %s2822 = scalar_lea.vmem %s204, 10
      %v2823 = vld [vmem:[%s2822] sm:$0x3]
      %v2824 = vunpack.c.l.b16 %v2713
      %v2825 = vunpack.c.l.b16 %v2716
      %v2826 = vunpack.c.l.b16 %v2720
      %v2827 = vunpack.c.l.b16 %v2723
      %v2828 = vunpack.c.l.b16 %v2727
      %v2829 = vunpack.c.l.b16 %v2730
      %v2830 = vunpack.c.l.b16 %v2734
      %v2831 = vunpack.c.l.b16 %v2737
      %v2832 = vunpack.c.l.b16 %v2741
      %v2833 = vunpack.c.l.b16 %v2744
      %v2834 = vunpack.c.l.b16 %v2748
      %v2835 = vunpack.c.l.b16 %v2751
      %v2836 = vunpack.c.l.b16 %v2755
      %v2837 = vunpack.c.l.b16 %v2758
      %v2838 = vunpack.c.l.b16 %v2762
      %v2839 = vunpack.c.l.b16 %v2765
      %v2840 = vunpack.c.l.b16 %v2769
      %v2841 = vunpack.c.l.b16 %v2772
      %v2842 = vunpack.c.l.b16 %v2776
      %v2843 = vunpack.c.l.b16 %v2779
      %v2844 = vunpack.c.l.b16 %v2783
      %v2845 = vunpack.c.l.b16 %v2786
      %v2846 = vunpack.c.l.b16 %v2790
      %v2847 = vunpack.c.l.b16 %v2793
      %v2848 = vunpack.c.l.b16 %v2797
      %v2849 = vunpack.c.l.b16 %v2800
      %v2850 = vunpack.c.l.b16 %v2804
      %v2851 = vunpack.c.l.b16 %v2807
      %v2852 = vunpack.c.l.b16 %v2811
      %v2853 = vunpack.c.l.b16 %v2814
      %v2854 = vunpack.c.l.b16 %v2818
      %v2855 = vunpack.c.l.b16 %v2821
      %v2856 = vpack.c.b16 %v2825, %v2824
      %v2857 = vpack.c.b16 %v2827, %v2826
      %v2858 = vpack.c.b16 %v2829, %v2828
      %v2859 = vpack.c.b16 %v2831, %v2830
      %v2860 = vpack.c.b16 %v2833, %v2832
      %v2861 = vpack.c.b16 %v2835, %v2834
      %v2862 = vpack.c.b16 %v2837, %v2836
      %v2863 = vpack.c.b16 %v2839, %v2838
      %v2864 = vpack.c.b16 %v2841, %v2840
      %v2865 = vpack.c.b16 %v2843, %v2842
      %v2866 = vpack.c.b16 %v2845, %v2844
      %v2867 = vpack.c.b16 %v2847, %v2846
      %v2868 = vpack.c.b16 %v2849, %v2848
      %v2869 = vpack.c.b16 %v2851, %v2850
      %v2870 = vpack.c.b16 %v2853, %v2852
      %v2871 = vpack.c.b16 %v2855, %v2854
      %v2873 = vsel %vm707, %v2856, 0
      %v2876 = vsel %vm707, %v2857, 0
      %v2879 = vsel %vm707, %v2858, 0
      %v2882 = vsel %vm707, %v2859, 0
      %v2885 = vsel %vm707, %v2860, 0
      %v2888 = vsel %vm707, %v2861, 0
      %v2891 = vsel %vm707, %v2862, 0
      %v2894 = vsel %vm707, %v2863, 0
      %v2897 = vsel %vm707, %v2864, 0
      %v2900 = vsel %vm707, %v2865, 0
      %v2903 = vsel %vm707, %v2866, 0
      %v2906 = vsel %vm707, %v2867, 0
      %v2909 = vsel %vm707, %v2868, 0
      %v2912 = vsel %vm707, %v2869, 0
      %v2915 = vsel %vm707, %v2870, 0
      %v2918 = vsel %vm707, %v2871, 0
      %v2921 = vsel %vm756, %v2823, 0
      %2923 = vmatprep.subr.bf16.mxu0 0
      %2924 = vmatpush1.bf16.msra.mxu0 %v2921
      %2925 = vmatprep.subr.bf16.mxu0 0
      %2926 = vmatpush1.bf16.msra.mxu0 0
      %2927 = vmatprep.subr.bf16.mxu0 0
      %2928 = vmatpush1.bf16.msra.mxu0 0
      %2929 = vmatprep.subr.bf16.mxu0 0
      %2930 = vmatpush1.bf16.msra.mxu0 0
      %2931 = vmatprep.subr.bf16.mxu0 0
      %2932 = vmatpush1.bf16.msra.mxu0 0
      %2933 = vmatprep.subr.bf16.mxu0 0
      %2934 = vmatpush1.bf16.msra.mxu0 0
      %2935 = vmatprep.subr.bf16.mxu0 0
      %2936 = vmatpush1.bf16.msra.mxu0 0
      %2937 = vmatprep.subr.bf16.mxu0 0
      %2938 = vmatpush1.bf16.msra.mxu0 0
      %2939 = vmatprep.subr.bf16.mxu0 0
      %2940 = vmatpush1.bf16.msra.mxu0 0
      %2941 = vmatprep.subr.bf16.mxu0 0
      %2942 = vmatpush1.bf16.msra.mxu0 0
      %2943 = vmatprep.subr.bf16.mxu0 0
      %2944 = vmatpush1.bf16.msra.mxu0 0
      %2945 = vmatprep.subr.bf16.mxu0 0
      %2946 = vmatpush1.bf16.msra.mxu0 0
      %2947 = vmatprep.subr.bf16.mxu0 0
      %2948 = vmatpush1.bf16.msra.mxu0 0
      %2949 = vmatprep.subr.bf16.mxu0 0
      %2950 = vmatpush1.bf16.msra.mxu0 0
      %2951 = vmatprep.subr.bf16.mxu0 0
      %2952 = vmatpush1.bf16.msra.mxu0 0
      %2953 = vmatprep.subr.bf16.mxu0 0
      %2954 = vmatpush1.bf16.msra.mxu0 0
      %2955 = vmatprep.mubr.bf16.mxu0 0
      %2956 = vmatmul.mubr.bf16.gmra.mrb[0].mxu0 %v2873
      %v2957 = vpop.f32.mrb[0].mxu0
      %v2958 = vadd.f32 0.0, %v2957
      %v2959 = vpop.f32.mrb[0].mxu0
      %v2960 = vpop.f32.mrb[0].mxu0
      %v2961 = vadd.f32 0.0, %v2960
      %v2962 = vpop.f32.mrb[0].mxu0
      %2963 = vmatprep.mubr.bf16.mxu0 0
      %2964 = vmatmul.mubr.bf16.gmra.mrb[0].mxu0 %v2876
      %v2965 = vpop.f32.mrb[0].mxu0
      %v2966 = vadd.f32 0.0, %v2965
      %v2967 = vpop.f32.mrb[0].mxu0
      %v2968 = vpop.f32.mrb[0].mxu0
      %v2969 = vadd.f32 0.0, %v2968
      %v2970 = vpop.f32.mrb[0].mxu0
      %2971 = vmatprep.mubr.bf16.mxu0 0
      %2972 = vmatmul.mubr.bf16.gmra.mrb[0].mxu0 %v2879
      %v2973 = vpop.f32.mrb[0].mxu0
      %v2974 = vadd.f32 0.0, %v2973
      %v2975 = vpop.f32.mrb[0].mxu0
      %v2976 = vpop.f32.mrb[0].mxu0
      %v2977 = vadd.f32 0.0, %v2976
      %v2978 = vpop.f32.mrb[0].mxu0
      %2979 = vmatprep.mubr.bf16.mxu0 0
      %2980 = vmatmul.mubr.bf16.gmra.mrb[0].mxu0 %v2882
      %v2981 = vpop.f32.mrb[0].mxu0
      %v2982 = vadd.f32 0.0, %v2981
      %v2983 = vpop.f32.mrb[0].mxu0
      %v2984 = vpop.f32.mrb[0].mxu0
      %v2985 = vadd.f32 0.0, %v2984
      %v2986 = vpop.f32.mrb[0].mxu0
      %2987 = vmatprep.mubr.bf16.mxu0 0
      %2988 = vmatmul.mubr.bf16.gmra.mrb[0].mxu0 %v2885
      %v2989 = vpop.f32.mrb[0].mxu0
      %v2990 = vadd.f32 0.0, %v2989
      %v2991 = vpop.f32.mrb[0].mxu0
      %v2992 = vpop.f32.mrb[0].mxu0
      %v2993 = vadd.f32 0.0, %v2992
      %v2994 = vpop.f32.mrb[0].mxu0
      %2995 = vmatprep.mubr.bf16.mxu0 0
      %2996 = vmatmul.mubr.bf16.gmra.mrb[0].mxu0 %v2888
      %v2997 = vpop.f32.mrb[0].mxu0
      %v2998 = vadd.f32 0.0, %v2997
      %v2999 = vpop.f32.mrb[0].mxu0
      %v3000 = vpop.f32.mrb[0].mxu0
      %v3001 = vadd.f32 0.0, %v3000
      %v3002 = vpop.f32.mrb[0].mxu0
      %3003 = vmatprep.mubr.bf16.mxu0 0
      %3004 = vmatmul.mubr.bf16.gmra.mrb[0].mxu0 %v2891
      %v3005 = vpop.f32.mrb[0].mxu0
      %v3006 = vadd.f32 0.0, %v3005
      %v3007 = vpop.f32.mrb[0].mxu0
      %v3008 = vpop.f32.mrb[0].mxu0
      %v3009 = vadd.f32 0.0, %v3008
      %v3010 = vpop.f32.mrb[0].mxu0
      %3011 = vmatprep.mubr.bf16.mxu0 0
      %3012 = vmatmul.mubr.bf16.gmra.mrb[0].mxu0 %v2894
      %v3013 = vpop.f32.mrb[0].mxu0
      %v3014 = vadd.f32 0.0, %v3013
      %v3015 = vpop.f32.mrb[0].mxu0
      %v3016 = vpop.f32.mrb[0].mxu0
      %v3017 = vadd.f32 0.0, %v3016
      %v3018 = vpop.f32.mrb[0].mxu0
      %3019 = vmatprep.mubr.bf16.mxu0 0
      %3020 = vmatmul.mubr.bf16.gmra.mrb[0].mxu0 %v2897
      %v3021 = vpop.f32.mrb[0].mxu0
      %v3022 = vadd.f32 0.0, %v3021
      %v3023 = vpop.f32.mrb[0].mxu0
      %v3024 = vpop.f32.mrb[0].mxu0
      %v3025 = vadd.f32 0.0, %v3024
      %v3026 = vpop.f32.mrb[0].mxu0
      %3027 = vmatprep.mubr.bf16.mxu0 0
      %3028 = vmatmul.mubr.bf16.gmra.mrb[0].mxu0 %v2900
      %v3029 = vpop.f32.mrb[0].mxu0
      %v3030 = vadd.f32 0.0, %v3029
      %v3031 = vpop.f32.mrb[0].mxu0
      %v3032 = vpop.f32.mrb[0].mxu0
      %v3033 = vadd.f32 0.0, %v3032
      %v3034 = vpop.f32.mrb[0].mxu0
      %3035 = vmatprep.mubr.bf16.mxu0 0
      %3036 = vmatmul.mubr.bf16.gmra.mrb[0].mxu0 %v2903
      %v3037 = vpop.f32.mrb[0].mxu0
      %v3038 = vadd.f32 0.0, %v3037
      %v3039 = vpop.f32.mrb[0].mxu0
      %v3040 = vpop.f32.mrb[0].mxu0
      %v3041 = vadd.f32 0.0, %v3040
      %v3042 = vpop.f32.mrb[0].mxu0
      %3043 = vmatprep.mubr.bf16.mxu0 0
      %3044 = vmatmul.mubr.bf16.gmra.mrb[0].mxu0 %v2906
      %v3045 = vpop.f32.mrb[0].mxu0
      %v3046 = vadd.f32 0.0, %v3045
      %v3047 = vpop.f32.mrb[0].mxu0
      %v3048 = vpop.f32.mrb[0].mxu0
      %v3049 = vadd.f32 0.0, %v3048
      %v3050 = vpop.f32.mrb[0].mxu0
      %3051 = vmatprep.mubr.bf16.mxu0 0
      %3052 = vmatmul.mubr.bf16.gmra.mrb[0].mxu0 %v2909
      %v3053 = vpop.f32.mrb[0].mxu0
      %v3054 = vadd.f32 0.0, %v3053
      %v3055 = vpop.f32.mrb[0].mxu0
      %v3056 = vpop.f32.mrb[0].mxu0
      %v3057 = vadd.f32 0.0, %v3056
      %v3058 = vpop.f32.mrb[0].mxu0
      %3059 = vmatprep.mubr.bf16.mxu0 0
      %3060 = vmatmul.mubr.bf16.gmra.mrb[0].mxu0 %v2912
      %v3061 = vpop.f32.mrb[0].mxu0
      %v3062 = vadd.f32 0.0, %v3061
      %v3063 = vpop.f32.mrb[0].mxu0
      %v3064 = vpop.f32.mrb[0].mxu0
      %v3065 = vadd.f32 0.0, %v3064
      %v3066 = vpop.f32.mrb[0].mxu0
      %3067 = vmatprep.mubr.bf16.mxu0 0
      %3068 = vmatmul.mubr.bf16.gmra.mrb[0].mxu0 %v2915
      %v3069 = vpop.f32.mrb[0].mxu0
      %v3070 = vadd.f32 0.0, %v3069
      %v3071 = vpop.f32.mrb[0].mxu0
      %v3072 = vpop.f32.mrb[0].mxu0
      %v3073 = vadd.f32 0.0, %v3072
      %v3074 = vpop.f32.mrb[0].mxu0
      %3075 = vmatprep.mubr.bf16.mxu0 0
      %3076 = vmatmul.mubr.bf16.gmra.mrb[0].mxu0 %v2918
      %v3077 = vpop.f32.mrb[0].mxu0
      %v3078 = vadd.f32 0.0, %v3077
      %v3079 = vpop.f32.mrb[0].mxu0
      %v3080 = vpop.f32.mrb[0].mxu0
      %v3081 = vadd.f32 0.0, %v3080
      %v3082 = vpop.f32.mrb[0].mxu0
      %3083 = vdwg.mxu0
      %v3084 = vadd.f32 %v2662, %v2958
      %v3085 = vadd.f32 %v2663, %v2961
      %v3086 = vadd.f32 %v2664, %v2966
      %v3087 = vadd.f32 %v2665, %v2969
      %v3088 = vadd.f32 %v2666, %v2974
      %v3089 = vadd.f32 %v2667, %v2977
      %v3090 = vadd.f32 %v2668, %v2982
      %v3091 = vadd.f32 %v2669, %v2985
      %v3092 = vadd.f32 %v2670, %v2990
      %v3093 = vadd.f32 %v2671, %v2993
      %v3094 = vadd.f32 %v2672, %v2998
      %v3095 = vadd.f32 %v2673, %v3001
      %v3096 = vadd.f32 %v2674, %v3006
      %v3097 = vadd.f32 %v2675, %v3009
      %v3098 = vadd.f32 %v2676, %v3014
      %v3099 = vadd.f32 %v2677, %v3017
      %v3100 = vadd.f32 %v2678, %v3022
      %v3101 = vadd.f32 %v2679, %v3025
      %v3102 = vadd.f32 %v2680, %v3030
      %v3103 = vadd.f32 %v2681, %v3033
      %v3104 = vadd.f32 %v2682, %v3038
      %v3105 = vadd.f32 %v2683, %v3041
      %v3106 = vadd.f32 %v2684, %v3046
      %v3107 = vadd.f32 %v2685, %v3049
      %v3108 = vadd.f32 %v2686, %v3054
      %v3109 = vadd.f32 %v2687, %v3057
      %v3110 = vadd.f32 %v2688, %v3062
      %v3111 = vadd.f32 %v2689, %v3065
      %v3112 = vadd.f32 %v2690, %v3070
      %v3113 = vadd.f32 %v2691, %v3073
      %v3114 = vadd.f32 %v2692, %v3078
      %v3115 = vadd.f32 %v2693, %v3081
      %s3116 = sadd.s32 %s217, 2
      %s3117 = smul.u32 %s3116, 3
      %s3118 = smul.addr %s3117, 4
      %s3119 = scalar_lea.vmem %s199, %s3118
      %v3120 = vld [vmem:[%s3119] sm:$0xf]
      %v3121 = vld [vmem:[%s3119 + $0x4] sm:$0xf]
      %v3122 = vld [vmem:[%s3119 + $0x8] sm:$0x1]
      %v3123 = vld [vmem:[%s3119 + $0xc] sm:$0xf]
      %v3124 = vld [vmem:[%s3119 + $0x10] sm:$0xf]
      %v3125 = vld [vmem:[%s3119 + $0x14] sm:$0x1]
      %v3126 = vld [vmem:[%s3119 + $0x18] sm:$0xf]
      %v3127 = vld [vmem:[%s3119 + $0x1c] sm:$0xf]
      %v3128 = vld [vmem:[%s3119 + $0x20] sm:$0x1]
      %v3129 = vld [vmem:[%s3119 + $0x24] sm:$0xf]
      %v3130 = vld [vmem:[%s3119 + $0x28] sm:$0xf]
      %v3131 = vld [vmem:[%s3119 + $0x2c] sm:$0x1]
      %v3132 = vld [vmem:[%s3119 + $0x30] sm:$0xf]
      %v3133 = vld [vmem:[%s3119 + $0x34] sm:$0xf]
      %v3134 = vld [vmem:[%s3119 + $0x38] sm:$0x1]
      %v3135 = vld [vmem:[%s3119 + $0x3c] sm:$0xf]
      %v3136 = vld [vmem:[%s3119 + $0x40] sm:$0xf]
      %v3137 = vld [vmem:[%s3119 + $0x44] sm:$0x1]
      %v3138 = vld [vmem:[%s3119 + $0x48] sm:$0xf]
      %v3139 = vld [vmem:[%s3119 + $0x4c] sm:$0xf]
      %v3140 = vld [vmem:[%s3119 + $0x50] sm:$0x1]
      %v3141 = vld [vmem:[%s3119 + $0x54] sm:$0xf]
      %v3142 = vld [vmem:[%s3119 + $0x58] sm:$0xf]
      %v3143 = vld [vmem:[%s3119 + $0x5c] sm:$0x1]
      %v3144 = vld [vmem:[%s3119 + $0x60] sm:$0xf]
      %v3145 = vld [vmem:[%s3119 + $0x64] sm:$0xf]
      %v3146 = vld [vmem:[%s3119 + $0x68] sm:$0x1]
      %v3147 = vld [vmem:[%s3119 + $0x6c] sm:$0xf]
      %v3148 = vld [vmem:[%s3119 + $0x70] sm:$0xf]
      %v3149 = vld [vmem:[%s3119 + $0x74] sm:$0x1]
      %v3150 = vld [vmem:[%s3119 + $0x78] sm:$0xf]
      %v3151 = vld [vmem:[%s3119 + $0x7c] sm:$0xf]
      %v3152 = vld [vmem:[%s3119 + $0x80] sm:$0x1]
      %v3153 = vld [vmem:[%s3119 + $0x84] sm:$0xf]
      %v3154 = vld [vmem:[%s3119 + $0x88] sm:$0xf]
      %v3155 = vld [vmem:[%s3119 + $0x8c] sm:$0x1]
      %v3156 = vld [vmem:[%s3119 + $0x90] sm:$0xf]
      %v3157 = vld [vmem:[%s3119 + $0x94] sm:$0xf]
      %v3158 = vld [vmem:[%s3119 + $0x98] sm:$0x1]
      %v3159 = vld [vmem:[%s3119 + $0x9c] sm:$0xf]
      %v3160 = vld [vmem:[%s3119 + $0xa0] sm:$0xf]
      %v3161 = vld [vmem:[%s3119 + $0xa4] sm:$0x1]
      %v3162 = vld [vmem:[%s3119 + $0xa8] sm:$0xf]
      %v3163 = vld [vmem:[%s3119 + $0xac] sm:$0xf]
      %v3164 = vld [vmem:[%s3119 + $0xb0] sm:$0x1]
      %v3165 = vld [vmem:[%s3119 + $0xb4] sm:$0xf]
      %v3166 = vld [vmem:[%s3119 + $0xb8] sm:$0xf]
      %v3167 = vld [vmem:[%s3119 + $0xbc] sm:$0x1]
      %s3168 = scalar_lea.vmem %s204, 12
      %v3169 = vld [vmem:[%s3168] sm:$0x3]
      %v3202 = vunpack.c.l.b16 %v3120
      %v3203 = vunpack.c.l.b16 %v3121
      %v3204 = vunpack.c.l.b16 %v3123
      %v3205 = vunpack.c.l.b16 %v3124
      %v3206 = vunpack.c.l.b16 %v3126
      %v3207 = vunpack.c.l.b16 %v3127
      %v3208 = vunpack.c.l.b16 %v3129
      %v3209 = vunpack.c.l.b16 %v3130
      %v3210 = vunpack.c.l.b16 %v3132
      %v3211 = vunpack.c.l.b16 %v3133
      %v3212 = vunpack.c.l.b16 %v3135
      %v3213 = vunpack.c.l.b16 %v3136
      %v3214 = vunpack.c.l.b16 %v3138
      %v3215 = vunpack.c.l.b16 %v3139
      %v3216 = vunpack.c.l.b16 %v3141
      %v3217 = vunpack.c.l.b16 %v3142
      %v3218 = vunpack.c.l.b16 %v3144
      %v3219 = vunpack.c.l.b16 %v3145
      %v3220 = vunpack.c.l.b16 %v3147
      %v3221 = vunpack.c.l.b16 %v3148
      %v3222 = vunpack.c.l.b16 %v3150
      %v3223 = vunpack.c.l.b16 %v3151
      %v3224 = vunpack.c.l.b16 %v3153
      %v3225 = vunpack.c.l.b16 %v3154
      %v3226 = vunpack.c.l.b16 %v3156
      %v3227 = vunpack.c.l.b16 %v3157
      %v3228 = vunpack.c.l.b16 %v3159
      %v3229 = vunpack.c.l.b16 %v3160
      %v3230 = vunpack.c.l.b16 %v3162
      %v3231 = vunpack.c.l.b16 %v3163
      %v3232 = vunpack.c.l.b16 %v3165
      %v3233 = vunpack.c.l.b16 %v3166
      %v3234 = vpack.c.b16 %v3203, %v3202
      %v3235 = vpack.c.b16 %v3205, %v3204
      %v3236 = vpack.c.b16 %v3207, %v3206
      %v3237 = vpack.c.b16 %v3209, %v3208
      %v3238 = vpack.c.b16 %v3211, %v3210
      %v3239 = vpack.c.b16 %v3213, %v3212
      %v3240 = vpack.c.b16 %v3215, %v3214
      %v3241 = vpack.c.b16 %v3217, %v3216
      %v3242 = vpack.c.b16 %v3219, %v3218
      %v3243 = vpack.c.b16 %v3221, %v3220
      %v3244 = vpack.c.b16 %v3223, %v3222
      %v3245 = vpack.c.b16 %v3225, %v3224
      %v3246 = vpack.c.b16 %v3227, %v3226
      %v3247 = vpack.c.b16 %v3229, %v3228
      %v3248 = vpack.c.b16 %v3231, %v3230
      %v3249 = vpack.c.b16 %v3233, %v3232
      %v3251 = vsel %vm707, %v3234, 0
      %v3254 = vsel %vm707, %v3235, 0
      %v3257 = vsel %vm707, %v3236, 0
      %v3260 = vsel %vm707, %v3237, 0
      %v3263 = vsel %vm707, %v3238, 0
      %v3266 = vsel %vm707, %v3239, 0
      %v3269 = vsel %vm707, %v3240, 0
      %v3272 = vsel %vm707, %v3241, 0
      %v3275 = vsel %vm707, %v3242, 0
      %v3278 = vsel %vm707, %v3243, 0
      %v3281 = vsel %vm707, %v3244, 0
      %v3284 = vsel %vm707, %v3245, 0
      %v3287 = vsel %vm707, %v3246, 0
      %v3290 = vsel %vm707, %v3247, 0
      %v3293 = vsel %vm707, %v3248, 0
      %v3296 = vsel %vm707, %v3249, 0
      %v3299 = vsel %vm756, %v3169, 0
      %3301 = vmatprep.subr.bf16.mxu0 0
      %3302 = vmatpush1.bf16.msra.mxu0 %v3299
      %3303 = vmatprep.subr.bf16.mxu0 0
      %3304 = vmatpush1.bf16.msra.mxu0 0
      %3305 = vmatprep.subr.bf16.mxu0 0
      %3306 = vmatpush1.bf16.msra.mxu0 0
      %3307 = vmatprep.subr.bf16.mxu0 0
      %3308 = vmatpush1.bf16.msra.mxu0 0
      %3309 = vmatprep.subr.bf16.mxu0 0
      %3310 = vmatpush1.bf16.msra.mxu0 0
      %3311 = vmatprep.subr.bf16.mxu0 0
      %3312 = vmatpush1.bf16.msra.mxu0 0
      %3313 = vmatprep.subr.bf16.mxu0 0
      %3314 = vmatpush1.bf16.msra.mxu0 0
      %3315 = vmatprep.subr.bf16.mxu0 0
      %3316 = vmatpush1.bf16.msra.mxu0 0
      %3317 = vmatprep.subr.bf16.mxu0 0
      %3318 = vmatpush1.bf16.msra.mxu0 0
      %3319 = vmatprep.subr.bf16.mxu0 0
      %3320 = vmatpush1.bf16.msra.mxu0 0
      %3321 = vmatprep.subr.bf16.mxu0 0
      %3322 = vmatpush1.bf16.msra.mxu0 0
      %3323 = vmatprep.subr.bf16.mxu0 0
      %3324 = vmatpush1.bf16.msra.mxu0 0
      %3325 = vmatprep.subr.bf16.mxu0 0
      %3326 = vmatpush1.bf16.msra.mxu0 0
      %3327 = vmatprep.subr.bf16.mxu0 0
      %3328 = vmatpush1.bf16.msra.mxu0 0
      %3329 = vmatprep.subr.bf16.mxu0 0
      %3330 = vmatpush1.bf16.msra.mxu0 0
      %3331 = vmatprep.subr.bf16.mxu0 0
      %3332 = vmatpush1.bf16.msra.mxu0 0
      %3333 = vmatprep.mubr.bf16.mxu0 0
      %3334 = vmatmul.mubr.bf16.gmra.mrb[0].mxu0 %v3251
      %v3335 = vpop.f32.mrb[0].mxu0
      %v3336 = vadd.f32 0.0, %v3335
      %v3337 = vpop.f32.mrb[0].mxu0
      %v3338 = vpop.f32.mrb[0].mxu0
      %v3339 = vadd.f32 0.0, %v3338
      %v3340 = vpop.f32.mrb[0].mxu0
      %3341 = vmatprep.mubr.bf16.mxu0 0
      %3342 = vmatmul.mubr.bf16.gmra.mrb[0].mxu0 %v3254
      %v3343 = vpop.f32.mrb[0].mxu0
      %v3344 = vadd.f32 0.0, %v3343
      %v3345 = vpop.f32.mrb[0].mxu0
      %v3346 = vpop.f32.mrb[0].mxu0
      %v3347 = vadd.f32 0.0, %v3346
      %v3348 = vpop.f32.mrb[0].mxu0
      %3349 = vmatprep.mubr.bf16.mxu0 0
      %3350 = vmatmul.mubr.bf16.gmra.mrb[0].mxu0 %v3257
      %v3351 = vpop.f32.mrb[0].mxu0
      %v3352 = vadd.f32 0.0, %v3351
      %v3353 = vpop.f32.mrb[0].mxu0
      %v3354 = vpop.f32.mrb[0].mxu0
      %v3355 = vadd.f32 0.0, %v3354
      %v3356 = vpop.f32.mrb[0].mxu0
      %3357 = vmatprep.mubr.bf16.mxu0 0
      %3358 = vmatmul.mubr.bf16.gmra.mrb[0].mxu0 %v3260
      %v3359 = vpop.f32.mrb[0].mxu0
      %v3360 = vadd.f32 0.0, %v3359
      %v3361 = vpop.f32.mrb[0].mxu0
      %v3362 = vpop.f32.mrb[0].mxu0
      %v3363 = vadd.f32 0.0, %v3362
      %v3364 = vpop.f32.mrb[0].mxu0
      %3365 = vmatprep.mubr.bf16.mxu0 0
      %3366 = vmatmul.mubr.bf16.gmra.mrb[0].mxu0 %v3263
      %v3367 = vpop.f32.mrb[0].mxu0
      %v3368 = vadd.f32 0.0, %v3367
      %v3369 = vpop.f32.mrb[0].mxu0
      %v3370 = vpop.f32.mrb[0].mxu0
      %v3371 = vadd.f32 0.0, %v3370
      %v3372 = vpop.f32.mrb[0].mxu0
      %3373 = vmatprep.mubr.bf16.mxu0 0
      %3374 = vmatmul.mubr.bf16.gmra.mrb[0].mxu0 %v3266
      %v3375 = vpop.f32.mrb[0].mxu0
      %v3376 = vadd.f32 0.0, %v3375
      %v3377 = vpop.f32.mrb[0].mxu0
      %v3378 = vpop.f32.mrb[0].mxu0
      %v3379 = vadd.f32 0.0, %v3378
      %v3380 = vpop.f32.mrb[0].mxu0
      %3381 = vmatprep.mubr.bf16.mxu0 0
      %3382 = vmatmul.mubr.bf16.gmra.mrb[0].mxu0 %v3269
      %v3383 = vpop.f32.mrb[0].mxu0
      %v3384 = vadd.f32 0.0, %v3383
      %v3385 = vpop.f32.mrb[0].mxu0
      %v3386 = vpop.f32.mrb[0].mxu0
      %v3387 = vadd.f32 0.0, %v3386
      %v3388 = vpop.f32.mrb[0].mxu0
      %3389 = vmatprep.mubr.bf16.mxu0 0
      %3390 = vmatmul.mubr.bf16.gmra.mrb[0].mxu0 %v3272
      %v3391 = vpop.f32.mrb[0].mxu0
      %v3392 = vadd.f32 0.0, %v3391
      %v3393 = vpop.f32.mrb[0].mxu0
      %v3394 = vpop.f32.mrb[0].mxu0
      %v3395 = vadd.f32 0.0, %v3394
      %v3396 = vpop.f32.mrb[0].mxu0
      %3397 = vmatprep.mubr.bf16.mxu0 0
      %3398 = vmatmul.mubr.bf16.gmra.mrb[0].mxu0 %v3275
      %v3399 = vpop.f32.mrb[0].mxu0
      %v3400 = vadd.f32 0.0, %v3399
      %v3401 = vpop.f32.mrb[0].mxu0
      %v3402 = vpop.f32.mrb[0].mxu0
      %v3403 = vadd.f32 0.0, %v3402
      %v3404 = vpop.f32.mrb[0].mxu0
      %3405 = vmatprep.mubr.bf16.mxu0 0
      %3406 = vmatmul.mubr.bf16.gmra.mrb[0].mxu0 %v3278
      %v3407 = vpop.f32.mrb[0].mxu0
      %v3408 = vadd.f32 0.0, %v3407
      %v3409 = vpop.f32.mrb[0].mxu0
      %v3410 = vpop.f32.mrb[0].mxu0
      %v3411 = vadd.f32 0.0, %v3410
      %v3412 = vpop.f32.mrb[0].mxu0
      %3413 = vmatprep.mubr.bf16.mxu0 0
      %3414 = vmatmul.mubr.bf16.gmra.mrb[0].mxu0 %v3281
      %v3415 = vpop.f32.mrb[0].mxu0
      %v3416 = vadd.f32 0.0, %v3415
      %v3417 = vpop.f32.mrb[0].mxu0
      %v3418 = vpop.f32.mrb[0].mxu0
      %v3419 = vadd.f32 0.0, %v3418
      %v3420 = vpop.f32.mrb[0].mxu0
      %3421 = vmatprep.mubr.bf16.mxu0 0
      %3422 = vmatmul.mubr.bf16.gmra.mrb[0].mxu0 %v3284
      %v3423 = vpop.f32.mrb[0].mxu0
      %v3424 = vadd.f32 0.0, %v3423
      %v3425 = vpop.f32.mrb[0].mxu0
      %v3426 = vpop.f32.mrb[0].mxu0
      %v3427 = vadd.f32 0.0, %v3426
      %v3428 = vpop.f32.mrb[0].mxu0
      %3429 = vmatprep.mubr.bf16.mxu0 0
      %3430 = vmatmul.mubr.bf16.gmra.mrb[0].mxu0 %v3287
      %v3431 = vpop.f32.mrb[0].mxu0
      %v3432 = vadd.f32 0.0, %v3431
      %v3433 = vpop.f32.mrb[0].mxu0
      %v3434 = vpop.f32.mrb[0].mxu0
      %v3435 = vadd.f32 0.0, %v3434
      %v3436 = vpop.f32.mrb[0].mxu0
      %3437 = vmatprep.mubr.bf16.mxu0 0
      %3438 = vmatmul.mubr.bf16.gmra.mrb[0].mxu0 %v3290
      %v3439 = vpop.f32.mrb[0].mxu0
      %v3440 = vadd.f32 0.0, %v3439
      %v3441 = vpop.f32.mrb[0].mxu0
      %v3442 = vpop.f32.mrb[0].mxu0
      %v3443 = vadd.f32 0.0, %v3442
      %v3444 = vpop.f32.mrb[0].mxu0
      %3445 = vmatprep.mubr.bf16.mxu0 0
      %3446 = vmatmul.mubr.bf16.gmra.mrb[0].mxu0 %v3293
      %v3447 = vpop.f32.mrb[0].mxu0
      %v3448 = vadd.f32 0.0, %v3447
      %v3449 = vpop.f32.mrb[0].mxu0
      %v3450 = vpop.f32.mrb[0].mxu0
      %v3451 = vadd.f32 0.0, %v3450
      %v3452 = vpop.f32.mrb[0].mxu0
      %3453 = vmatprep.mubr.bf16.mxu0 0
      %3454 = vmatmul.mubr.bf16.gmra.mrb[0].mxu0 %v3296
      %v3455 = vpop.f32.mrb[0].mxu0
      %v3456 = vadd.f32 0.0, %v3455
      %v3457 = vpop.f32.mrb[0].mxu0
      %v3458 = vpop.f32.mrb[0].mxu0
      %v3459 = vadd.f32 0.0, %v3458
      %v3460 = vpop.f32.mrb[0].mxu0
      %3461 = vdwg.mxu0
      %v3462 = vadd.f32 %v3084, %v3336
      %v3463 = vadd.f32 %v3085, %v3339
      %v3464 = vadd.f32 %v3086, %v3344
      %v3465 = vadd.f32 %v3087, %v3347
      %v3466 = vadd.f32 %v3088, %v3352
      %v3467 = vadd.f32 %v3089, %v3355
      %v3468 = vadd.f32 %v3090, %v3360
      %v3469 = vadd.f32 %v3091, %v3363
      %v3470 = vadd.f32 %v3092, %v3368
      %v3471 = vadd.f32 %v3093, %v3371
      %v3472 = vadd.f32 %v3094, %v3376
      %v3473 = vadd.f32 %v3095, %v3379
      %v3474 = vadd.f32 %v3096, %v3384
      %v3475 = vadd.f32 %v3097, %v3387
      %v3476 = vadd.f32 %v3098, %v3392
      %v3477 = vadd.f32 %v3099, %v3395
      %v3478 = vadd.f32 %v3100, %v3400
      %v3479 = vadd.f32 %v3101, %v3403
      %v3480 = vadd.f32 %v3102, %v3408
      %v3481 = vadd.f32 %v3103, %v3411
      %v3482 = vadd.f32 %v3104, %v3416
      %v3483 = vadd.f32 %v3105, %v3419
      %v3484 = vadd.f32 %v3106, %v3424
      %v3485 = vadd.f32 %v3107, %v3427
      %v3486 = vadd.f32 %v3108, %v3432
      %v3487 = vadd.f32 %v3109, %v3435
      %v3488 = vadd.f32 %v3110, %v3440
      %v3489 = vadd.f32 %v3111, %v3443
      %v3490 = vadd.f32 %v3112, %v3448
      %v3491 = vadd.f32 %v3113, %v3451
      %v3492 = vadd.f32 %v3114, %v3456
      %v3493 = vadd.f32 %v3115, %v3459
      %v3495 = vshrl.u32 %v3120, 16
      %v3497 = vrot.slane %v3495, 4
      %v3498 = vshll.u32 %v3120, 16
      %v3500 = vrot.slane %v3498, 5
      %v3501 = vor.u32 %v3497, %v3500
      %v3502 = vrot.slane %v3501, 4
      %v3504 = vshll.u32 %v3121, 16
      %v3506 = vrot.slane %v3504, 5
      %v3507 = vsel %vm272, %v3502, %v3506
      %v3508 = vshrl.u32 %v3121, 16
      %v3510 = vrot.slane %v3508, 4
      %v3511 = vor.u32 %v3510, %v3506
      %v3512 = vrot.slane %v3511, 4
      %v3514 = vshll.u32 %v3122, 16
      %v3516 = vrot.slane %v3514, 5
      %v3517 = vsel %vm272, %v3512, %v3516
      %v3519 = vshrl.u32 %v3123, 16
      %v3521 = vrot.slane %v3519, 4
      %v3522 = vshll.u32 %v3123, 16
      %v3524 = vrot.slane %v3522, 5
      %v3525 = vor.u32 %v3521, %v3524
      %v3526 = vrot.slane %v3525, 4
      %v3528 = vshll.u32 %v3124, 16
      %v3530 = vrot.slane %v3528, 5
      %v3531 = vsel %vm272, %v3526, %v3530
      %v3532 = vshrl.u32 %v3124, 16
      %v3534 = vrot.slane %v3532, 4
      %v3535 = vor.u32 %v3534, %v3530
      %v3536 = vrot.slane %v3535, 4
      %v3538 = vshll.u32 %v3125, 16
      %v3540 = vrot.slane %v3538, 5
      %v3541 = vsel %vm272, %v3536, %v3540
      %v3543 = vshrl.u32 %v3126, 16
      %v3545 = vrot.slane %v3543, 4
      %v3546 = vshll.u32 %v3126, 16
      %v3548 = vrot.slane %v3546, 5
      %v3549 = vor.u32 %v3545, %v3548
      %v3550 = vrot.slane %v3549, 4
      %v3552 = vshll.u32 %v3127, 16
      %v3554 = vrot.slane %v3552, 5
      %v3555 = vsel %vm272, %v3550, %v3554
      %v3556 = vshrl.u32 %v3127, 16
      %v3558 = vrot.slane %v3556, 4
      %v3559 = vor.u32 %v3558, %v3554
      %v3560 = vrot.slane %v3559, 4
      %v3562 = vshll.u32 %v3128, 16
      %v3564 = vrot.slane %v3562, 5
      %v3565 = vsel %vm272, %v3560, %v3564
      %v3567 = vshrl.u32 %v3129, 16
      %v3569 = vrot.slane %v3567, 4
      %v3570 = vshll.u32 %v3129, 16
      %v3572 = vrot.slane %v3570, 5
      %v3573 = vor.u32 %v3569, %v3572
      %v3574 = vrot.slane %v3573, 4
      %v3576 = vshll.u32 %v3130, 16
      %v3578 = vrot.slane %v3576, 5
      %v3579 = vsel %vm272, %v3574, %v3578
      %v3580 = vshrl.u32 %v3130, 16
      %v3582 = vrot.slane %v3580, 4
      %v3583 = vor.u32 %v3582, %v3578
      %v3584 = vrot.slane %v3583, 4
      %v3586 = vshll.u32 %v3131, 16
      %v3588 = vrot.slane %v3586, 5
      %v3589 = vsel %vm272, %v3584, %v3588
      %v3591 = vshrl.u32 %v3132, 16
      %v3593 = vrot.slane %v3591, 4
      %v3594 = vshll.u32 %v3132, 16
      %v3596 = vrot.slane %v3594, 5
      %v3597 = vor.u32 %v3593, %v3596
      %v3598 = vrot.slane %v3597, 4
      %v3600 = vshll.u32 %v3133, 16
      %v3602 = vrot.slane %v3600, 5
      %v3603 = vsel %vm272, %v3598, %v3602
      %v3604 = vshrl.u32 %v3133, 16
      %v3606 = vrot.slane %v3604, 4
      %v3607 = vor.u32 %v3606, %v3602
      %v3608 = vrot.slane %v3607, 4
      %v3610 = vshll.u32 %v3134, 16
      %v3612 = vrot.slane %v3610, 5
      %v3613 = vsel %vm272, %v3608, %v3612
      %v3615 = vshrl.u32 %v3135, 16
      %v3617 = vrot.slane %v3615, 4
      %v3618 = vshll.u32 %v3135, 16
      %v3620 = vrot.slane %v3618, 5
      %v3621 = vor.u32 %v3617, %v3620
      %v3622 = vrot.slane %v3621, 4
      %v3624 = vshll.u32 %v3136, 16
      %v3626 = vrot.slane %v3624, 5
      %v3627 = vsel %vm272, %v3622, %v3626
      %v3628 = vshrl.u32 %v3136, 16
      %v3630 = vrot.slane %v3628, 4
      %v3631 = vor.u32 %v3630, %v3626
      %v3632 = vrot.slane %v3631, 4
      %v3634 = vshll.u32 %v3137, 16
      %v3636 = vrot.slane %v3634, 5
      %v3637 = vsel %vm272, %v3632, %v3636
      %v3639 = vshrl.u32 %v3138, 16
      %v3641 = vrot.slane %v3639, 4
      %v3642 = vshll.u32 %v3138, 16
      %v3644 = vrot.slane %v3642, 5
      %v3645 = vor.u32 %v3641, %v3644
      %v3646 = vrot.slane %v3645, 4
      %v3648 = vshll.u32 %v3139, 16
      %v3650 = vrot.slane %v3648, 5
      %v3651 = vsel %vm272, %v3646, %v3650
      %v3652 = vshrl.u32 %v3139, 16
      %v3654 = vrot.slane %v3652, 4
      %v3655 = vor.u32 %v3654, %v3650
      %v3656 = vrot.slane %v3655, 4
      %v3658 = vshll.u32 %v3140, 16
      %v3660 = vrot.slane %v3658, 5
      %v3661 = vsel %vm272, %v3656, %v3660
      %v3663 = vshrl.u32 %v3141, 16
      %v3665 = vrot.slane %v3663, 4
      %v3666 = vshll.u32 %v3141, 16
      %v3668 = vrot.slane %v3666, 5
      %v3669 = vor.u32 %v3665, %v3668
      %v3670 = vrot.slane %v3669, 4
      %v3672 = vshll.u32 %v3142, 16
      %v3674 = vrot.slane %v3672, 5
      %v3675 = vsel %vm272, %v3670, %v3674
      %v3676 = vshrl.u32 %v3142, 16
      %v3678 = vrot.slane %v3676, 4
      %v3679 = vor.u32 %v3678, %v3674
      %v3680 = vrot.slane %v3679, 4
      %v3682 = vshll.u32 %v3143, 16
      %v3684 = vrot.slane %v3682, 5
      %v3685 = vsel %vm272, %v3680, %v3684
      %v3687 = vshrl.u32 %v3144, 16
      %v3689 = vrot.slane %v3687, 4
      %v3690 = vshll.u32 %v3144, 16
      %v3692 = vrot.slane %v3690, 5
      %v3693 = vor.u32 %v3689, %v3692
      %v3694 = vrot.slane %v3693, 4
      %v3696 = vshll.u32 %v3145, 16
      %v3698 = vrot.slane %v3696, 5
      %v3699 = vsel %vm272, %v3694, %v3698
      %v3700 = vshrl.u32 %v3145, 16
      %v3702 = vrot.slane %v3700, 4
      %v3703 = vor.u32 %v3702, %v3698
      %v3704 = vrot.slane %v3703, 4
      %v3706 = vshll.u32 %v3146, 16
      %v3708 = vrot.slane %v3706, 5
      %v3709 = vsel %vm272, %v3704, %v3708
      %v3711 = vshrl.u32 %v3147, 16
      %v3713 = vrot.slane %v3711, 4
      %v3714 = vshll.u32 %v3147, 16
      %v3716 = vrot.slane %v3714, 5
      %v3717 = vor.u32 %v3713, %v3716
      %v3718 = vrot.slane %v3717, 4
      %v3720 = vshll.u32 %v3148, 16
      %v3722 = vrot.slane %v3720, 5
      %v3723 = vsel %vm272, %v3718, %v3722
      %v3724 = vshrl.u32 %v3148, 16
      %v3726 = vrot.slane %v3724, 4
      %v3727 = vor.u32 %v3726, %v3722
      %v3728 = vrot.slane %v3727, 4
      %v3730 = vshll.u32 %v3149, 16
      %v3732 = vrot.slane %v3730, 5
      %v3733 = vsel %vm272, %v3728, %v3732
      %v3735 = vshrl.u32 %v3150, 16
      %v3737 = vrot.slane %v3735, 4
      %v3738 = vshll.u32 %v3150, 16
      %v3740 = vrot.slane %v3738, 5
      %v3741 = vor.u32 %v3737, %v3740
      %v3742 = vrot.slane %v3741, 4
      %v3744 = vshll.u32 %v3151, 16
      %v3746 = vrot.slane %v3744, 5
      %v3747 = vsel %vm272, %v3742, %v3746
      %v3748 = vshrl.u32 %v3151, 16
      %v3750 = vrot.slane %v3748, 4
      %v3751 = vor.u32 %v3750, %v3746
      %v3752 = vrot.slane %v3751, 4
      %v3754 = vshll.u32 %v3152, 16
      %v3756 = vrot.slane %v3754, 5
      %v3757 = vsel %vm272, %v3752, %v3756
      %v3759 = vshrl.u32 %v3153, 16
      %v3761 = vrot.slane %v3759, 4
      %v3762 = vshll.u32 %v3153, 16
      %v3764 = vrot.slane %v3762, 5
      %v3765 = vor.u32 %v3761, %v3764
      %v3766 = vrot.slane %v3765, 4
      %v3768 = vshll.u32 %v3154, 16
      %v3770 = vrot.slane %v3768, 5
      %v3771 = vsel %vm272, %v3766, %v3770
      %v3772 = vshrl.u32 %v3154, 16
      %v3774 = vrot.slane %v3772, 4
      %v3775 = vor.u32 %v3774, %v3770
      %v3776 = vrot.slane %v3775, 4
      %v3778 = vshll.u32 %v3155, 16
      %v3780 = vrot.slane %v3778, 5
      %v3781 = vsel %vm272, %v3776, %v3780
      %v3783 = vshrl.u32 %v3156, 16
      %v3785 = vrot.slane %v3783, 4
      %v3786 = vshll.u32 %v3156, 16
      %v3788 = vrot.slane %v3786, 5
      %v3789 = vor.u32 %v3785, %v3788
      %v3790 = vrot.slane %v3789, 4
      %v3792 = vshll.u32 %v3157, 16
      %v3794 = vrot.slane %v3792, 5
      %v3795 = vsel %vm272, %v3790, %v3794
      %v3796 = vshrl.u32 %v3157, 16
      %v3798 = vrot.slane %v3796, 4
      %v3799 = vor.u32 %v3798, %v3794
      %v3800 = vrot.slane %v3799, 4
      %v3802 = vshll.u32 %v3158, 16
      %v3804 = vrot.slane %v3802, 5
      %v3805 = vsel %vm272, %v3800, %v3804
      %v3807 = vshrl.u32 %v3159, 16
      %v3809 = vrot.slane %v3807, 4
      %v3810 = vshll.u32 %v3159, 16
      %v3812 = vrot.slane %v3810, 5
      %v3813 = vor.u32 %v3809, %v3812
      %v3814 = vrot.slane %v3813, 4
      %v3816 = vshll.u32 %v3160, 16
      %v3818 = vrot.slane %v3816, 5
      %v3819 = vsel %vm272, %v3814, %v3818
      %v3820 = vshrl.u32 %v3160, 16
      %v3822 = vrot.slane %v3820, 4
      %v3823 = vor.u32 %v3822, %v3818
      %v3824 = vrot.slane %v3823, 4
      %v3826 = vshll.u32 %v3161, 16
      %v3828 = vrot.slane %v3826, 5
      %v3829 = vsel %vm272, %v3824, %v3828
      %v3831 = vshrl.u32 %v3162, 16
      %v3833 = vrot.slane %v3831, 4
      %v3834 = vshll.u32 %v3162, 16
      %v3836 = vrot.slane %v3834, 5
      %v3837 = vor.u32 %v3833, %v3836
      %v3838 = vrot.slane %v3837, 4
      %v3840 = vshll.u32 %v3163, 16
      %v3842 = vrot.slane %v3840, 5
      %v3843 = vsel %vm272, %v3838, %v3842
      %v3844 = vshrl.u32 %v3163, 16
      %v3846 = vrot.slane %v3844, 4
      %v3847 = vor.u32 %v3846, %v3842
      %v3848 = vrot.slane %v3847, 4
      %v3850 = vshll.u32 %v3164, 16
      %v3852 = vrot.slane %v3850, 5
      %v3853 = vsel %vm272, %v3848, %v3852
      %v3855 = vshrl.u32 %v3165, 16
      %v3857 = vrot.slane %v3855, 4
      %v3858 = vshll.u32 %v3165, 16
      %v3860 = vrot.slane %v3858, 5
      %v3861 = vor.u32 %v3857, %v3860
      %v3862 = vrot.slane %v3861, 4
      %v3864 = vshll.u32 %v3166, 16
      %v3866 = vrot.slane %v3864, 5
      %v3867 = vsel %vm272, %v3862, %v3866
      %v3868 = vshrl.u32 %v3166, 16
      %v3870 = vrot.slane %v3868, 4
      %v3871 = vor.u32 %v3870, %v3866
      %v3872 = vrot.slane %v3871, 4
      %v3874 = vshll.u32 %v3167, 16
      %v3876 = vrot.slane %v3874, 5
      %v3877 = vsel %vm272, %v3872, %v3876
      %s3878 = scalar_lea.vmem %s204, 14
      %v3879 = vld [vmem:[%s3878] sm:$0x3]
      %v3880 = vunpack.c.l.b16 %v3507
      %v3881 = vunpack.c.l.b16 %v3517
      %v3882 = vunpack.c.l.b16 %v3531
      %v3883 = vunpack.c.l.b16 %v3541
      %v3884 = vunpack.c.l.b16 %v3555
      %v3885 = vunpack.c.l.b16 %v3565
      %v3886 = vunpack.c.l.b16 %v3579
      %v3887 = vunpack.c.l.b16 %v3589
      %v3888 = vunpack.c.l.b16 %v3603
      %v3889 = vunpack.c.l.b16 %v3613
      %v3890 = vunpack.c.l.b16 %v3627
      %v3891 = vunpack.c.l.b16 %v3637
      %v3892 = vunpack.c.l.b16 %v3651
      %v3893 = vunpack.c.l.b16 %v3661
      %v3894 = vunpack.c.l.b16 %v3675
      %v3895 = vunpack.c.l.b16 %v3685
      %v3896 = vunpack.c.l.b16 %v3699
      %v3897 = vunpack.c.l.b16 %v3709
      %v3898 = vunpack.c.l.b16 %v3723
      %v3899 = vunpack.c.l.b16 %v3733
      %v3900 = vunpack.c.l.b16 %v3747
      %v3901 = vunpack.c.l.b16 %v3757
      %v3902 = vunpack.c.l.b16 %v3771
      %v3903 = vunpack.c.l.b16 %v3781
      %v3904 = vunpack.c.l.b16 %v3795
      %v3905 = vunpack.c.l.b16 %v3805
      %v3906 = vunpack.c.l.b16 %v3819
      %v3907 = vunpack.c.l.b16 %v3829
      %v3908 = vunpack.c.l.b16 %v3843
      %v3909 = vunpack.c.l.b16 %v3853
      %v3910 = vunpack.c.l.b16 %v3867
      %v3911 = vunpack.c.l.b16 %v3877
      %v3912 = vpack.c.b16 %v3881, %v3880
      %v3913 = vpack.c.b16 %v3883, %v3882
      %v3914 = vpack.c.b16 %v3885, %v3884
      %v3915 = vpack.c.b16 %v3887, %v3886
      %v3916 = vpack.c.b16 %v3889, %v3888
      %v3917 = vpack.c.b16 %v3891, %v3890
      %v3918 = vpack.c.b16 %v3893, %v3892
      %v3919 = vpack.c.b16 %v3895, %v3894
      %v3920 = vpack.c.b16 %v3897, %v3896
      %v3921 = vpack.c.b16 %v3899, %v3898
      %v3922 = vpack.c.b16 %v3901, %v3900
      %v3923 = vpack.c.b16 %v3903, %v3902
      %v3924 = vpack.c.b16 %v3905, %v3904
      %v3925 = vpack.c.b16 %v3907, %v3906
      %v3926 = vpack.c.b16 %v3909, %v3908
      %v3927 = vpack.c.b16 %v3911, %v3910
      %v3929 = vsel %vm707, %v3912, 0
      %v3932 = vsel %vm707, %v3913, 0
      %v3935 = vsel %vm707, %v3914, 0
      %v3938 = vsel %vm707, %v3915, 0
      %v3941 = vsel %vm707, %v3916, 0
      %v3944 = vsel %vm707, %v3917, 0
      %v3947 = vsel %vm707, %v3918, 0
      %v3950 = vsel %vm707, %v3919, 0
      %v3953 = vsel %vm707, %v3920, 0
      %v3956 = vsel %vm707, %v3921, 0
      %v3959 = vsel %vm707, %v3922, 0
      %v3962 = vsel %vm707, %v3923, 0
      %v3965 = vsel %vm707, %v3924, 0
      %v3968 = vsel %vm707, %v3925, 0
      %v3971 = vsel %vm707, %v3926, 0
      %v3974 = vsel %vm707, %v3927, 0
      %v3977 = vsel %vm756, %v3879, 0
      %3979 = vmatprep.subr.bf16.mxu0 0
      %3980 = vmatpush1.bf16.msra.mxu0 %v3977
      %3981 = vmatprep.subr.bf16.mxu0 0
      %3982 = vmatpush1.bf16.msra.mxu0 0
      %3983 = vmatprep.subr.bf16.mxu0 0
      %3984 = vmatpush1.bf16.msra.mxu0 0
      %3985 = vmatprep.subr.bf16.mxu0 0
      %3986 = vmatpush1.bf16.msra.mxu0 0
      %3987 = vmatprep.subr.bf16.mxu0 0
      %3988 = vmatpush1.bf16.msra.mxu0 0
      %3989 = vmatprep.subr.bf16.mxu0 0
      %3990 = vmatpush1.bf16.msra.mxu0 0
      %3991 = vmatprep.subr.bf16.mxu0 0
      %3992 = vmatpush1.bf16.msra.mxu0 0
      %3993 = vmatprep.subr.bf16.mxu0 0
      %3994 = vmatpush1.bf16.msra.mxu0 0
      %3995 = vmatprep.subr.bf16.mxu0 0
      %3996 = vmatpush1.bf16.msra.mxu0 0
      %3997 = vmatprep.subr.bf16.mxu0 0
      %3998 = vmatpush1.bf16.msra.mxu0 0
      %3999 = vmatprep.subr.bf16.mxu0 0
      %4000 = vmatpush1.bf16.msra.mxu0 0
      %4001 = vmatprep.subr.bf16.mxu0 0
      %4002 = vmatpush1.bf16.msra.mxu0 0
      %4003 = vmatprep.subr.bf16.mxu0 0
      %4004 = vmatpush1.bf16.msra.mxu0 0
      %4005 = vmatprep.subr.bf16.mxu0 0
      %4006 = vmatpush1.bf16.msra.mxu0 0
      %4007 = vmatprep.subr.bf16.mxu0 0
      %4008 = vmatpush1.bf16.msra.mxu0 0
      %4009 = vmatprep.subr.bf16.mxu0 0
      %4010 = vmatpush1.bf16.msra.mxu0 0
      %4011 = vmatprep.mubr.bf16.mxu0 0
      %4012 = vmatmul.mubr.bf16.gmra.mrb[0].mxu0 %v3929
      %v4013 = vpop.f32.mrb[0].mxu0
      %v4014 = vadd.f32 0.0, %v4013
      %v4015 = vpop.f32.mrb[0].mxu0
      %v4016 = vpop.f32.mrb[0].mxu0
      %v4017 = vadd.f32 0.0, %v4016
      %v4018 = vpop.f32.mrb[0].mxu0
      %4019 = vmatprep.mubr.bf16.mxu0 0
      %4020 = vmatmul.mubr.bf16.gmra.mrb[0].mxu0 %v3932
      %v4021 = vpop.f32.mrb[0].mxu0
      %v4022 = vadd.f32 0.0, %v4021
      %v4023 = vpop.f32.mrb[0].mxu0
      %v4024 = vpop.f32.mrb[0].mxu0
      %v4025 = vadd.f32 0.0, %v4024
      %v4026 = vpop.f32.mrb[0].mxu0
      %4027 = vmatprep.mubr.bf16.mxu0 0
      %4028 = vmatmul.mubr.bf16.gmra.mrb[0].mxu0 %v3935
      %v4029 = vpop.f32.mrb[0].mxu0
      %v4030 = vadd.f32 0.0, %v4029
      %v4031 = vpop.f32.mrb[0].mxu0
      %v4032 = vpop.f32.mrb[0].mxu0
      %v4033 = vadd.f32 0.0, %v4032
      %v4034 = vpop.f32.mrb[0].mxu0
      %4035 = vmatprep.mubr.bf16.mxu0 0
      %4036 = vmatmul.mubr.bf16.gmra.mrb[0].mxu0 %v3938
      %v4037 = vpop.f32.mrb[0].mxu0
      %v4038 = vadd.f32 0.0, %v4037
      %v4039 = vpop.f32.mrb[0].mxu0
      %v4040 = vpop.f32.mrb[0].mxu0
      %v4041 = vadd.f32 0.0, %v4040
      %v4042 = vpop.f32.mrb[0].mxu0
      %4043 = vmatprep.mubr.bf16.mxu0 0
      %4044 = vmatmul.mubr.bf16.gmra.mrb[0].mxu0 %v3941
      %v4045 = vpop.f32.mrb[0].mxu0
      %v4046 = vadd.f32 0.0, %v4045
      %v4047 = vpop.f32.mrb[0].mxu0
      %v4048 = vpop.f32.mrb[0].mxu0
      %v4049 = vadd.f32 0.0, %v4048
      %v4050 = vpop.f32.mrb[0].mxu0
      %4051 = vmatprep.mubr.bf16.mxu0 0
      %4052 = vmatmul.mubr.bf16.gmra.mrb[0].mxu0 %v3944
      %v4053 = vpop.f32.mrb[0].mxu0
      %v4054 = vadd.f32 0.0, %v4053
      %v4055 = vpop.f32.mrb[0].mxu0
      %v4056 = vpop.f32.mrb[0].mxu0
      %v4057 = vadd.f32 0.0, %v4056
      %v4058 = vpop.f32.mrb[0].mxu0
      %4059 = vmatprep.mubr.bf16.mxu0 0
      %4060 = vmatmul.mubr.bf16.gmra.mrb[0].mxu0 %v3947
      %v4061 = vpop.f32.mrb[0].mxu0
      %v4062 = vadd.f32 0.0, %v4061
      %v4063 = vpop.f32.mrb[0].mxu0
      %v4064 = vpop.f32.mrb[0].mxu0
      %v4065 = vadd.f32 0.0, %v4064
      %v4066 = vpop.f32.mrb[0].mxu0
      %4067 = vmatprep.mubr.bf16.mxu0 0
      %4068 = vmatmul.mubr.bf16.gmra.mrb[0].mxu0 %v3950
      %v4069 = vpop.f32.mrb[0].mxu0
      %v4070 = vadd.f32 0.0, %v4069
      %v4071 = vpop.f32.mrb[0].mxu0
      %v4072 = vpop.f32.mrb[0].mxu0
      %v4073 = vadd.f32 0.0, %v4072
      %v4074 = vpop.f32.mrb[0].mxu0
      %4075 = vmatprep.mubr.bf16.mxu0 0
      %4076 = vmatmul.mubr.bf16.gmra.mrb[0].mxu0 %v3953
      %v4077 = vpop.f32.mrb[0].mxu0
      %v4078 = vadd.f32 0.0, %v4077
      %v4079 = vpop.f32.mrb[0].mxu0
      %v4080 = vpop.f32.mrb[0].mxu0
      %v4081 = vadd.f32 0.0, %v4080
      %v4082 = vpop.f32.mrb[0].mxu0
      %4083 = vmatprep.mubr.bf16.mxu0 0
      %4084 = vmatmul.mubr.bf16.gmra.mrb[0].mxu0 %v3956
      %v4085 = vpop.f32.mrb[0].mxu0
      %v4086 = vadd.f32 0.0, %v4085
      %v4087 = vpop.f32.mrb[0].mxu0
      %v4088 = vpop.f32.mrb[0].mxu0
      %v4089 = vadd.f32 0.0, %v4088
      %v4090 = vpop.f32.mrb[0].mxu0
      %4091 = vmatprep.mubr.bf16.mxu0 0
      %4092 = vmatmul.mubr.bf16.gmra.mrb[0].mxu0 %v3959
      %v4093 = vpop.f32.mrb[0].mxu0
      %v4094 = vadd.f32 0.0, %v4093
      %v4095 = vpop.f32.mrb[0].mxu0
      %v4096 = vpop.f32.mrb[0].mxu0
      %v4097 = vadd.f32 0.0, %v4096
      %v4098 = vpop.f32.mrb[0].mxu0
      %4099 = vmatprep.mubr.bf16.mxu0 0
      %4100 = vmatmul.mubr.bf16.gmra.mrb[0].mxu0 %v3962
      %v4101 = vpop.f32.mrb[0].mxu0
      %v4102 = vadd.f32 0.0, %v4101
      %v4103 = vpop.f32.mrb[0].mxu0
      %v4104 = vpop.f32.mrb[0].mxu0
      %v4105 = vadd.f32 0.0, %v4104
      %v4106 = vpop.f32.mrb[0].mxu0
      %4107 = vmatprep.mubr.bf16.mxu0 0
      %4108 = vmatmul.mubr.bf16.gmra.mrb[0].mxu0 %v3965
      %v4109 = vpop.f32.mrb[0].mxu0
      %v4110 = vadd.f32 0.0, %v4109
      %v4111 = vpop.f32.mrb[0].mxu0
      %v4112 = vpop.f32.mrb[0].mxu0
      %v4113 = vadd.f32 0.0, %v4112
      %v4114 = vpop.f32.mrb[0].mxu0
      %4115 = vmatprep.mubr.bf16.mxu0 0
      %4116 = vmatmul.mubr.bf16.gmra.mrb[0].mxu0 %v3968
      %v4117 = vpop.f32.mrb[0].mxu0
      %v4118 = vadd.f32 0.0, %v4117
      %v4119 = vpop.f32.mrb[0].mxu0
      %v4120 = vpop.f32.mrb[0].mxu0
      %v4121 = vadd.f32 0.0, %v4120
      %v4122 = vpop.f32.mrb[0].mxu0
      %4123 = vmatprep.mubr.bf16.mxu0 0
      %4124 = vmatmul.mubr.bf16.gmra.mrb[0].mxu0 %v3971
      %v4125 = vpop.f32.mrb[0].mxu0
      %v4126 = vadd.f32 0.0, %v4125
      %v4127 = vpop.f32.mrb[0].mxu0
      %v4128 = vpop.f32.mrb[0].mxu0
      %v4129 = vadd.f32 0.0, %v4128
      %v4130 = vpop.f32.mrb[0].mxu0
      %4131 = vmatprep.mubr.bf16.mxu0 0
      %4132 = vmatmul.mubr.bf16.gmra.mrb[0].mxu0 %v3974
      %v4133 = vpop.f32.mrb[0].mxu0
      %v4134 = vadd.f32 0.0, %v4133
      %v4135 = vpop.f32.mrb[0].mxu0
      %v4136 = vpop.f32.mrb[0].mxu0
      %v4137 = vadd.f32 0.0, %v4136
      %v4138 = vpop.f32.mrb[0].mxu0
      %4139 = vdwg.mxu0
      %v4140 = vadd.f32 %v3462, %v4014
      %v4141 = vadd.f32 %v3463, %v4017
      %v4142 = vadd.f32 %v3464, %v4022
      %v4143 = vadd.f32 %v3465, %v4025
      %v4144 = vadd.f32 %v3466, %v4030
      %v4145 = vadd.f32 %v3467, %v4033
      %v4146 = vadd.f32 %v3468, %v4038
      %v4147 = vadd.f32 %v3469, %v4041
      %v4148 = vadd.f32 %v3470, %v4046
      %v4149 = vadd.f32 %v3471, %v4049
      %v4150 = vadd.f32 %v3472, %v4054
      %v4151 = vadd.f32 %v3473, %v4057
      %v4152 = vadd.f32 %v3474, %v4062
      %v4153 = vadd.f32 %v3475, %v4065
      %v4154 = vadd.f32 %v3476, %v4070
      %v4155 = vadd.f32 %v3477, %v4073
      %v4156 = vadd.f32 %v3478, %v4078
      %v4157 = vadd.f32 %v3479, %v4081
      %v4158 = vadd.f32 %v3480, %v4086
      %v4159 = vadd.f32 %v3481, %v4089
      %v4160 = vadd.f32 %v3482, %v4094
      %v4161 = vadd.f32 %v3483, %v4097
      %v4162 = vadd.f32 %v3484, %v4102
      %v4163 = vadd.f32 %v3485, %v4105
      %v4164 = vadd.f32 %v3486, %v4110
      %v4165 = vadd.f32 %v3487, %v4113
      %v4166 = vadd.f32 %v3488, %v4118
      %v4167 = vadd.f32 %v3489, %v4121
      %v4168 = vadd.f32 %v3490, %v4126
      %v4169 = vadd.f32 %v3491, %v4129
      %v4170 = vadd.f32 %v3492, %v4134
      %v4171 = vadd.f32 %v3493, %v4137
      %v4188 = vrot.slane %v3120, 5
      %v4189 = vrot.slane %v4188, 4
      %v4190 = vrot.slane %v3121, 5
      %v4191 = vsel %vm1231, %v4189, %v4190
      %v4192 = vrot.slane %v4190, 4
      %v4193 = vrot.slane %v3122, 5
      %v4194 = vsel %vm1231, %v4192, %v4193
      %v4195 = vrot.slane %v3123, 5
      %v4196 = vrot.slane %v4195, 4
      %v4197 = vrot.slane %v3124, 5
      %v4198 = vsel %vm1231, %v4196, %v4197
      %v4199 = vrot.slane %v4197, 4
      %v4200 = vrot.slane %v3125, 5
      %v4201 = vsel %vm1231, %v4199, %v4200
      %v4202 = vrot.slane %v3126, 5
      %v4203 = vrot.slane %v4202, 4
      %v4204 = vrot.slane %v3127, 5
      %v4205 = vsel %vm1231, %v4203, %v4204
      %v4206 = vrot.slane %v4204, 4
      %v4207 = vrot.slane %v3128, 5
      %v4208 = vsel %vm1231, %v4206, %v4207
      %v4209 = vrot.slane %v3129, 5
      %v4210 = vrot.slane %v4209, 4
      %v4211 = vrot.slane %v3130, 5
      %v4212 = vsel %vm1231, %v4210, %v4211
      %v4213 = vrot.slane %v4211, 4
      %v4214 = vrot.slane %v3131, 5
      %v4215 = vsel %vm1231, %v4213, %v4214
      %v4216 = vrot.slane %v3132, 5
      %v4217 = vrot.slane %v4216, 4
      %v4218 = vrot.slane %v3133, 5
      %v4219 = vsel %vm1231, %v4217, %v4218
      %v4220 = vrot.slane %v4218, 4
      %v4221 = vrot.slane %v3134, 5
      %v4222 = vsel %vm1231, %v4220, %v4221
      %v4223 = vrot.slane %v3135, 5
      %v4224 = vrot.slane %v4223, 4
      %v4225 = vrot.slane %v3136, 5
      %v4226 = vsel %vm1231, %v4224, %v4225
      %v4227 = vrot.slane %v4225, 4
      %v4228 = vrot.slane %v3137, 5
      %v4229 = vsel %vm1231, %v4227, %v4228
      %v4230 = vrot.slane %v3138, 5
      %v4231 = vrot.slane %v4230, 4
      %v4232 = vrot.slane %v3139, 5
      %v4233 = vsel %vm1231, %v4231, %v4232
      %v4234 = vrot.slane %v4232, 4
      %v4235 = vrot.slane %v3140, 5
      %v4236 = vsel %vm1231, %v4234, %v4235
      %v4237 = vrot.slane %v3141, 5
      %v4238 = vrot.slane %v4237, 4
      %v4239 = vrot.slane %v3142, 5
      %v4240 = vsel %vm1231, %v4238, %v4239
      %v4241 = vrot.slane %v4239, 4
      %v4242 = vrot.slane %v3143, 5
      %v4243 = vsel %vm1231, %v4241, %v4242
      %v4244 = vrot.slane %v3144, 5
      %v4245 = vrot.slane %v4244, 4
      %v4246 = vrot.slane %v3145, 5
      %v4247 = vsel %vm1231, %v4245, %v4246
      %v4248 = vrot.slane %v4246, 4
      %v4249 = vrot.slane %v3146, 5
      %v4250 = vsel %vm1231, %v4248, %v4249
      %v4251 = vrot.slane %v3147, 5
      %v4252 = vrot.slane %v4251, 4
      %v4253 = vrot.slane %v3148, 5
      %v4254 = vsel %vm1231, %v4252, %v4253
      %v4255 = vrot.slane %v4253, 4
      %v4256 = vrot.slane %v3149, 5
      %v4257 = vsel %vm1231, %v4255, %v4256
      %v4258 = vrot.slane %v3150, 5
      %v4259 = vrot.slane %v4258, 4
      %v4260 = vrot.slane %v3151, 5
      %v4261 = vsel %vm1231, %v4259, %v4260
      %v4262 = vrot.slane %v4260, 4
      %v4263 = vrot.slane %v3152, 5
      %v4264 = vsel %vm1231, %v4262, %v4263
      %v4265 = vrot.slane %v3153, 5
      %v4266 = vrot.slane %v4265, 4
      %v4267 = vrot.slane %v3154, 5
      %v4268 = vsel %vm1231, %v4266, %v4267
      %v4269 = vrot.slane %v4267, 4
      %v4270 = vrot.slane %v3155, 5
      %v4271 = vsel %vm1231, %v4269, %v4270
      %v4272 = vrot.slane %v3156, 5
      %v4273 = vrot.slane %v4272, 4
      %v4274 = vrot.slane %v3157, 5
      %v4275 = vsel %vm1231, %v4273, %v4274
      %v4276 = vrot.slane %v4274, 4
      %v4277 = vrot.slane %v3158, 5
      %v4278 = vsel %vm1231, %v4276, %v4277
      %v4279 = vrot.slane %v3159, 5
      %v4280 = vrot.slane %v4279, 4
      %v4281 = vrot.slane %v3160, 5
      %v4282 = vsel %vm1231, %v4280, %v4281
      %v4283 = vrot.slane %v4281, 4
      %v4284 = vrot.slane %v3161, 5
      %v4285 = vsel %vm1231, %v4283, %v4284
      %v4286 = vrot.slane %v3162, 5
      %v4287 = vrot.slane %v4286, 4
      %v4288 = vrot.slane %v3163, 5
      %v4289 = vsel %vm1231, %v4287, %v4288
      %v4290 = vrot.slane %v4288, 4
      %v4291 = vrot.slane %v3164, 5
      %v4292 = vsel %vm1231, %v4290, %v4291
      %v4293 = vrot.slane %v3165, 5
      %v4294 = vrot.slane %v4293, 4
      %v4295 = vrot.slane %v3166, 5
      %v4296 = vsel %vm1231, %v4294, %v4295
      %v4297 = vrot.slane %v4295, 4
      %v4298 = vrot.slane %v3167, 5
      %v4299 = vsel %vm1231, %v4297, %v4298
      %s4300 = scalar_lea.vmem %s204, 16
      %v4301 = vld [vmem:[%s4300] sm:$0x3]
      %v4302 = vunpack.c.l.b16 %v4191
      %v4303 = vunpack.c.l.b16 %v4194
      %v4304 = vunpack.c.l.b16 %v4198
      %v4305 = vunpack.c.l.b16 %v4201
      %v4306 = vunpack.c.l.b16 %v4205
      %v4307 = vunpack.c.l.b16 %v4208
      %v4308 = vunpack.c.l.b16 %v4212
      %v4309 = vunpack.c.l.b16 %v4215
      %v4310 = vunpack.c.l.b16 %v4219
      %v4311 = vunpack.c.l.b16 %v4222
      %v4312 = vunpack.c.l.b16 %v4226
      %v4313 = vunpack.c.l.b16 %v4229
      %v4314 = vunpack.c.l.b16 %v4233
      %v4315 = vunpack.c.l.b16 %v4236
      %v4316 = vunpack.c.l.b16 %v4240
      %v4317 = vunpack.c.l.b16 %v4243
      %v4318 = vunpack.c.l.b16 %v4247
      %v4319 = vunpack.c.l.b16 %v4250
      %v4320 = vunpack.c.l.b16 %v4254
      %v4321 = vunpack.c.l.b16 %v4257
      %v4322 = vunpack.c.l.b16 %v4261
      %v4323 = vunpack.c.l.b16 %v4264
      %v4324 = vunpack.c.l.b16 %v4268
      %v4325 = vunpack.c.l.b16 %v4271
      %v4326 = vunpack.c.l.b16 %v4275
      %v4327 = vunpack.c.l.b16 %v4278
      %v4328 = vunpack.c.l.b16 %v4282
      %v4329 = vunpack.c.l.b16 %v4285
      %v4330 = vunpack.c.l.b16 %v4289
      %v4331 = vunpack.c.l.b16 %v4292
      %v4332 = vunpack.c.l.b16 %v4296
      %v4333 = vunpack.c.l.b16 %v4299
      %v4334 = vpack.c.b16 %v4303, %v4302
      %v4335 = vpack.c.b16 %v4305, %v4304
      %v4336 = vpack.c.b16 %v4307, %v4306
      %v4337 = vpack.c.b16 %v4309, %v4308
      %v4338 = vpack.c.b16 %v4311, %v4310
      %v4339 = vpack.c.b16 %v4313, %v4312
      %v4340 = vpack.c.b16 %v4315, %v4314
      %v4341 = vpack.c.b16 %v4317, %v4316
      %v4342 = vpack.c.b16 %v4319, %v4318
      %v4343 = vpack.c.b16 %v4321, %v4320
      %v4344 = vpack.c.b16 %v4323, %v4322
      %v4345 = vpack.c.b16 %v4325, %v4324
      %v4346 = vpack.c.b16 %v4327, %v4326
      %v4347 = vpack.c.b16 %v4329, %v4328
      %v4348 = vpack.c.b16 %v4331, %v4330
      %v4349 = vpack.c.b16 %v4333, %v4332
      %v4351 = vsel %vm707, %v4334, 0
      %v4354 = vsel %vm707, %v4335, 0
      %v4357 = vsel %vm707, %v4336, 0
      %v4360 = vsel %vm707, %v4337, 0
      %v4363 = vsel %vm707, %v4338, 0
      %v4366 = vsel %vm707, %v4339, 0
      %v4369 = vsel %vm707, %v4340, 0
      %v4372 = vsel %vm707, %v4341, 0
      %v4375 = vsel %vm707, %v4342, 0
      %v4378 = vsel %vm707, %v4343, 0
      %v4381 = vsel %vm707, %v4344, 0
      %v4384 = vsel %vm707, %v4345, 0
      %v4387 = vsel %vm707, %v4346, 0
      %v4390 = vsel %vm707, %v4347, 0
      %v4393 = vsel %vm707, %v4348, 0
      %v4396 = vsel %vm707, %v4349, 0
      %v4399 = vsel %vm756, %v4301, 0
      %4401 = vmatprep.subr.bf16.mxu0 0
      %4402 = vmatpush1.bf16.msra.mxu0 %v4399
      %4403 = vmatprep.subr.bf16.mxu0 0
      %4404 = vmatpush1.bf16.msra.mxu0 0
      %4405 = vmatprep.subr.bf16.mxu0 0
      %4406 = vmatpush1.bf16.msra.mxu0 0
      %4407 = vmatprep.subr.bf16.mxu0 0
      %4408 = vmatpush1.bf16.msra.mxu0 0
      %4409 = vmatprep.subr.bf16.mxu0 0
      %4410 = vmatpush1.bf16.msra.mxu0 0
      %4411 = vmatprep.subr.bf16.mxu0 0
      %4412 = vmatpush1.bf16.msra.mxu0 0
      %4413 = vmatprep.subr.bf16.mxu0 0
      %4414 = vmatpush1.bf16.msra.mxu0 0
      %4415 = vmatprep.subr.bf16.mxu0 0
      %4416 = vmatpush1.bf16.msra.mxu0 0
      %4417 = vmatprep.subr.bf16.mxu0 0
      %4418 = vmatpush1.bf16.msra.mxu0 0
      %4419 = vmatprep.subr.bf16.mxu0 0
      %4420 = vmatpush1.bf16.msra.mxu0 0
      %4421 = vmatprep.subr.bf16.mxu0 0
      %4422 = vmatpush1.bf16.msra.mxu0 0
      %4423 = vmatprep.subr.bf16.mxu0 0
      %4424 = vmatpush1.bf16.msra.mxu0 0
      %4425 = vmatprep.subr.bf16.mxu0 0
      %4426 = vmatpush1.bf16.msra.mxu0 0
      %4427 = vmatprep.subr.bf16.mxu0 0
      %4428 = vmatpush1.bf16.msra.mxu0 0
      %4429 = vmatprep.subr.bf16.mxu0 0
      %4430 = vmatpush1.bf16.msra.mxu0 0
      %4431 = vmatprep.subr.bf16.mxu0 0
      %4432 = vmatpush1.bf16.msra.mxu0 0
      %4433 = vmatprep.mubr.bf16.mxu0 0
      %4434 = vmatmul.mubr.bf16.gmra.mrb[0].mxu0 %v4351
      %v4435 = vpop.f32.mrb[0].mxu0
      %v4436 = vadd.f32 0.0, %v4435
      %v4437 = vpop.f32.mrb[0].mxu0
      %v4438 = vpop.f32.mrb[0].mxu0
      %v4439 = vadd.f32 0.0, %v4438
      %v4440 = vpop.f32.mrb[0].mxu0
      %4441 = vmatprep.mubr.bf16.mxu0 0
      %4442 = vmatmul.mubr.bf16.gmra.mrb[0].mxu0 %v4354
      %v4443 = vpop.f32.mrb[0].mxu0
      %v4444 = vadd.f32 0.0, %v4443
      %v4445 = vpop.f32.mrb[0].mxu0
      %v4446 = vpop.f32.mrb[0].mxu0
      %v4447 = vadd.f32 0.0, %v4446
      %v4448 = vpop.f32.mrb[0].mxu0
      %4449 = vmatprep.mubr.bf16.mxu0 0
      %4450 = vmatmul.mubr.bf16.gmra.mrb[0].mxu0 %v4357
      %v4451 = vpop.f32.mrb[0].mxu0
      %v4452 = vadd.f32 0.0, %v4451
      %v4453 = vpop.f32.mrb[0].mxu0
      %v4454 = vpop.f32.mrb[0].mxu0
      %v4455 = vadd.f32 0.0, %v4454
      %v4456 = vpop.f32.mrb[0].mxu0
      %4457 = vmatprep.mubr.bf16.mxu0 0
      %4458 = vmatmul.mubr.bf16.gmra.mrb[0].mxu0 %v4360
      %v4459 = vpop.f32.mrb[0].mxu0
      %v4460 = vadd.f32 0.0, %v4459
      %v4461 = vpop.f32.mrb[0].mxu0
      %v4462 = vpop.f32.mrb[0].mxu0
      %v4463 = vadd.f32 0.0, %v4462
      %v4464 = vpop.f32.mrb[0].mxu0
      %4465 = vmatprep.mubr.bf16.mxu0 0
      %4466 = vmatmul.mubr.bf16.gmra.mrb[0].mxu0 %v4363
      %v4467 = vpop.f32.mrb[0].mxu0
      %v4468 = vadd.f32 0.0, %v4467
      %v4469 = vpop.f32.mrb[0].mxu0
      %v4470 = vpop.f32.mrb[0].mxu0
      %v4471 = vadd.f32 0.0, %v4470
      %v4472 = vpop.f32.mrb[0].mxu0
      %4473 = vmatprep.mubr.bf16.mxu0 0
      %4474 = vmatmul.mubr.bf16.gmra.mrb[0].mxu0 %v4366
      %v4475 = vpop.f32.mrb[0].mxu0
      %v4476 = vadd.f32 0.0, %v4475
      %v4477 = vpop.f32.mrb[0].mxu0
      %v4478 = vpop.f32.mrb[0].mxu0
      %v4479 = vadd.f32 0.0, %v4478
      %v4480 = vpop.f32.mrb[0].mxu0
      %4481 = vmatprep.mubr.bf16.mxu0 0
      %4482 = vmatmul.mubr.bf16.gmra.mrb[0].mxu0 %v4369
      %v4483 = vpop.f32.mrb[0].mxu0
      %v4484 = vadd.f32 0.0, %v4483
      %v4485 = vpop.f32.mrb[0].mxu0
      %v4486 = vpop.f32.mrb[0].mxu0
      %v4487 = vadd.f32 0.0, %v4486
      %v4488 = vpop.f32.mrb[0].mxu0
      %4489 = vmatprep.mubr.bf16.mxu0 0
      %4490 = vmatmul.mubr.bf16.gmra.mrb[0].mxu0 %v4372
      %v4491 = vpop.f32.mrb[0].mxu0
      %v4492 = vadd.f32 0.0, %v4491
      %v4493 = vpop.f32.mrb[0].mxu0
      %v4494 = vpop.f32.mrb[0].mxu0
      %v4495 = vadd.f32 0.0, %v4494
      %v4496 = vpop.f32.mrb[0].mxu0
      %4497 = vmatprep.mubr.bf16.mxu0 0
      %4498 = vmatmul.mubr.bf16.gmra.mrb[0].mxu0 %v4375
      %v4499 = vpop.f32.mrb[0].mxu0
      %v4500 = vadd.f32 0.0, %v4499
      %v4501 = vpop.f32.mrb[0].mxu0
      %v4502 = vpop.f32.mrb[0].mxu0
      %v4503 = vadd.f32 0.0, %v4502
      %v4504 = vpop.f32.mrb[0].mxu0
      %4505 = vmatprep.mubr.bf16.mxu0 0
      %4506 = vmatmul.mubr.bf16.gmra.mrb[0].mxu0 %v4378
      %v4507 = vpop.f32.mrb[0].mxu0
      %v4508 = vadd.f32 0.0, %v4507
      %v4509 = vpop.f32.mrb[0].mxu0
      %v4510 = vpop.f32.mrb[0].mxu0
      %v4511 = vadd.f32 0.0, %v4510
      %v4512 = vpop.f32.mrb[0].mxu0
      %4513 = vmatprep.mubr.bf16.mxu0 0
      %4514 = vmatmul.mubr.bf16.gmra.mrb[0].mxu0 %v4381
      %v4515 = vpop.f32.mrb[0].mxu0
      %v4516 = vadd.f32 0.0, %v4515
      %v4517 = vpop.f32.mrb[0].mxu0
      %v4518 = vpop.f32.mrb[0].mxu0
      %v4519 = vadd.f32 0.0, %v4518
      %v4520 = vpop.f32.mrb[0].mxu0
      %4521 = vmatprep.mubr.bf16.mxu0 0
      %4522 = vmatmul.mubr.bf16.gmra.mrb[0].mxu0 %v4384
      %v4523 = vpop.f32.mrb[0].mxu0
      %v4524 = vadd.f32 0.0, %v4523
      %v4525 = vpop.f32.mrb[0].mxu0
      %v4526 = vpop.f32.mrb[0].mxu0
      %v4527 = vadd.f32 0.0, %v4526
      %v4528 = vpop.f32.mrb[0].mxu0
      %4529 = vmatprep.mubr.bf16.mxu0 0
      %4530 = vmatmul.mubr.bf16.gmra.mrb[0].mxu0 %v4387
      %v4531 = vpop.f32.mrb[0].mxu0
      %v4532 = vadd.f32 0.0, %v4531
      %v4533 = vpop.f32.mrb[0].mxu0
      %v4534 = vpop.f32.mrb[0].mxu0
      %v4535 = vadd.f32 0.0, %v4534
      %v4536 = vpop.f32.mrb[0].mxu0
      %4537 = vmatprep.mubr.bf16.mxu0 0
      %4538 = vmatmul.mubr.bf16.gmra.mrb[0].mxu0 %v4390
      %v4539 = vpop.f32.mrb[0].mxu0
      %v4540 = vadd.f32 0.0, %v4539
      %v4541 = vpop.f32.mrb[0].mxu0
      %v4542 = vpop.f32.mrb[0].mxu0
      %v4543 = vadd.f32 0.0, %v4542
      %v4544 = vpop.f32.mrb[0].mxu0
      %4545 = vmatprep.mubr.bf16.mxu0 0
      %4546 = vmatmul.mubr.bf16.gmra.mrb[0].mxu0 %v4393
      %v4547 = vpop.f32.mrb[0].mxu0
      %v4548 = vadd.f32 0.0, %v4547
      %v4549 = vpop.f32.mrb[0].mxu0
      %v4550 = vpop.f32.mrb[0].mxu0
      %v4551 = vadd.f32 0.0, %v4550
      %v4552 = vpop.f32.mrb[0].mxu0
      %4553 = vmatprep.mubr.bf16.mxu0 0
      %4554 = vmatmul.mubr.bf16.gmra.mrb[0].mxu0 %v4396
      %v4555 = vpop.f32.mrb[0].mxu0
      %v4556 = vadd.f32 0.0, %v4555
      %v4557 = vpop.f32.mrb[0].mxu0
      %v4558 = vpop.f32.mrb[0].mxu0
      %v4559 = vadd.f32 0.0, %v4558
      %v4560 = vpop.f32.mrb[0].mxu0
      %4561 = vdwg.mxu0
      %v4562 = vadd.f32 %v4140, %v4436
      %v4563 = vadd.f32 %v4141, %v4439
      %v4564 = vadd.f32 %v4142, %v4444
      %v4565 = vadd.f32 %v4143, %v4447
      %v4566 = vadd.f32 %v4144, %v4452
      %v4567 = vadd.f32 %v4145, %v4455
      %v4568 = vadd.f32 %v4146, %v4460
      %v4569 = vadd.f32 %v4147, %v4463
      %v4570 = vadd.f32 %v4148, %v4468
      %v4571 = vadd.f32 %v4149, %v4471
      %v4572 = vadd.f32 %v4150, %v4476
      %v4573 = vadd.f32 %v4151, %v4479
      %v4574 = vadd.f32 %v4152, %v4484
      %v4575 = vadd.f32 %v4153, %v4487
      %v4576 = vadd.f32 %v4154, %v4492
      %v4577 = vadd.f32 %v4155, %v4495
      %v4578 = vadd.f32 %v4156, %v4500
      %v4579 = vadd.f32 %v4157, %v4503
      %v4580 = vadd.f32 %v4158, %v4508
      %v4581 = vadd.f32 %v4159, %v4511
      %v4582 = vadd.f32 %v4160, %v4516
      %v4583 = vadd.f32 %v4161, %v4519
      %v4584 = vadd.f32 %v4162, %v4524
      %v4585 = vadd.f32 %v4163, %v4527
      %v4586 = vadd.f32 %v4164, %v4532
      %v4587 = vadd.f32 %v4165, %v4535
      %v4588 = vadd.f32 %v4166, %v4540
      %v4589 = vadd.f32 %v4167, %v4543
      %v4590 = vadd.f32 %v4168, %v4548
      %v4591 = vadd.f32 %v4169, %v4551
      %v4592 = vadd.f32 %v4170, %v4556
      %v4593 = vadd.f32 %v4171, %v4559
      %v4594 = vld [vmem:[%s2] sm:$0x1]
      %v4596 = vlaneseq
      %v4597 = vshrl.u32 %v4596, 7
      %v4598 = vsub.s32 0, %v4597
      %v4599 = vrot.slane %v4594, %v4598
      %v4601 = vadd.f32 %v4562, %v4599
      %v4602 = vadd.f32 %v4563, %v4599
      %v4603 = vadd.f32 %v4564, %v4599
      %v4604 = vadd.f32 %v4565, %v4599
      %v4605 = vadd.f32 %v4566, %v4599
      %v4606 = vadd.f32 %v4567, %v4599
      %v4607 = vadd.f32 %v4568, %v4599
      %v4608 = vadd.f32 %v4569, %v4599
      %v4609 = vadd.f32 %v4570, %v4599
      %v4610 = vadd.f32 %v4571, %v4599
      %v4611 = vadd.f32 %v4572, %v4599
      %v4612 = vadd.f32 %v4573, %v4599
      %v4613 = vadd.f32 %v4574, %v4599
      %v4614 = vadd.f32 %v4575, %v4599
      %v4615 = vadd.f32 %v4576, %v4599
      %v4616 = vadd.f32 %v4577, %v4599
      %v4617 = vadd.f32 %v4578, %v4599
      %v4618 = vadd.f32 %v4579, %v4599
      %v4619 = vadd.f32 %v4580, %v4599
      %v4620 = vadd.f32 %v4581, %v4599
      %v4621 = vadd.f32 %v4582, %v4599
      %v4622 = vadd.f32 %v4583, %v4599
      %v4623 = vadd.f32 %v4584, %v4599
      %v4624 = vadd.f32 %v4585, %v4599
      %v4625 = vadd.f32 %v4586, %v4599
      %v4626 = vadd.f32 %v4587, %v4599
      %v4627 = vadd.f32 %v4588, %v4599
      %v4628 = vadd.f32 %v4589, %v4599
      %v4629 = vadd.f32 %v4590, %v4599
      %v4630 = vadd.f32 %v4591, %v4599
      %v4631 = vadd.f32 %v4592, %v4599
      %v4632 = vadd.f32 %v4593, %v4599
      %vm4633 = vcmp.ge.f32.partialorder %v4601, 0.0
      %vm4634 = vcmp.ge.f32.partialorder %v4602, 0.0
      %vm4635 = vcmp.ge.f32.partialorder %v4603, 0.0
      %vm4636 = vcmp.ge.f32.partialorder %v4604, 0.0
      %vm4637 = vcmp.ge.f32.partialorder %v4605, 0.0
      %vm4638 = vcmp.ge.f32.partialorder %v4606, 0.0
      %vm4639 = vcmp.ge.f32.partialorder %v4607, 0.0
      %vm4640 = vcmp.ge.f32.partialorder %v4608, 0.0
      %vm4641 = vcmp.ge.f32.partialorder %v4609, 0.0
      %vm4642 = vcmp.ge.f32.partialorder %v4610, 0.0
      %vm4643 = vcmp.ge.f32.partialorder %v4611, 0.0
      %vm4644 = vcmp.ge.f32.partialorder %v4612, 0.0
      %vm4645 = vcmp.ge.f32.partialorder %v4613, 0.0
      %vm4646 = vcmp.ge.f32.partialorder %v4614, 0.0
      %vm4647 = vcmp.ge.f32.partialorder %v4615, 0.0
      %vm4648 = vcmp.ge.f32.partialorder %v4616, 0.0
      %vm4649 = vcmp.ge.f32.partialorder %v4617, 0.0
      %vm4650 = vcmp.ge.f32.partialorder %v4618, 0.0
      %vm4651 = vcmp.ge.f32.partialorder %v4619, 0.0
      %vm4652 = vcmp.ge.f32.partialorder %v4620, 0.0
      %vm4653 = vcmp.ge.f32.partialorder %v4621, 0.0
      %vm4654 = vcmp.ge.f32.partialorder %v4622, 0.0
      %vm4655 = vcmp.ge.f32.partialorder %v4623, 0.0
      %vm4656 = vcmp.ge.f32.partialorder %v4624, 0.0
      %vm4657 = vcmp.ge.f32.partialorder %v4625, 0.0
      %vm4658 = vcmp.ge.f32.partialorder %v4626, 0.0
      %vm4659 = vcmp.ge.f32.partialorder %v4627, 0.0
      %vm4660 = vcmp.ge.f32.partialorder %v4628, 0.0
      %vm4661 = vcmp.ge.f32.partialorder %v4629, 0.0
      %vm4662 = vcmp.ge.f32.partialorder %v4630, 0.0
      %vm4663 = vcmp.ge.f32.partialorder %v4631, 0.0
      %vm4664 = vcmp.ge.f32.partialorder %v4632, 0.0
      %v4665 = vsel %vm4633, 1.4142135, 0.28284273
      %v4666 = vsel %vm4634, 1.4142135, 0.28284273
      %v4667 = vsel %vm4635, 1.4142135, 0.28284273
      %v4668 = vsel %vm4636, 1.4142135, 0.28284273
      %v4669 = vsel %vm4637, 1.4142135, 0.28284273
      %v4670 = vsel %vm4638, 1.4142135, 0.28284273
      %v4671 = vsel %vm4639, 1.4142135, 0.28284273
      %v4672 = vsel %vm4640, 1.4142135, 0.28284273
      %v4673 = vsel %vm4641, 1.4142135, 0.28284273
      %v4674 = vsel %vm4642, 1.4142135, 0.28284273
      %v4675 = vsel %vm4643, 1.4142135, 0.28284273
      %v4676 = vsel %vm4644, 1.4142135, 0.28284273
      %v4677 = vsel %vm4645, 1.4142135, 0.28284273
      %v4678 = vsel %vm4646, 1.4142135, 0.28284273
      %v4679 = vsel %vm4647, 1.4142135, 0.28284273
      %v4680 = vsel %vm4648, 1.4142135, 0.28284273
      %v4681 = vsel %vm4649, 1.4142135, 0.28284273
      %v4682 = vsel %vm4650, 1.4142135, 0.28284273
      %v4683 = vsel %vm4651, 1.4142135, 0.28284273
      %v4684 = vsel %vm4652, 1.4142135, 0.28284273
      %v4685 = vsel %vm4653, 1.4142135, 0.28284273
      %v4686 = vsel %vm4654, 1.4142135, 0.28284273
      %v4687 = vsel %vm4655, 1.4142135, 0.28284273
      %v4688 = vsel %vm4656, 1.4142135, 0.28284273
      %v4689 = vsel %vm4657, 1.4142135, 0.28284273
      %v4690 = vsel %vm4658, 1.4142135, 0.28284273
      %v4691 = vsel %vm4659, 1.4142135, 0.28284273
      %v4692 = vsel %vm4660, 1.4142135, 0.28284273
      %v4693 = vsel %vm4661, 1.4142135, 0.28284273
      %v4694 = vsel %vm4662, 1.4142135, 0.28284273
      %v4695 = vsel %vm4663, 1.4142135, 0.28284273
      %v4696 = vsel %vm4664, 1.4142135, 0.28284273
      %v4697 = vmul.f32 %v4601, %v4665
      %v4698 = vmul.f32 %v4602, %v4666
      %v4699 = vmul.f32 %v4603, %v4667
      %v4700 = vmul.f32 %v4604, %v4668
      %v4701 = vmul.f32 %v4605, %v4669
      %v4702 = vmul.f32 %v4606, %v4670
      %v4703 = vmul.f32 %v4607, %v4671
      %v4704 = vmul.f32 %v4608, %v4672
      %v4705 = vmul.f32 %v4609, %v4673
      %v4706 = vmul.f32 %v4610, %v4674
      %v4707 = vmul.f32 %v4611, %v4675
      %v4708 = vmul.f32 %v4612, %v4676
      %v4709 = vmul.f32 %v4613, %v4677
      %v4710 = vmul.f32 %v4614, %v4678
      %v4711 = vmul.f32 %v4615, %v4679
      %v4712 = vmul.f32 %v4616, %v4680
      %v4713 = vmul.f32 %v4617, %v4681
      %v4714 = vmul.f32 %v4618, %v4682
      %v4715 = vmul.f32 %v4619, %v4683
      %v4716 = vmul.f32 %v4620, %v4684
      %v4717 = vmul.f32 %v4621, %v4685
      %v4718 = vmul.f32 %v4622, %v4686
      %v4719 = vmul.f32 %v4623, %v4687
      %v4720 = vmul.f32 %v4624, %v4688
      %v4721 = vmul.f32 %v4625, %v4689
      %v4722 = vmul.f32 %v4626, %v4690
      %v4723 = vmul.f32 %v4627, %v4691
      %v4724 = vmul.f32 %v4628, %v4692
      %v4725 = vmul.f32 %v4629, %v4693
      %v4726 = vmul.f32 %v4630, %v4694
      %v4727 = vmul.f32 %v4631, %v4695
      %v4728 = vmul.f32 %v4632, %v4696
      %4729 = vst.msk [vmem:[%s214] sm:$0xff] %vm707, %v4697
      %4730 = vst.msk [vmem:[%s214 + $0x8] sm:$0xff] %vm707, %v4698
      %4731 = vst.msk [vmem:[%s214 + $0x10] sm:$0xff] %vm707, %v4699
      %4732 = vst.msk [vmem:[%s214 + $0x18] sm:$0xff] %vm707, %v4700
      %4733 = vst.msk [vmem:[%s214 + $0x20] sm:$0xff] %vm707, %v4701
      %4734 = vst.msk [vmem:[%s214 + $0x28] sm:$0xff] %vm707, %v4702
      %4735 = vst.msk [vmem:[%s214 + $0x30] sm:$0xff] %vm707, %v4703
      %4736 = vst.msk [vmem:[%s214 + $0x38] sm:$0xff] %vm707, %v4704
      %4737 = vst.msk [vmem:[%s214 + $0x40] sm:$0xff] %vm707, %v4705
      %4738 = vst.msk [vmem:[%s214 + $0x48] sm:$0xff] %vm707, %v4706
      %4739 = vst.msk [vmem:[%s214 + $0x50] sm:$0xff] %vm707, %v4707
      %4740 = vst.msk [vmem:[%s214 + $0x58] sm:$0xff] %vm707, %v4708
      %4741 = vst.msk [vmem:[%s214 + $0x60] sm:$0xff] %vm707, %v4709
      %4742 = vst.msk [vmem:[%s214 + $0x68] sm:$0xff] %vm707, %v4710
      %4743 = vst.msk [vmem:[%s214 + $0x70] sm:$0xff] %vm707, %v4711
      %4744 = vst.msk [vmem:[%s214 + $0x78] sm:$0xff] %vm707, %v4712
      %4745 = vst.msk [vmem:[%s214 + $0x80] sm:$0xff] %vm707, %v4713
      %4746 = vst.msk [vmem:[%s214 + $0x88] sm:$0xff] %vm707, %v4714
      %4747 = vst.msk [vmem:[%s214 + $0x90] sm:$0xff] %vm707, %v4715
      %4748 = vst.msk [vmem:[%s214 + $0x98] sm:$0xff] %vm707, %v4716
      %4749 = vst.msk [vmem:[%s214 + $0xa0] sm:$0xff] %vm707, %v4717
      %4750 = vst.msk [vmem:[%s214 + $0xa8] sm:$0xff] %vm707, %v4718
      %4751 = vst.msk [vmem:[%s214 + $0xb0] sm:$0xff] %vm707, %v4719
      %4752 = vst.msk [vmem:[%s214 + $0xb8] sm:$0xff] %vm707, %v4720
      %4753 = vst.msk [vmem:[%s214 + $0xc0] sm:$0xff] %vm707, %v4721
      %4754 = vst.msk [vmem:[%s214 + $0xc8] sm:$0xff] %vm707, %v4722
      %4755 = vst.msk [vmem:[%s214 + $0xd0] sm:$0xff] %vm707, %v4723
      %4756 = vst.msk [vmem:[%s214 + $0xd8] sm:$0xff] %vm707, %v4724
      %4757 = vst.msk [vmem:[%s214 + $0xe0] sm:$0xff] %vm707, %v4725
      %4758 = vst.msk [vmem:[%s214 + $0xe8] sm:$0xff] %vm707, %v4726
      %4759 = vst.msk [vmem:[%s214 + $0xf0] sm:$0xff] %vm707, %v4727
      %4760 = vst.msk [vmem:[%s214 + $0xf8] sm:$0xff] %vm707, %v4728
      %s4761 = smul.u32 16, %s19
      %p4762 = scmp.lt.s32.totalorder %s18, 1
      %s4763 = scalar_select %p4762, %s18, 1
      %p4764 = scmp.lt.s32.totalorder %s4761, 15
      %s4765 = scalar_select %p4764, %s4761, 15
      %s4766 = smul.addr %s4765, 2
      %s4767 = smul.addr %s4763, 32
      %s4768 = sadd.s32 %s4766, %s4767
      %s4769 = smul.addr %s4768, 8
      %s4770 = scalar_lea.vmem %s3, %s4769
      // Predicated region
      $region33: #{upsampling_block_forward.3} parent=31 // pred_check
        %p4771 = pneg %p119
      $region34: #{upsampling_block_forward.3} parent=31 // pred_check_branch
        %4773 = sbr.rel (%p4771) target = $region36
      $region35: #{upsampling_block_forward.3} parent=31 // pred_region
        %s4774 = smul.u32 16, %s19
      $region36: #{upsampling_block_forward.3} parent=31 // pred_fallthru
        _
    $region32: #{upsampling_block_forward.3} parent=5 // pred_fallthru
      _
    %p4775 = scmp.le.s32.totalorder 2, %s9
    // Predicated region
    $region37: #{upsampling_block_forward.3} parent=5 // pred_check
      %p4776 = pneg %p4775
    $region38: #{upsampling_block_forward.3} parent=5 // pred_check_branch
      %4778 = sbr.rel (%p4776) target = $region40
    $region39: #{upsampling_block_forward.3} parent=5 // pred_region
      %s4779 = ssub.s32 %s9, 2
      // Predicated region
      $region41: #{upsampling_block_forward.3} parent=39 // pred_check
        %p4780 = pneg %p125
      $region42: #{upsampling_block_forward.3} parent=39 // pred_check_branch
        %4782 = sbr.rel (%p4780) target = $region44
      $region43: #{upsampling_block_forward.3} parent=39 // pred_region
        %s4783 = smul.u32 16, %s21
        %p4784 = scmp.lt.s32.totalorder %s20, 1
        %s4785 = scalar_select %p4784, %s20, 1
        %p4786 = scmp.lt.s32.totalorder %s4783, 15
        %s4787 = scalar_select %p4786, %s4783, 15
        %s4788 = smul.addr %s4787, 2
        %s4789 = smul.addr %s4785, 32
        %s4790 = sadd.s32 %s4788, %s4789
        %s4791 = smul.addr %s4790, 8
        %s4792 = scalar_lea.vmem %s3, %s4791
      $region44: #{upsampling_block_forward.3} parent=39 // pred_fallthru
        _
    $region40: #{upsampling_block_forward.3} parent=5 // pred_fallthru
      _
  $region6: #{upsampling_block_forward.3} parent=0 // loop_footer
    %s13 = sadd.s32 1, %s9
  $region7: #{upsampling_block_forward.3} parent=0 // loop_footer_branch
    %8 = sbr.rel target = $region3
  $region8: #{upsampling_block_forward.3} parent=0 // loop_exit
    _

</llo_original>
